<compile_context>
chip_gen: v7x
topology: tpu7x:2x2x1
jax: 0.10.0
libtpu: 0.0.40
codegen_flags: <defaults>
</compile_context>

<pallas_src>
import functools

import jax
import jax.numpy as jnp
import numpy as np
from jax.experimental import pallas as pl
from jax.experimental.pallas import tpu as pltpu


# ---------------- Pallas kernels ----------------

def upsample_kernel(x_ref, wh_ref, wwt_ref, o_ref):
    """Bilinear upsample of one image row-tile, all channels batched.

    x_ref:   (1, Cin, Hx, Wx) bf16   low-res input image
    wh_ref:  (TH, Hx)         bf16   row-interpolation matrix for this row tile
    wwt_ref: (Wx, Ws)         bf16   transposed column-interpolation matrix
    o_ref:   (1, Cin, TH, Ws) bf16   upsampled row tile
    """
    cin = x_ref.shape[1]
    x = x_ref[0]                                               # (Cin, Hx, Wx)
    # height interpolation: (Cin, TH, Hx) @ (Cin, Hx, Wx) -> (Cin, TH, Wx)
    whb = jnp.broadcast_to(wh_ref[...][None], (cin,) + wh_ref.shape)
    th = jax.lax.dot_general(
        whb, x, dimension_numbers=(((2,), (1,)), ((0,), (0,))),
        preferred_element_type=jnp.float32)
    # width interpolation: (Cin, TH, Wx) @ (Cin, Wx, Ws) -> (Cin, TH, Ws)
    wwtb = jnp.broadcast_to(wwt_ref[...][None], (cin,) + wwt_ref.shape)
    up = jax.lax.dot_general(
        th.astype(jnp.bfloat16), wwtb,
        dimension_numbers=(((2,), (1,)), ((0,), (0,))),
        preferred_element_type=jnp.float32)
    o_ref[0] = up.astype(o_ref.dtype)


def bneck_add_bn_relu_kernel(skip_ref, up_ref, w1_ref, s1_ref, b1_ref,
                             s2_ref, b2_ref, o_ref):
    """Fused bottleneck (BN+ReLU+1x1 conv) + skip add + BN + ReLU.

    skip_ref: (1, Cs, TP) f32,  up_ref: (1, Cin, TP) bf16
    w1_ref:   (Cin, Cs)  bf16,  s*/b*_ref: per-channel scale/shift columns (f32)
    o_ref:    (1, Cin, TP) bf16  -> activation fed to the 3x3 conv
    """
    sk = jnp.maximum(skip_ref[0] * s1_ref[...] + b1_ref[...], 0.0)     # (Cs, TP)
    sb = jnp.dot(w1_ref[...], sk.astype(jnp.bfloat16),
                 preferred_element_type=jnp.float32)                   # (Cin, TP)
    y = up_ref[0].astype(jnp.float32) + sb
    y = jnp.maximum(y * s2_ref[...] + b2_ref[...], 0.0)
    o_ref[0] = y.astype(o_ref.dtype)


def conv3x3_kernel(a_ref, pos_ref, w_ref, o_ref, *, hs, ws):
    """3x3 conv (padding=1, bias=False) on one image, channels-first with
    flattened pixels.  The 9 taps are built with in-VMEM lane shifts + boundary
    masks (no HBM im2col) and folded into a single K = 9*Cin matmul.

    a_ref:  (1, Cin, P) bf16,  pos_ref: (2, P) int32 rows [h_index; w_index]
    w_ref:  (Cout, 9*Cin) bf16,  o_ref: (1, Cout, P) f32
    """
    p = a_ref.shape[2]
    # f32 keeps the sublane (axis-0) concatenation below tile-aligned (8 rows).
    a = a_ref[0].astype(jnp.float32)                                   # (Cin, P)
    hpos = pos_ref[0:1, :]                                             # (1, P)
    wpos = pos_ref[1:2, :]
    taps = []
    for dy in (-1, 0, 1):
        for dx in (-1, 0, 1):
            s = (dy * ws + dx) % p
            if s == 0:
                shifted = a
            else:  # circular shift so shifted[:, q] = a[:, q + dy*ws + dx]
                shifted = jnp.concatenate([a[:, s:], a[:, :s]], axis=1)
            valid = ((hpos + dy >= 0) & (hpos + dy < hs) &
                     (wpos + dx >= 0) & (wpos + dx < ws))
            taps.append(jnp.where(valid, shifted, 0.0))
    k = jnp.concatenate(taps, axis=0).astype(jnp.bfloat16)             # (9*Cin, P)
    o_ref[0] = jnp.dot(w_ref[...], k, preferred_element_type=jnp.float32)


# ---------------- glue helpers ----------------

def bilinear_matrix(out_size, in_size):
    # F.interpolate(mode='bilinear', align_corners=False) as a dense
    # (out_size, in_size) interpolation matrix.
    o = np.arange(out_size, dtype=np.float64)
    src = (o + 0.5) * (in_size / out_size) - 0.5
    src = np.maximum(src, 0.0)
    i0 = np.minimum(np.floor(src).astype(np.int64), in_size - 1)
    frac = src - i0
    i1 = np.minimum(i0 + 1, in_size - 1)
    w = np.zeros((out_size, in_size), dtype=np.float32)
    w[np.arange(out_size), i0] += (1.0 - frac)
    w[np.arange(out_size), i1] += frac
    return jnp.asarray(w, dtype=jnp.float32)


def _pick_row_tile(hs, ws, target):
    # largest TH with hs % TH == 0, TH % 8 == 0 and TH*ws <= target (else full)
    if hs * ws <= target:
        return hs
    t = min(hs, max(8, target // ws))
    t -= t % 8
    while t >= 8:
        if hs % t == 0:
            return t
        t -= 8
    return hs


def _pick_pixel_tile(p, target):
    # largest TP with p % TP == 0 and TP % 128 == 0 and TP <= target (else full)
    if p <= target:
        return p
    t = (min(p, target) // 128) * 128
    while t >= 128:
        if p % t == 0:
            return t
        t -= 128
    return p


def upsample_forward(x, skip, params, *, tile_pixels=2048):
    """x: (N, Cin, Hx, Wx), skip: (N, Cs, Hs, Ws)  ->  (N, Cout, Hs, Ws)."""
    N, Cin, Hx, Wx = x.shape
    _, Cs, Hs, Ws = skip.shape
    Cout = params['w3'].shape[0]
    P = Hs * Ws
    bf16 = jnp.bfloat16

    def parallel(n):
        return pltpu.CompilerParams(dimension_semantics=("parallel",) * n)

    # ---- stage 1: bilinear upsample of x to the skip resolution ----
    TH = _pick_row_tile(Hs, Ws, tile_pixels)
    wh = bilinear_matrix(Hs, Hx).astype(bf16)
    wwt = bilinear_matrix(Ws, Wx).T.astype(bf16)
    up = pl.pallas_call(
        upsample_kernel,
        out_shape=jax.ShapeDtypeStruct((N, Cin, Hs, Ws), bf16),
        grid=(N, Hs // TH),
        in_specs=[
            pl.BlockSpec((1, Cin, Hx, Wx), lambda n, i: (n, 0, 0, 0)),
            pl.BlockSpec((TH, Hx), lambda n, i: (i, 0)),
            pl.BlockSpec((Wx, Ws), lambda n, i: (0, 0)),
        ],
        out_specs=pl.BlockSpec((1, Cin, TH, Ws), lambda n, i: (n, 0, i, 0)),
        compiler_params=parallel(2),
    )(x.astype(bf16), wh, wwt)

    # ---- stage 2: fused bottleneck(skip) + add + BN + ReLU, pixel-tiled ----
    TP = _pick_pixel_tile(P, tile_pixels)
    skip_flat = skip.reshape(N, Cs, P)        # free views (NCHW is contiguous)
    up_flat = up.reshape(N, Cin, P)
    w1 = params['w1'][:, :, 0, 0].astype(bf16)                      # (Cin, Cs)
    s1 = params['scale1'][:, None]
    b1 = params['shift1'][:, None]
    s2 = params['scale2'][:, None]
    b2 = params['shift2'][:, None]
    act = pl.pallas_call(
        bneck_add_bn_relu_kernel,
        out_shape=jax.ShapeDtypeStruct((N, Cin, P), bf16),
        grid=(N, P // TP),
        in_specs=[
            pl.BlockSpec((1, Cs, TP), lambda n, j: (n, 0, j)),
            pl.BlockSpec((1, Cin, TP), lambda n, j: (n, 0, j)),
            pl.BlockSpec((Cin, Cs), lambda n, j: (0, 0)),
            pl.BlockSpec((Cs, 1), lambda n, j: (0, 0)),
            pl.BlockSpec((Cs, 1), lambda n, j: (0, 0)),
            pl.BlockSpec((Cin, 1), lambda n, j: (0, 0)),
            pl.BlockSpec((Cin, 1), lambda n, j: (0, 0)),
        ],
        out_specs=pl.BlockSpec((1, Cin, TP), lambda n, j: (n, 0, j)),
        compiler_params=parallel(2),
    )(skip_flat, up_flat, w1, s1, b1, s2, b2)

    # ---- stage 3: 3x3 conv (padding=1, bias=False), in-kernel im2col ----
    # TODO(synk): for very large Hs*Ws, additionally tile the pixel axis here
    # (needs a one-row halo per tile via element-indexed blocks or manual DMA).
    w3 = params['w3'].transpose(0, 2, 3, 1).reshape(Cout, 9 * Cin).astype(bf16)
    hpos = jnp.repeat(jnp.arange(Hs, dtype=jnp.int32), Ws)
    wpos = jnp.tile(jnp.arange(Ws, dtype=jnp.int32), Hs)
    pos = jnp.stack([hpos, wpos], axis=0)                           # (2, P)
    out_flat = pl.pallas_call(
        functools.partial(conv3x3_kernel, hs=Hs, ws=Ws),
        out_shape=jax.ShapeDtypeStruct((N, Cout, P), jnp.float32),
        grid=(N,),
        in_specs=[
            pl.BlockSpec((1, Cin, P), lambda n: (n, 0, 0)),
            pl.BlockSpec((2, P), lambda n: (0, 0)),
            pl.BlockSpec((Cout, 9 * Cin), lambda n: (0, 0)),
        ],
        out_specs=pl.BlockSpec((1, Cout, P), lambda n: (n, 0, 0)),
        compiler_params=parallel(1),
    )(act, pos, w3)

    return out_flat.reshape(N, Cout, Hs, Ws)


# ---------------- pure-JAX reference (correctness check) ----------------

def ref_forward(x, skip, params):
    s = skip * params['scale1'][None, :, None, None] + params['shift1'][None, :, None, None]
    s = jnp.maximum(s, 0.0)
    s = jax.lax.conv_general_dilated(s, params['w1'], (1, 1), 'VALID',
                                     dimension_numbers=('NCHW', 'OIHW', 'NCHW'))
    Hs, Ws = s.shape[2], s.shape[3]
    Wh = bilinear_matrix(Hs, x.shape[2])
    Ww = bilinear_matrix(Ws, x.shape[3])
    xu = jnp.einsum('oh,nchw->ncow', Wh, x)
    xu = jnp.einsum('qw,ncow->ncoq', Ww, xu)
    y = xu + s
    y = y * params['scale2'][None, :, None, None] + params['shift2'][None, :, None, None]
    y = jnp.maximum(y, 0.0)
    y = jax.lax.conv_general_dilated(y, params['w3'], (1, 1), ((1, 1), (1, 1)),
                                     dimension_numbers=('NCHW', 'OIHW', 'NCHW'))
    return y


if __name__ == "__main__":
    key = jax.random.PRNGKey(0)
    N, Cs, Cin, Cout = 2, 4, 8, 8          # skip_maps_in=4, num_maps_in=8, num_maps_out=8
    Hx = Wx = 16                           # low-res feature map
    Hs = Ws = 32                           # skip (target) resolution
    ks = jax.random.split(key, 12)

    x = jax.random.normal(ks[0], (N, Cin, Hx, Wx), jnp.float32)
    skip = jax.random.normal(ks[1], (N, Cs, Hs, Ws), jnp.float32)

    # BatchNorm params (inference mode), folded into per-channel scale/shift.
    eps = 1e-5
    g1 = 1.0 + 0.1 * jax.random.normal(ks[2], (Cs,), jnp.float32)
    b1 = 0.1 * jax.random.normal(ks[3], (Cs,), jnp.float32)
    m1 = 0.1 * jax.random.normal(ks[4], (Cs,), jnp.float32)
    v1 = jax.random.uniform(ks[5], (Cs,), jnp.float32, minval=0.5, maxval=1.5)
    g2 = 1.0 + 0.1 * jax.random.normal(ks[6], (Cin,), jnp.float32)
    b2 = 0.1 * jax.random.normal(ks[7], (Cin,), jnp.float32)
    m2 = 0.1 * jax.random.normal(ks[8], (Cin,), jnp.float32)
    v2 = jax.random.uniform(ks[9], (Cin,), jnp.float32, minval=0.5, maxval=1.5)

    scale1 = g1 / jnp.sqrt(v1 + eps)
    scale2 = g2 / jnp.sqrt(v2 + eps)
    params = {
        'scale1': scale1,
        'shift1': b1 - m1 * scale1,
        'w1': 0.1 * jax.random.normal(ks[10], (Cin, Cs, 1, 1), jnp.float32),   # 1x1 conv
        'scale2': scale2,
        'shift2': b2 - m2 * scale2,
        'w3': 0.1 * jax.random.normal(ks[11], (Cout, Cin, 3, 3), jnp.float32),  # 3x3 conv
    }

    # tile_pixels=512 exercises the tiled/pipelined path even at these small shapes.
    fwd = jax.jit(lambda xx, ss, pp: upsample_forward(xx, ss, pp, tile_pixels=512))
    out = jax.block_until_ready(fwd(x, skip, params))
    ref = ref_forward(x, skip, params)

    assert out.shape == (N, Cout, Hs, Ws)
    # bf16 MXU operands (f32 accumulation) vs. the all-f32 reference.
    np.testing.assert_allclose(np.asarray(out), np.asarray(ref), rtol=5e-2, atol=5e-2)
    print("KERNEL_OK")
</pallas_src>

<mosaic_0001>
module attributes {stable_mosaic.version = 11 : i64} {
  func.func @upsample_kernel(%arg0: i32, %arg1: i32, %arg2: memref<1x8x16x16xbf16, #tpu.memory_space<vmem>>, %arg3: memref<16x16xbf16, #tpu.memory_space<vmem>>, %arg4: memref<16x32xbf16, #tpu.memory_space<vmem>>, %arg5: memref<1x8x16x32xbf16, #tpu.memory_space<vmem>>) attributes {dimension_semantics = [#tpu.dimension_semantics<parallel>, #tpu.dimension_semantics<parallel>], iteration_bounds = array<i64: 2, 2>, scalar_prefetch = 0 : i64, scratch_operands = 0 : i64, tpu.core_type = #tpu.core_type<tc>, window_params = [{transform_indices = @transform_0, window_bounds = array<i64: 1, 8, 16, 16>}, {transform_indices = @transform_1, window_bounds = array<i64: 16, 16>}, {pipeline_mode = #tpu.pipeline_mode<synchronous>, transform_indices = @transform_2, window_bounds = array<i64: 16, 32>}, {transform_indices = @transform_3, window_bounds = array<i64: 1, 8, 16, 32>}]} {
    %c0 = arith.constant 0 : index
    %c0_0 = arith.constant 0 : index
    %c0_1 = arith.constant 0 : index
    %c0_2 = arith.constant 0 : index
    %0 = vector.load %arg2[%c0, %c0_0, %c0_1, %c0_2] : memref<1x8x16x16xbf16, #tpu.memory_space<vmem>>, vector<1x8x16x16xbf16>
    %1 = vector.shape_cast %0 : vector<1x8x16x16xbf16> to vector<8x16x16xbf16>
    %c0_3 = arith.constant 0 : index
    %c0_4 = arith.constant 0 : index
    %2 = vector.load %arg3[%c0_3, %c0_4] : memref<16x16xbf16, #tpu.memory_space<vmem>>, vector<16x16xbf16>
    %3 = vector.shape_cast %2 : vector<16x16xbf16> to vector<1x16x16xbf16>
    %4 = vector.shape_cast %3 : vector<1x16x16xbf16> to vector<1x16x16xbf16>
    %5 = vector.broadcast %4 : vector<1x16x16xbf16> to vector<8x16x16xbf16>
    %cst = arith.constant dense<0.000000e+00> : vector<8x16x16xf32>
    %6 = tpu.matmul %5, %1, %cst {dimension_numbers = #tpu.dot_dimension_numbers<[2], [1], [1], [2], [0, 0, 0, 1, 1, 2], [0], [0]>} : vector<8x16x16xbf16>, vector<8x16x16xbf16>, vector<8x16x16xf32> -> vector<8x16x16xf32>
    %c0_5 = arith.constant 0 : index
    %c0_6 = arith.constant 0 : index
    %7 = vector.load %arg4[%c0_5, %c0_6] : memref<16x32xbf16, #tpu.memory_space<vmem>>, vector<16x32xbf16>
    %8 = vector.shape_cast %7 : vector<16x32xbf16> to vector<1x16x32xbf16>
    %9 = vector.shape_cast %8 : vector<1x16x32xbf16> to vector<1x16x32xbf16>
    %10 = vector.broadcast %9 : vector<1x16x32xbf16> to vector<8x16x32xbf16>
    %11 = arith.truncf %6 : vector<8x16x16xf32> to vector<8x16x16xbf16>
    %cst_7 = arith.constant dense<0.000000e+00> : vector<8x16x32xf32>
    %12 = tpu.matmul %11, %10, %cst_7 {dimension_numbers = #tpu.dot_dimension_numbers<[2], [1], [1], [2], [0, 0, 0, 1, 1, 2], [0], [0]>} : vector<8x16x16xbf16>, vector<8x16x32xbf16>, vector<8x16x32xf32> -> vector<8x16x32xf32>
    %13 = arith.truncf %12 : vector<8x16x32xf32> to vector<8x16x32xbf16>
    %c0_8 = arith.constant 0 : index
    %c0_9 = arith.constant 0 : index
    %c0_10 = arith.constant 0 : index
    %c0_11 = arith.constant 0 : index
    %14 = vector.load %arg5[%c0_8, %c0_9, %c0_10, %c0_11] : memref<1x8x16x32xbf16, #tpu.memory_space<vmem>>, vector<1x8x16x32xbf16>
    %15 = vector.shape_cast %14 : vector<1x8x16x32xbf16> to vector<8x16x32xbf16>
    %16 = vector.shape_cast %13 : vector<8x16x32xbf16> to vector<1x8x16x32xbf16>
    tpu.vector_store %arg5[%c0_8, %c0_9, %c0_10, %c0_11], %16 {strides = array<i32>} : memref<1x8x16x32xbf16, #tpu.memory_space<vmem>>, vector<1x8x16x32xbf16>,
    return
  }
  func.func @transform_0(%arg0: i32, %arg1: i32) -> (i32, i32, i32, i32) {
    %c0_i32 = arith.constant 0 : i32
    %c0_i32_0 = arith.constant 0 : i32
    %c0_i32_1 = arith.constant 0 : i32
    %c0_i32_2 = arith.constant 0 : i32
    return %arg0, %c0_i32, %c0_i32_0, %c0_i32_1 : i32, i32, i32, i32
  }
  func.func @transform_1(%arg0: i32, %arg1: i32) -> (i32, i32) {
    %c0_i32 = arith.constant 0 : i32
    %c0_i32_0 = arith.constant 0 : i32
    return %arg1, %c0_i32 : i32, i32
  }
  func.func @transform_2(%arg0: i32, %arg1: i32) -> (i32, i32) {
    %c0_i32 = arith.constant 0 : i32
    %c0_i32_0 = arith.constant 0 : i32
    %c0_i32_1 = arith.constant 0 : i32
    return %c0_i32, %c0_i32_0 : i32, i32
  }
  func.func @transform_3(%arg0: i32, %arg1: i32) -> (i32, i32, i32, i32) {
    %c0_i32 = arith.constant 0 : i32
    %c0_i32_0 = arith.constant 0 : i32
    %c0_i32_1 = arith.constant 0 : i32
    return %arg0, %c0_i32, %arg1, %c0_i32_0 : i32, i32, i32, i32
  }
}

module attributes {stable_mosaic.version = 11 : i64} {
  func.func @bneck_add_bn_relu_kernel(%arg0: i32, %arg1: i32, %arg2: memref<1x4x512xf32, #tpu.memory_space<vmem>>, %arg3: memref<1x8x512xbf16, #tpu.memory_space<vmem>>, %arg4: memref<8x4xbf16, #tpu.memory_space<vmem>>, %arg5: memref<4x1xf32, #tpu.memory_space<vmem>>, %arg6: memref<4x1xf32, #tpu.memory_space<vmem>>, %arg7: memref<8x1xf32, #tpu.memory_space<vmem>>, %arg8: memref<8x1xf32, #tpu.memory_space<vmem>>, %arg9: memref<1x8x512xbf16, #tpu.memory_space<vmem>>) attributes {dimension_semantics = [#tpu.dimension_semantics<parallel>, #tpu.dimension_semantics<parallel>], iteration_bounds = array<i64: 2, 2>, scalar_prefetch = 0 : i64, scratch_operands = 0 : i64, tpu.core_type = #tpu.core_type<tc>, window_params = [{transform_indices = @transform_0, window_bounds = array<i64: 1, 4, 512>}, {transform_indices = @transform_1, window_bounds = array<i64: 1, 8, 512>}, {pipeline_mode = #tpu.pipeline_mode<synchronous>, transform_indices = @transform_2, window_bounds = array<i64: 8, 4>}, {pipeline_mode = #tpu.pipeline_mode<synchronous>, transform_indices = @transform_3, window_bounds = array<i64: 4, 1>}, {pipeline_mode = #tpu.pipeline_mode<synchronous>, transform_indices = @transform_4, window_bounds = array<i64: 4, 1>}, {pipeline_mode = #tpu.pipeline_mode<synchronous>, transform_indices = @transform_5, window_bounds = array<i64: 8, 1>}, {pipeline_mode = #tpu.pipeline_mode<synchronous>, transform_indices = @transform_6, window_bounds = array<i64: 8, 1>}, {transform_indices = @transform_7, window_bounds = array<i64: 1, 8, 512>}]} {
    %c0 = arith.constant 0 : index
    %c0_0 = arith.constant 0 : index
    %c0_1 = arith.constant 0 : index
    %0 = vector.load %arg2[%c0, %c0_0, %c0_1] : memref<1x4x512xf32, #tpu.memory_space<vmem>>, vector<1x4x512xf32>
    %1 = vector.shape_cast %0 : vector<1x4x512xf32> to vector<4x512xf32>
    %c0_2 = arith.constant 0 : index
    %c0_3 = arith.constant 0 : index
    %2 = vector.load %arg5[%c0_2, %c0_3] : memref<4x1xf32, #tpu.memory_space<vmem>>, vector<4x1xf32>
    %3 = vector.broadcast %2 : vector<4x1xf32> to vector<4x512xf32>
    %4 = arith.mulf %1, %3 : vector<4x512xf32>
    %c0_4 = arith.constant 0 : index
    %c0_5 = arith.constant 0 : index
    %5 = vector.load %arg6[%c0_4, %c0_5] : memref<4x1xf32, #tpu.memory_space<vmem>>, vector<4x1xf32>
    %6 = vector.broadcast %5 : vector<4x1xf32> to vector<4x512xf32>
    %7 = arith.addf %4, %6 : vector<4x512xf32>
    %cst = arith.constant 0.000000e+00 : f32
    %8 = vector.broadcast %cst : f32 to vector<4x512xf32>
    %9 = arith.maximumf %7, %8 : vector<4x512xf32>
    %c0_6 = arith.constant 0 : index
    %c0_7 = arith.constant 0 : index
    %10 = vector.load %arg4[%c0_6, %c0_7] : memref<8x4xbf16, #tpu.memory_space<vmem>>, vector<8x4xbf16>
    %11 = arith.truncf %9 : vector<4x512xf32> to vector<4x512xbf16>
    %cst_8 = arith.constant dense<0.000000e+00> : vector<8x512xf32>
    %12 = tpu.matmul %10, %11, %cst_8 {dimension_numbers = #tpu.dot_dimension_numbers<[1], [0], [0], [1], [0, 0, 1, 1], [], []>} : vector<8x4xbf16>, vector<4x512xbf16>, vector<8x512xf32> -> vector<8x512xf32>
    %c0_9 = arith.constant 0 : index
    %c0_10 = arith.constant 0 : index
    %c0_11 = arith.constant 0 : index
    %13 = vector.load %arg3[%c0_9, %c0_10, %c0_11] : memref<1x8x512xbf16, #tpu.memory_space<vmem>>, vector<1x8x512xbf16>
    %14 = vector.shape_cast %13 : vector<1x8x512xbf16> to vector<8x512xbf16>
    %15 = arith.extf %14 : vector<8x512xbf16> to vector<8x512xf32>
    %16 = arith.addf %15, %12 : vector<8x512xf32>
    %c0_12 = arith.constant 0 : index
    %c0_13 = arith.constant 0 : index
    %17 = vector.load %arg7[%c0_12, %c0_13] : memref<8x1xf32, #tpu.memory_space<vmem>>, vector<8x1xf32>
    %18 = vector.broadcast %17 : vector<8x1xf32> to vector<8x512xf32>
    %19 = arith.mulf %16, %18 : vector<8x512xf32>
    %c0_14 = arith.constant 0 : index
    %c0_15 = arith.constant 0 : index
    %20 = vector.load %arg8[%c0_14, %c0_15] : memref<8x1xf32, #tpu.memory_space<vmem>>, vector<8x1xf32>
    %21 = vector.broadcast %20 : vector<8x1xf32> to vector<8x512xf32>
    %22 = arith.addf %19, %21 : vector<8x512xf32>
    %cst_16 = arith.constant 0.000000e+00 : f32
    %23 = vector.broadcast %cst_16 : f32 to vector<8x512xf32>
    %24 = arith.maximumf %22, %23 : vector<8x512xf32>
    %25 = arith.truncf %24 : vector<8x512xf32> to vector<8x512xbf16>
    %c0_17 = arith.constant 0 : index
    %c0_18 = arith.constant 0 : index
    %c0_19 = arith.constant 0 : index
    %26 = vector.load %arg9[%c0_17, %c0_18, %c0_19] : memref<1x8x512xbf16, #tpu.memory_space<vmem>>, vector<1x8x512xbf16>
    %27 = vector.shape_cast %26 : vector<1x8x512xbf16> to vector<8x512xbf16>
    %28 = vector.shape_cast %25 : vector<8x512xbf16> to vector<1x8x512xbf16>
    tpu.vector_store %arg9[%c0_17, %c0_18, %c0_19], %28 {strides = array<i32>} : memref<1x8x512xbf16, #tpu.memory_space<vmem>>, vector<1x8x512xbf16>,
    return
  }
  func.func @transform_0(%arg0: i32, %arg1: i32) -> (i32, i32, i32) {
    %c0_i32 = arith.constant 0 : i32
    %c0_i32_0 = arith.constant 0 : i32
    return %arg0, %c0_i32, %arg1 : i32, i32, i32
  }
  func.func @transform_1(%arg0: i32, %arg1: i32) -> (i32, i32, i32) {
    %c0_i32 = arith.constant 0 : i32
    %c0_i32_0 = arith.constant 0 : i32
    return %arg0, %c0_i32, %arg1 : i32, i32, i32
  }
  func.func @transform_2(%arg0: i32, %arg1: i32) -> (i32, i32) {
    %c0_i32 = arith.constant 0 : i32
    %c0_i32_0 = arith.constant 0 : i32
    %c0_i32_1 = arith.constant 0 : i32
    return %c0_i32, %c0_i32_0 : i32, i32
  }
  func.func @transform_3(%arg0: i32, %arg1: i32) -> (i32, i32) {
    %c0_i32 = arith.constant 0 : i32
    %c0_i32_0 = arith.constant 0 : i32
    %c0_i32_1 = arith.constant 0 : i32
    return %c0_i32, %c0_i32_0 : i32, i32
  }
  func.func @transform_4(%arg0: i32, %arg1: i32) -> (i32, i32) {
    %c0_i32 = arith.constant 0 : i32
    %c0_i32_0 = arith.constant 0 : i32
    %c0_i32_1 = arith.constant 0 : i32
    return %c0_i32, %c0_i32_0 : i32, i32
  }
  func.func @transform_5(%arg0: i32, %arg1: i32) -> (i32, i32) {
    %c0_i32 = arith.constant 0 : i32
    %c0_i32_0 = arith.constant 0 : i32
    %c0_i32_1 = arith.constant 0 : i32
    return %c0_i32, %c0_i32_0 : i32, i32
  }
  func.func @transform_6(%arg0: i32, %arg1: i32) -> (i32, i32) {
    %c0_i32 = arith.constant 0 : i32
    %c0_i32_0 = arith.constant 0 : i32
    %c0_i32_1 = arith.constant 0 : i32
    return %c0_i32, %c0_i32_0 : i32, i32
  }
  func.func @transform_7(%arg0: i32, %arg1: i32) -> (i32, i32, i32) {
    %c0_i32 = arith.constant 0 : i32
    %c0_i32_0 = arith.constant 0 : i32
    return %arg0, %c0_i32, %arg1 : i32, i32, i32
  }
}

module attributes {stable_mosaic.version = 11 : i64} {
  func.func @conv3x3_kernel(%arg0: i32, %arg1: memref<1x8x1024xbf16, #tpu.memory_space<vmem>>, %arg2: memref<2x1024xi32, #tpu.memory_space<vmem>>, %arg3: memref<8x72xbf16, #tpu.memory_space<vmem>>, %arg4: memref<1x8x1024xf32, #tpu.memory_space<vmem>>) attributes {dimension_semantics = [#tpu.dimension_semantics<parallel>], iteration_bounds = array<i64: 2>, scalar_prefetch = 0 : i64, scratch_operands = 0 : i64, tpu.core_type = #tpu.core_type<tc>, window_params = [{transform_indices = @transform_0, window_bounds = array<i64: 1, 8, 1024>}, {pipeline_mode = #tpu.pipeline_mode<synchronous>, transform_indices = @transform_1, window_bounds = array<i64: 2, 1024>}, {pipeline_mode = #tpu.pipeline_mode<synchronous>, transform_indices = @transform_2, window_bounds = array<i64: 8, 72>}, {transform_indices = @transform_3, window_bounds = array<i64: 1, 8, 1024>}]} {
    %c0 = arith.constant 0 : index
    %c0_0 = arith.constant 0 : index
    %c0_1 = arith.constant 0 : index
    %0 = vector.load %arg1[%c0, %c0_0, %c0_1] : memref<1x8x1024xbf16, #tpu.memory_space<vmem>>, vector<1x8x1024xbf16>
    %1 = vector.shape_cast %0 : vector<1x8x1024xbf16> to vector<8x1024xbf16>
    %2 = arith.extf %1 : vector<8x1024xbf16> to vector<8x1024xf32>
    %c0_2 = arith.constant 0 : index
    %c0_3 = arith.constant 0 : index
    %3 = vector.load %arg2[%c0_2, %c0_3] : memref<2x1024xi32, #tpu.memory_space<vmem>>, vector<1x1024xi32>
    %c1 = arith.constant 1 : index
    %c0_4 = arith.constant 0 : index
    %4 = vector.load %arg2[%c1, %c0_4] : memref<2x1024xi32, #tpu.memory_space<vmem>>, vector<1x1024xi32>
    %5 = vector.extract_strided_slice %2 {offsets = [0, 991], sizes = [8, 33], strides = [1, 1]} : vector<8x1024xf32> to vector<8x33xf32>
    %6 = vector.extract_strided_slice %2 {offsets = [0, 0], sizes = [8, 991], strides = [1, 1]} : vector<8x1024xf32> to vector<8x991xf32>
    %7 = tpu.concatenate %5, %6 in 1 : vector<8x33xf32>, vector<8x991xf32> -> vector<8x1024xf32>
    %c-1_i32 = arith.constant -1 : i32
    %8 = vector.broadcast %c-1_i32 : i32 to vector<1x1024xi32>
    %9 = arith.addi %3, %8 : vector<1x1024xi32>
    %c0_i32 = arith.constant 0 : i32
    %10 = vector.broadcast %c0_i32 : i32 to vector<1x1024xi32>
    %11 = arith.cmpi sge, %9, %10 : vector<1x1024xi32>
    %c-1_i32_5 = arith.constant -1 : i32
    %12 = vector.broadcast %c-1_i32_5 : i32 to vector<1x1024xi32>
    %13 = arith.addi %3, %12 : vector<1x1024xi32>
    %c32_i32 = arith.constant 32 : i32
    %14 = vector.broadcast %c32_i32 : i32 to vector<1x1024xi32>
    %15 = arith.cmpi slt, %13, %14 : vector<1x1024xi32>
    %16 = arith.andi %11, %15 : vector<1x1024xi1>
    %c-1_i32_6 = arith.constant -1 : i32
    %17 = vector.broadcast %c-1_i32_6 : i32 to vector<1x1024xi32>
    %18 = arith.addi %4, %17 : vector<1x1024xi32>
    %c0_i32_7 = arith.constant 0 : i32
    %19 = vector.broadcast %c0_i32_7 : i32 to vector<1x1024xi32>
    %20 = arith.cmpi sge, %18, %19 : vector<1x1024xi32>
    %21 = arith.andi %16, %20 : vector<1x1024xi1>
    %c-1_i32_8 = arith.constant -1 : i32
    %22 = vector.broadcast %c-1_i32_8 : i32 to vector<1x1024xi32>
    %23 = arith.addi %4, %22 : vector<1x1024xi32>
    %c32_i32_9 = arith.constant 32 : i32
    %24 = vector.broadcast %c32_i32_9 : i32 to vector<1x1024xi32>
    %25 = arith.cmpi slt, %23, %24 : vector<1x1024xi32>
    %26 = arith.andi %21, %25 : vector<1x1024xi1>
    %cst = arith.constant 0.000000e+00 : f32
    %27 = vector.shape_cast %26 : vector<1x1024xi1> to vector<1x1024xi1>
    %28 = vector.broadcast %27 : vector<1x1024xi1> to vector<8x1024xi1>
    %29 = vector.broadcast %cst : f32 to vector<8x1024xf32>
    %30 = arith.select %28, %7, %29 : vector<8x1024xi1>, vector<8x1024xf32>
    %31 = vector.extract_strided_slice %2 {offsets = [0, 992], sizes = [8, 32], strides = [1, 1]} : vector<8x1024xf32> to vector<8x32xf32>
    %32 = vector.extract_strided_slice %2 {offsets = [0, 0], sizes = [8, 992], strides = [1, 1]} : vector<8x1024xf32> to vector<8x992xf32>
    %33 = tpu.concatenate %31, %32 in 1 : vector<8x32xf32>, vector<8x992xf32> -> vector<8x1024xf32>
    %c-1_i32_10 = arith.constant -1 : i32
    %34 = vector.broadcast %c-1_i32_10 : i32 to vector<1x1024xi32>
    %35 = arith.addi %3, %34 : vector<1x1024xi32>
    %c0_i32_11 = arith.constant 0 : i32
    %36 = vector.broadcast %c0_i32_11 : i32 to vector<1x1024xi32>
    %37 = arith.cmpi sge, %35, %36 : vector<1x1024xi32>
    %c-1_i32_12 = arith.constant -1 : i32
    %38 = vector.broadcast %c-1_i32_12 : i32 to vector<1x1024xi32>
    %39 = arith.addi %3, %38 : vector<1x1024xi32>
    %c32_i32_13 = arith.constant 32 : i32
    %40 = vector.broadcast %c32_i32_13 : i32 to vector<1x1024xi32>
    %41 = arith.cmpi slt, %39, %40 : vector<1x1024xi32>
    %42 = arith.andi %37, %41 : vector<1x1024xi1>
    %c0_i32_14 = arith.constant 0 : i32
    %43 = vector.broadcast %c0_i32_14 : i32 to vector<1x1024xi32>
    %44 = arith.addi %4, %43 : vector<1x1024xi32>
    %c0_i32_15 = arith.constant 0 : i32
    %45 = vector.broadcast %c0_i32_15 : i32 to vector<1x1024xi32>
    %46 = arith.cmpi sge, %44, %45 : vector<1x1024xi32>
    %47 = arith.andi %42, %46 : vector<1x1024xi1>
    %c0_i32_16 = arith.constant 0 : i32
    %48 = vector.broadcast %c0_i32_16 : i32 to vector<1x1024xi32>
    %49 = arith.addi %4, %48 : vector<1x1024xi32>
    %c32_i32_17 = arith.constant 32 : i32
    %50 = vector.broadcast %c32_i32_17 : i32 to vector<1x1024xi32>
    %51 = arith.cmpi slt, %49, %50 : vector<1x1024xi32>
    %52 = arith.andi %47, %51 : vector<1x1024xi1>
    %cst_18 = arith.constant 0.000000e+00 : f32
    %53 = vector.shape_cast %52 : vector<1x1024xi1> to vector<1x1024xi1>
    %54 = vector.broadcast %53 : vector<1x1024xi1> to vector<8x1024xi1>
    %55 = vector.broadcast %cst_18 : f32 to vector<8x1024xf32>
    %56 = arith.select %54, %33, %55 : vector<8x1024xi1>, vector<8x1024xf32>
    %57 = vector.extract_strided_slice %2 {offsets = [0, 993], sizes = [8, 31], strides = [1, 1]} : vector<8x1024xf32> to vector<8x31xf32>
    %58 = vector.extract_strided_slice %2 {offsets = [0, 0], sizes = [8, 993], strides = [1, 1]} : vector<8x1024xf32> to vector<8x993xf32>
    %59 = tpu.concatenate %57, %58 in 1 : vector<8x31xf32>, vector<8x993xf32> -> vector<8x1024xf32>
    %c-1_i32_19 = arith.constant -1 : i32
    %60 = vector.broadcast %c-1_i32_19 : i32 to vector<1x1024xi32>
    %61 = arith.addi %3, %60 : vector<1x1024xi32>
    %c0_i32_20 = arith.constant 0 : i32
    %62 = vector.broadcast %c0_i32_20 : i32 to vector<1x1024xi32>
    %63 = arith.cmpi sge, %61, %62 : vector<1x1024xi32>
    %c-1_i32_21 = arith.constant -1 : i32
    %64 = vector.broadcast %c-1_i32_21 : i32 to vector<1x1024xi32>
    %65 = arith.addi %3, %64 : vector<1x1024xi32>
    %c32_i32_22 = arith.constant 32 : i32
    %66 = vector.broadcast %c32_i32_22 : i32 to vector<1x1024xi32>
    %67 = arith.cmpi slt, %65, %66 : vector<1x1024xi32>
    %68 = arith.andi %63, %67 : vector<1x1024xi1>
    %c1_i32 = arith.constant 1 : i32
    %69 = vector.broadcast %c1_i32 : i32 to vector<1x1024xi32>
    %70 = arith.addi %4, %69 : vector<1x1024xi32>
    %c0_i32_23 = arith.constant 0 : i32
    %71 = vector.broadcast %c0_i32_23 : i32 to vector<1x1024xi32>
    %72 = arith.cmpi sge, %70, %71 : vector<1x1024xi32>
    %73 = arith.andi %68, %72 : vector<1x1024xi1>
    %c1_i32_24 = arith.constant 1 : i32
    %74 = vector.broadcast %c1_i32_24 : i32 to vector<1x1024xi32>
    %75 = arith.addi %4, %74 : vector<1x1024xi32>
    %c32_i32_25 = arith.constant 32 : i32
    %76 = vector.broadcast %c32_i32_25 : i32 to vector<1x1024xi32>
    %77 = arith.cmpi slt, %75, %76 : vector<1x1024xi32>
    %78 = arith.andi %73, %77 : vector<1x1024xi1>
    %cst_26 = arith.constant 0.000000e+00 : f32
    %79 = vector.shape_cast %78 : vector<1x1024xi1> to vector<1x1024xi1>
    %80 = vector.broadcast %79 : vector<1x1024xi1> to vector<8x1024xi1>
    %81 = vector.broadcast %cst_26 : f32 to vector<8x1024xf32>
    %82 = arith.select %80, %59, %81 : vector<8x1024xi1>, vector<8x1024xf32>
    %83 = vector.extract_strided_slice %2 {offsets = [0, 1023], sizes = [8, 1], strides = [1, 1]} : vector<8x1024xf32> to vector<8x1xf32>
    %84 = vector.extract_strided_slice %2 {offsets = [0, 0], sizes = [8, 1023], strides = [1, 1]} : vector<8x1024xf32> to vector<8x1023xf32>
    %85 = tpu.concatenate %83, %84 in 1 : vector<8x1xf32>, vector<8x1023xf32> -> vector<8x1024xf32>
    %c0_i32_27 = arith.constant 0 : i32
    %86 = vector.broadcast %c0_i32_27 : i32 to vector<1x1024xi32>
    %87 = arith.addi %3, %86 : vector<1x1024xi32>
    %c0_i32_28 = arith.constant 0 : i32
    %88 = vector.broadcast %c0_i32_28 : i32 to vector<1x1024xi32>
    %89 = arith.cmpi sge, %87, %88 : vector<1x1024xi32>
    %c0_i32_29 = arith.constant 0 : i32
    %90 = vector.broadcast %c0_i32_29 : i32 to vector<1x1024xi32>
    %91 = arith.addi %3, %90 : vector<1x1024xi32>
    %c32_i32_30 = arith.constant 32 : i32
    %92 = vector.broadcast %c32_i32_30 : i32 to vector<1x1024xi32>
    %93 = arith.cmpi slt, %91, %92 : vector<1x1024xi32>
    %94 = arith.andi %89, %93 : vector<1x1024xi1>
    %c-1_i32_31 = arith.constant -1 : i32
    %95 = vector.broadcast %c-1_i32_31 : i32 to vector<1x1024xi32>
    %96 = arith.addi %4, %95 : vector<1x1024xi32>
    %c0_i32_32 = arith.constant 0 : i32
    %97 = vector.broadcast %c0_i32_32 : i32 to vector<1x1024xi32>
    %98 = arith.cmpi sge, %96, %97 : vector<1x1024xi32>
    %99 = arith.andi %94, %98 : vector<1x1024xi1>
    %c-1_i32_33 = arith.constant -1 : i32
    %100 = vector.broadcast %c-1_i32_33 : i32 to vector<1x1024xi32>
    %101 = arith.addi %4, %100 : vector<1x1024xi32>
    %c32_i32_34 = arith.constant 32 : i32
    %102 = vector.broadcast %c32_i32_34 : i32 to vector<1x1024xi32>
    %103 = arith.cmpi slt, %101, %102 : vector<1x1024xi32>
    %104 = arith.andi %99, %103 : vector<1x1024xi1>
    %cst_35 = arith.constant 0.000000e+00 : f32
    %105 = vector.shape_cast %104 : vector<1x1024xi1> to vector<1x1024xi1>
    %106 = vector.broadcast %105 : vector<1x1024xi1> to vector<8x1024xi1>
    %107 = vector.broadcast %cst_35 : f32 to vector<8x1024xf32>
    %108 = arith.select %106, %85, %107 : vector<8x1024xi1>, vector<8x1024xf32>
    %c0_i32_36 = arith.constant 0 : i32
    %109 = vector.broadcast %c0_i32_36 : i32 to vector<1x1024xi32>
    %110 = arith.addi %3, %109 : vector<1x1024xi32>
    %c0_i32_37 = arith.constant 0 : i32
    %111 = vector.broadcast %c0_i32_37 : i32 to vector<1x1024xi32>
    %112 = arith.cmpi sge, %110, %111 : vector<1x1024xi32>
    %c0_i32_38 = arith.constant 0 : i32
    %113 = vector.broadcast %c0_i32_38 : i32 to vector<1x1024xi32>
    %114 = arith.addi %3, %113 : vector<1x1024xi32>
    %c32_i32_39 = arith.constant 32 : i32
    %115 = vector.broadcast %c32_i32_39 : i32 to vector<1x1024xi32>
    %116 = arith.cmpi slt, %114, %115 : vector<1x1024xi32>
    %117 = arith.andi %112, %116 : vector<1x1024xi1>
    %c0_i32_40 = arith.constant 0 : i32
    %118 = vector.broadcast %c0_i32_40 : i32 to vector<1x1024xi32>
    %119 = arith.addi %4, %118 : vector<1x1024xi32>
    %c0_i32_41 = arith.constant 0 : i32
    %120 = vector.broadcast %c0_i32_41 : i32 to vector<1x1024xi32>
    %121 = arith.cmpi sge, %119, %120 : vector<1x1024xi32>
    %122 = arith.andi %117, %121 : vector<1x1024xi1>
    %c0_i32_42 = arith.constant 0 : i32
    %123 = vector.broadcast %c0_i32_42 : i32 to vector<1x1024xi32>
    %124 = arith.addi %4, %123 : vector<1x1024xi32>
    %c32_i32_43 = arith.constant 32 : i32
    %125 = vector.broadcast %c32_i32_43 : i32 to vector<1x1024xi32>
    %126 = arith.cmpi slt, %124, %125 : vector<1x1024xi32>
    %127 = arith.andi %122, %126 : vector<1x1024xi1>
    %cst_44 = arith.constant 0.000000e+00 : f32
    %128 = vector.shape_cast %127 : vector<1x1024xi1> to vector<1x1024xi1>
    %129 = vector.broadcast %128 : vector<1x1024xi1> to vector<8x1024xi1>
    %130 = vector.broadcast %cst_44 : f32 to vector<8x1024xf32>
    %131 = arith.select %129, %2, %130 : vector<8x1024xi1>, vector<8x1024xf32>
    %132 = vector.extract_strided_slice %2 {offsets = [0, 1], sizes = [8, 1023], strides = [1, 1]} : vector<8x1024xf32> to vector<8x1023xf32>
    %133 = vector.extract_strided_slice %2 {offsets = [0, 0], sizes = [8, 1], strides = [1, 1]} : vector<8x1024xf32> to vector<8x1xf32>
    %134 = tpu.concatenate %132, %133 in 1 : vector<8x1023xf32>, vector<8x1xf32> -> vector<8x1024xf32>
    %c0_i32_45 = arith.constant 0 : i32
    %135 = vector.broadcast %c0_i32_45 : i32 to vector<1x1024xi32>
    %136 = arith.addi %3, %135 : vector<1x1024xi32>
    %c0_i32_46 = arith.constant 0 : i32
    %137 = vector.broadcast %c0_i32_46 : i32 to vector<1x1024xi32>
    %138 = arith.cmpi sge, %136, %137 : vector<1x1024xi32>
    %c0_i32_47 = arith.constant 0 : i32
    %139 = vector.broadcast %c0_i32_47 : i32 to vector<1x1024xi32>
    %140 = arith.addi %3, %139 : vector<1x1024xi32>
    %c32_i32_48 = arith.constant 32 : i32
    %141 = vector.broadcast %c32_i32_48 : i32 to vector<1x1024xi32>
    %142 = arith.cmpi slt, %140, %141 : vector<1x1024xi32>
    %143 = arith.andi %138, %142 : vector<1x1024xi1>
    %c1_i32_49 = arith.constant 1 : i32
    %144 = vector.broadcast %c1_i32_49 : i32 to vector<1x1024xi32>
    %145 = arith.addi %4, %144 : vector<1x1024xi32>
    %c0_i32_50 = arith.constant 0 : i32
    %146 = vector.broadcast %c0_i32_50 : i32 to vector<1x1024xi32>
    %147 = arith.cmpi sge, %145, %146 : vector<1x1024xi32>
    %148 = arith.andi %143, %147 : vector<1x1024xi1>
    %c1_i32_51 = arith.constant 1 : i32
    %149 = vector.broadcast %c1_i32_51 : i32 to vector<1x1024xi32>
    %150 = arith.addi %4, %149 : vector<1x1024xi32>
    %c32_i32_52 = arith.constant 32 : i32
    %151 = vector.broadcast %c32_i32_52 : i32 to vector<1x1024xi32>
    %152 = arith.cmpi slt, %150, %151 : vector<1x1024xi32>
    %153 = arith.andi %148, %152 : vector<1x1024xi1>
    %cst_53 = arith.constant 0.000000e+00 : f32
    %154 = vector.shape_cast %153 : vector<1x1024xi1> to vector<1x1024xi1>
    %155 = vector.broadcast %154 : vector<1x1024xi1> to vector<8x1024xi1>
    %156 = vector.broadcast %cst_53 : f32 to vector<8x1024xf32>
    %157 = arith.select %155, %134, %156 : vector<8x1024xi1>, vector<8x1024xf32>
    %158 = vector.extract_strided_slice %2 {offsets = [0, 31], sizes = [8, 993], strides = [1, 1]} : vector<8x1024xf32> to vector<8x993xf32>
    %159 = vector.extract_strided_slice %2 {offsets = [0, 0], sizes = [8, 31], strides = [1, 1]} : vector<8x1024xf32> to vector<8x31xf32>
    %160 = tpu.concatenate %158, %159 in 1 : vector<8x993xf32>, vector<8x31xf32> -> vector<8x1024xf32>
    %c1_i32_54 = arith.constant 1 : i32
    %161 = vector.broadcast %c1_i32_54 : i32 to vector<1x1024xi32>
    %162 = arith.addi %3, %161 : vector<1x1024xi32>
    %c0_i32_55 = arith.constant 0 : i32
    %163 = vector.broadcast %c0_i32_55 : i32 to vector<1x1024xi32>
    %164 = arith.cmpi sge, %162, %163 : vector<1x1024xi32>
    %c1_i32_56 = arith.constant 1 : i32
    %165 = vector.broadcast %c1_i32_56 : i32 to vector<1x1024xi32>
    %166 = arith.addi %3, %165 : vector<1x1024xi32>
    %c32_i32_57 = arith.constant 32 : i32
    %167 = vector.broadcast %c32_i32_57 : i32 to vector<1x1024xi32>
    %168 = arith.cmpi slt, %166, %167 : vector<1x1024xi32>
    %169 = arith.andi %164, %168 : vector<1x1024xi1>
    %c-1_i32_58 = arith.constant -1 : i32
    %170 = vector.broadcast %c-1_i32_58 : i32 to vector<1x1024xi32>
    %171 = arith.addi %4, %170 : vector<1x1024xi32>
    %c0_i32_59 = arith.constant 0 : i32
    %172 = vector.broadcast %c0_i32_59 : i32 to vector<1x1024xi32>
    %173 = arith.cmpi sge, %171, %172 : vector<1x1024xi32>
    %174 = arith.andi %169, %173 : vector<1x1024xi1>
    %c-1_i32_60 = arith.constant -1 : i32
    %175 = vector.broadcast %c-1_i32_60 : i32 to vector<1x1024xi32>
    %176 = arith.addi %4, %175 : vector<1x1024xi32>
    %c32_i32_61 = arith.constant 32 : i32
    %177 = vector.broadcast %c32_i32_61 : i32 to vector<1x1024xi32>
    %178 = arith.cmpi slt, %176, %177 : vector<1x1024xi32>
    %179 = arith.andi %174, %178 : vector<1x1024xi1>
    %cst_62 = arith.constant 0.000000e+00 : f32
    %180 = vector.shape_cast %179 : vector<1x1024xi1> to vector<1x1024xi1>
    %181 = vector.broadcast %180 : vector<1x1024xi1> to vector<8x1024xi1>
    %182 = vector.broadcast %cst_62 : f32 to vector<8x1024xf32>
    %183 = arith.select %181, %160, %182 : vector<8x1024xi1>, vector<8x1024xf32>
    %184 = vector.extract_strided_slice %2 {offsets = [0, 32], sizes = [8, 992], strides = [1, 1]} : vector<8x1024xf32> to vector<8x992xf32>
    %185 = vector.extract_strided_slice %2 {offsets = [0, 0], sizes = [8, 32], strides = [1, 1]} : vector<8x1024xf32> to vector<8x32xf32>
    %186 = tpu.concatenate %184, %185 in 1 : vector<8x992xf32>, vector<8x32xf32> -> vector<8x1024xf32>
    %c1_i32_63 = arith.constant 1 : i32
    %187 = vector.broadcast %c1_i32_63 : i32 to vector<1x1024xi32>
    %188 = arith.addi %3, %187 : vector<1x1024xi32>
    %c0_i32_64 = arith.constant 0 : i32
    %189 = vector.broadcast %c0_i32_64 : i32 to vector<1x1024xi32>
    %190 = arith.cmpi sge, %188, %189 : vector<1x1024xi32>
    %c1_i32_65 = arith.constant 1 : i32
    %191 = vector.broadcast %c1_i32_65 : i32 to vector<1x1024xi32>
    %192 = arith.addi %3, %191 : vector<1x1024xi32>
    %c32_i32_66 = arith.constant 32 : i32
    %193 = vector.broadcast %c32_i32_66 : i32 to vector<1x1024xi32>
    %194 = arith.cmpi slt, %192, %193 : vector<1x1024xi32>
    %195 = arith.andi %190, %194 : vector<1x1024xi1>
    %c0_i32_67 = arith.constant 0 : i32
    %196 = vector.broadcast %c0_i32_67 : i32 to vector<1x1024xi32>
    %197 = arith.addi %4, %196 : vector<1x1024xi32>
    %c0_i32_68 = arith.constant 0 : i32
    %198 = vector.broadcast %c0_i32_68 : i32 to vector<1x1024xi32>
    %199 = arith.cmpi sge, %197, %198 : vector<1x1024xi32>
    %200 = arith.andi %195, %199 : vector<1x1024xi1>
    %c0_i32_69 = arith.constant 0 : i32
    %201 = vector.broadcast %c0_i32_69 : i32 to vector<1x1024xi32>
    %202 = arith.addi %4, %201 : vector<1x1024xi32>
    %c32_i32_70 = arith.constant 32 : i32
    %203 = vector.broadcast %c32_i32_70 : i32 to vector<1x1024xi32>
    %204 = arith.cmpi slt, %202, %203 : vector<1x1024xi32>
    %205 = arith.andi %200, %204 : vector<1x1024xi1>
    %cst_71 = arith.constant 0.000000e+00 : f32
    %206 = vector.shape_cast %205 : vector<1x1024xi1> to vector<1x1024xi1>
    %207 = vector.broadcast %206 : vector<1x1024xi1> to vector<8x1024xi1>
    %208 = vector.broadcast %cst_71 : f32 to vector<8x1024xf32>
    %209 = arith.select %207, %186, %208 : vector<8x1024xi1>, vector<8x1024xf32>
    %210 = vector.extract_strided_slice %2 {offsets = [0, 33], sizes = [8, 991], strides = [1, 1]} : vector<8x1024xf32> to vector<8x991xf32>
    %211 = vector.extract_strided_slice %2 {offsets = [0, 0], sizes = [8, 33], strides = [1, 1]} : vector<8x1024xf32> to vector<8x33xf32>
    %212 = tpu.concatenate %210, %211 in 1 : vector<8x991xf32>, vector<8x33xf32> -> vector<8x1024xf32>
    %c1_i32_72 = arith.constant 1 : i32
    %213 = vector.broadcast %c1_i32_72 : i32 to vector<1x1024xi32>
    %214 = arith.addi %3, %213 : vector<1x1024xi32>
    %c0_i32_73 = arith.constant 0 : i32
    %215 = vector.broadcast %c0_i32_73 : i32 to vector<1x1024xi32>
    %216 = arith.cmpi sge, %214, %215 : vector<1x1024xi32>
    %c1_i32_74 = arith.constant 1 : i32
    %217 = vector.broadcast %c1_i32_74 : i32 to vector<1x1024xi32>
    %218 = arith.addi %3, %217 : vector<1x1024xi32>
    %c32_i32_75 = arith.constant 32 : i32
    %219 = vector.broadcast %c32_i32_75 : i32 to vector<1x1024xi32>
    %220 = arith.cmpi slt, %218, %219 : vector<1x1024xi32>
    %221 = arith.andi %216, %220 : vector<1x1024xi1>
    %c1_i32_76 = arith.constant 1 : i32
    %222 = vector.broadcast %c1_i32_76 : i32 to vector<1x1024xi32>
    %223 = arith.addi %4, %222 : vector<1x1024xi32>
    %c0_i32_77 = arith.constant 0 : i32
    %224 = vector.broadcast %c0_i32_77 : i32 to vector<1x1024xi32>
    %225 = arith.cmpi sge, %223, %224 : vector<1x1024xi32>
    %226 = arith.andi %221, %225 : vector<1x1024xi1>
    %c1_i32_78 = arith.constant 1 : i32
    %227 = vector.broadcast %c1_i32_78 : i32 to vector<1x1024xi32>
    %228 = arith.addi %4, %227 : vector<1x1024xi32>
    %c32_i32_79 = arith.constant 32 : i32
    %229 = vector.broadcast %c32_i32_79 : i32 to vector<1x1024xi32>
    %230 = arith.cmpi slt, %228, %229 : vector<1x1024xi32>
    %231 = arith.andi %226, %230 : vector<1x1024xi1>
    %cst_80 = arith.constant 0.000000e+00 : f32
    %232 = vector.shape_cast %231 : vector<1x1024xi1> to vector<1x1024xi1>
    %233 = vector.broadcast %232 : vector<1x1024xi1> to vector<8x1024xi1>
    %234 = vector.broadcast %cst_80 : f32 to vector<8x1024xf32>
    %235 = arith.select %233, %212, %234 : vector<8x1024xi1>, vector<8x1024xf32>
    %236 = tpu.concatenate %30, %56, %82, %108, %131, %157, %183, %209, %235 in 0 : vector<8x1024xf32>, vector<8x1024xf32>, vector<8x1024xf32>, vector<8x1024xf32>, vector<8x1024xf32>, vector<8x1024xf32>, vector<8x1024xf32>, vector<8x1024xf32>, vector<8x1024xf32> -> vector<72x1024xf32>
    %237 = arith.truncf %236 : vector<72x1024xf32> to vector<72x1024xbf16>
    %c0_81 = arith.constant 0 : index
    %c0_82 = arith.constant 0 : index
    %238 = vector.load %arg3[%c0_81, %c0_82] : memref<8x72xbf16, #tpu.memory_space<vmem>>, vector<8x72xbf16>
    %cst_83 = arith.constant dense<0.000000e+00> : vector<8x1024xf32>
    %239 = tpu.matmul %238, %237, %cst_83 {dimension_numbers = #tpu.dot_dimension_numbers<[1], [0], [0], [1], [0, 0, 1, 1], [], []>} : vector<8x72xbf16>, vector<72x1024xbf16>, vector<8x1024xf32> -> vector<8x1024xf32>
    %c0_84 = arith.constant 0 : index
    %c0_85 = arith.constant 0 : index
    %c0_86 = arith.constant 0 : index
    %240 = vector.load %arg4[%c0_84, %c0_85, %c0_86] : memref<1x8x1024xf32, #tpu.memory_space<vmem>>, vector<1x8x1024xf32>
    %241 = vector.shape_cast %240 : vector<1x8x1024xf32> to vector<8x1024xf32>
    %242 = vector.shape_cast %239 : vector<8x1024xf32> to vector<1x8x1024xf32>
    tpu.vector_store %arg4[%c0_84, %c0_85, %c0_86], %242 {strides = array<i32>} : memref<1x8x1024xf32, #tpu.memory_space<vmem>>, vector<1x8x1024xf32>,
    return
  }
  func.func @transform_0(%arg0: i32) -> (i32, i32, i32) {
    %c0_i32 = arith.constant 0 : i32
    %c0_i32_0 = arith.constant 0 : i32
    %c0_i32_1 = arith.constant 0 : i32
    return %arg0, %c0_i32, %c0_i32_0 : i32, i32, i32
  }
  func.func @transform_1(%arg0: i32) -> (i32, i32) {
    %c0_i32 = arith.constant 0 : i32
    %c0_i32_0 = arith.constant 0 : i32
    %c0_i32_1 = arith.constant 0 : i32
    return %c0_i32, %c0_i32_0 : i32, i32
  }
  func.func @transform_2(%arg0: i32) -> (i32, i32) {
    %c0_i32 = arith.constant 0 : i32
    %c0_i32_0 = arith.constant 0 : i32
    %c0_i32_1 = arith.constant 0 : i32
    return %c0_i32, %c0_i32_0 : i32, i32
  }
  func.func @transform_3(%arg0: i32) -> (i32, i32, i32) {
    %c0_i32 = arith.constant 0 : i32
    %c0_i32_0 = arith.constant 0 : i32
    %c0_i32_1 = arith.constant 0 : i32
    return %arg0, %c0_i32, %c0_i32_0 : i32, i32, i32
  }
}

</mosaic_0001>

<llo_original>
// kernel: tile.9
$region0: #{tile.9}
  %s0 = inlined_call_operand.vmem [shape: s32[32,32], index: 0, kind: input, shape index: {}]
  %s1 = inlined_call_operand.vmem [shape: s32[1,1024], index: 1, kind: output, shape index: {}]
  $region1: #{tile.9} parent=0
    #allocation0 [shape = 'u8[32768]{0}', space=vmem, size = 0x8000, scoped, tag = 'scoped mem for output reshape']
    %v2 = vld [vmem:[%s0] ss:$4 sm:$0xff]
    %vm3 = vcmask 261120
    %4 = vst.msk [vmem:[#allocation0] ss:$8 sm:$0xf] %vm3, %v2
    %5 = vst.msk [vmem:[#allocation0] ss:$8 sm:$0xf0] %vm3, %v2
    %s6 = scalar_lea.vmem %s0, 3
    %v7 = vld [vmem:[%s6] ss:$4 sm:$0xff]
    %8 = vrot.lane.b32.xlu0 %v7, 96
    %v9 = vpop.permute.xlu0 %8
    %vm10 = vcmask 1048320
    %11 = vst.msk [vmem:[#allocation0] ss:$8 sm:$0xf] %vm10, %v9
    %12 = vst.msk [vmem:[#allocation0] ss:$8 sm:$0xf0] %vm10, %v9
    %s13 = scalar_lea.vmem %s0, 2
    %v14 = vld [vmem:[%s13] ss:$4 sm:$0xff]
    %15 = vrot.lane.b32.xlu0 %v14, 64
    %v16 = vpop.permute.xlu0 %15
    %vm17 = vcmask 785920
    %18 = vst.msk [vmem:[#allocation0] ss:$8 sm:$0xf] %vm17, %v16
    %19 = vst.msk [vmem:[#allocation0] ss:$8 sm:$0xf0] %vm17, %v16
    %s20 = scalar_lea.vmem %s0, 1
    %v21 = vld [vmem:[%s20] ss:$4 sm:$0xff]
    %22 = vrot.lane.b32.xlu0 %v21, 32
    %v23 = vpop.permute.xlu0 %22
    %vm24 = vcmask 523520
    %25 = vst.msk [vmem:[#allocation0] ss:$8 sm:$0xf] %vm24, %v23
    %26 = vst.msk [vmem:[#allocation0] ss:$8 sm:$0xf0] %vm24, %v23
    %s28 = sshllo.u32 0, 1
    %v30 = vld [vmem:[#allocation0] sm:%s28]
    %s31 = sshllo.u32 0, 1
    %32 = vst [vmem:[%s1] sm:%s31] %v30
    %s33 = scalar_lea.vmem [#allocation0], 8
    %v34 = vld [vmem:[%s33] sm:%s28]
    %s35 = sshllo.u32 0, 1
    %s36 = scalar_lea.vmem %s1, 1
    %37 = vst [vmem:[%s36] sm:%s35] %v34
    %s38 = scalar_lea.vmem [#allocation0], 16
    %v39 = vld [vmem:[%s38] sm:%s28]
    %s40 = sshllo.u32 0, 1
    %s41 = smul.addr 1, 2
    %s42 = scalar_lea.vmem %s1, %s41
    %43 = vst [vmem:[%s42] sm:%s40] %v39
    %s44 = scalar_lea.vmem [#allocation0], 24
    %v45 = vld [vmem:[%s44] sm:%s28]
    %s46 = sshllo.u32 0, 1
    %s47 = smul.addr 1, 3
    %s48 = scalar_lea.vmem %s1, %s47
    %49 = vst [vmem:[%s48] sm:%s46] %v45
    %s50 = scalar_lea.vmem [#allocation0], 32
    %v51 = vld [vmem:[%s50] sm:%s28]
    %s52 = sshllo.u32 0, 1
    %s53 = smul.addr 1, 4
    %s54 = scalar_lea.vmem %s1, %s53
    %55 = vst [vmem:[%s54] sm:%s52] %v51
    %s56 = scalar_lea.vmem [#allocation0], 40
    %v57 = vld [vmem:[%s56] sm:%s28]
    %s58 = sshllo.u32 0, 1
    %s59 = smul.addr 1, 5
    %s60 = scalar_lea.vmem %s1, %s59
    %61 = vst [vmem:[%s60] sm:%s58] %v57
    %s62 = scalar_lea.vmem [#allocation0], 48
    %v63 = vld [vmem:[%s62] sm:%s28]
    %s64 = sshllo.u32 0, 1
    %s65 = smul.addr 1, 6
    %s66 = scalar_lea.vmem %s1, %s65
    %67 = vst [vmem:[%s66] sm:%s64] %v63
    %s68 = scalar_lea.vmem [#allocation0], 56
    %v69 = vld [vmem:[%s68] sm:%s28]
    %s70 = sshllo.u32 0, 1
    %s71 = smul.addr 1, 7
    %s72 = scalar_lea.vmem %s1, %s71
    %73 = vst [vmem:[%s72] sm:%s70] %v69

// kernel: _lambda_.3
$region0: #{_lambda_.3}
  #allocation0 [shape = 'u32[]', space=smem, size = 0x4, offset = 0x4, fixed_abs, tag = 'smem constant byte address 0x4 - core index']
  #allocation1 [shape = 'u32[144,128]{1,0:T(1,128)}', space=vmem, size = 0x12000, scoped, tag = 'internal scratch']
  %s0 = inlined_call_operand.vmem [shape: bf16[2,8,16,16], index: 0, kind: input, shape index: {}]
  %s1 = inlined_call_operand.vmem [shape: bf16[32,16], index: 1, kind: input, shape index: {}]
  %s2 = inlined_call_operand.vmem [shape: bf16[16,32], index: 2, kind: input, shape index: {}]
  %s3 = inlined_call_operand.vmem [shape: bf16[2,8,32,32], index: 3, kind: output, shape index: {}]
  %s4 = sld [smem:[#allocation0]]
  $region82: #{_lambda_.3} parent=0
    _
  %s6 = ssub.s32 1, %s4
  %s7 = scalar_select 0, %s6, %s4
  $region1: #{_lambda_.3} parent=0
    #allocation2 [shape = 'u8[65536]{0}', space=vmem, size = 0x10000, scoped, tag = 'output window, operand 0']
    loop: start=0, step=1, limit=6
    $region2: #{_lambda_.3} parent=1 // loop_pre_header
      _
    $region3: #{_lambda_.3} parent=1 // loop_header
      %s9 = sphi 0, %s13
      %p10 = scmp.ge.s32.totalorder %s9, 6
      %s16 = sphi 0, %s28
      %s17 = sphi 0, %s24
      %s18 = sphi 0, %s16
      %s19 = sphi 0, %s17
      %s20 = sphi 0, %s18
      %s21 = sphi 0, %s19
      %s31 = sphi 0, %s33
      %s34 = sphi 0, %s31
      %s35 = sphi 0, %s34
      %s51 = sphi 0, %s35
      %s57 = sphi 0, %s59
      %s60 = sphi 0, %s57
      %s61 = sphi 0, %s60
      %s77 = sphi 0, %s61
      %s81 = sphi 0, %s81
      %s83 = sphi 0, %s81
      %s84 = sphi 0, %s83
      %s98 = sphi 0, %s84
      %s106 = sphi 0, %s108
      %s109 = sphi 0, %s106
      %s110 = sphi 0, %s109
      %s126 = sphi 0, %s110
    $region4: #{_lambda_.3} parent=1 // loop_header_branch
      %12 = sbr.rel (%p10) target = $region8
    $region5: #{_lambda_.3} parent=1 // loop_body
      %s14 = ssub.s32 %s9, 1
      %s15 = ssub.s32 %s9, 2
      %s22 = sadd.s32 1, %s17
      %p23 = scmp.ge.s32.totalorder %s22, 2
      %s24 = scalar_select %p23, 0, %s22
      %s25 = sadd.s32 1, %s16
      %s26 = scalar_select %p23, %s25, %s16
      %p27 = scmp.ge.s32.totalorder %s26, 2
      %s28 = scalar_select %p27, 0, %s26
      %s29 = ssub.s32 %s16, %s28
      %p30 = scmp.eq.s32.totalorder %s29, 0
      %s32 = sadd.s32 %s31, 1
      %s33 = scalar_select %p30, %s31, %s32
      %p36 = pneg %p30
      %p37 = scmp.eq.s32.totalorder %s9, 3
      %p38 = por %p36, %p37
      %p39 = scmp.ne.s32.totalorder %s31, %s34
      %p40 = scmp.eq.s32.totalorder %s9, 0
      %p41 = por %p39, %p40
      %p42 = scmp.ne.s32.totalorder %s31, %s34
      %p43 = scmp.eq.s32.totalorder %s14, 3
      %p44 = por %p42, %p43
      %p45 = scmp.ne.s32.totalorder %s34, %s35
      %p46 = scmp.eq.s32.totalorder %s14, 0
      %p47 = por %p45, %p46
      %p48 = scmp.ne.s32.totalorder %s34, %s35
      %p49 = scmp.eq.s32.totalorder %s15, 3
      %p50 = por %p48, %p49
      %p52 = scmp.ne.s32.totalorder %s35, %s51
      %p53 = scmp.eq.s32.totalorder %s15, 0
      %p54 = por %p52, %p53
      %s55 = ssub.s32 %s17, %s24
      %p56 = scmp.eq.s32.totalorder %s55, 0
      %s58 = sadd.s32 %s57, 1
      %s59 = scalar_select %p56, %s57, %s58
      %p62 = pneg %p56
      %p63 = scmp.eq.s32.totalorder %s9, 3
      %p64 = por %p62, %p63
      %p65 = scmp.ne.s32.totalorder %s57, %s60
      %p66 = scmp.eq.s32.totalorder %s9, 0
      %p67 = por %p65, %p66
      %p68 = scmp.ne.s32.totalorder %s57, %s60
      %p69 = scmp.eq.s32.totalorder %s14, 3
      %p70 = por %p68, %p69
      %p71 = scmp.ne.s32.totalorder %s60, %s61
      %p72 = scmp.eq.s32.totalorder %s14, 0
      %p73 = por %p71, %p72
      %p74 = scmp.ne.s32.totalorder %s60, %s61
      %p75 = scmp.eq.s32.totalorder %s15, 3
      %p76 = por %p74, %p75
      %p78 = scmp.ne.s32.totalorder %s61, %s77
      %p79 = scmp.eq.s32.totalorder %s15, 0
      %p80 = por %p78, %p79
      %s82 = sadd.s32 %s81, 1
      %p85 = scmp.eq.s32.totalorder %s9, 3
      %p86 = scmp.ne.s32.totalorder %s81, %s83
      %p87 = scmp.eq.s32.totalorder %s9, 0
      %p88 = por %p86, %p87
      %p89 = scmp.ne.s32.totalorder %s81, %s83
      %p90 = scmp.eq.s32.totalorder %s14, 3
      %p91 = por %p89, %p90
      %p92 = scmp.ne.s32.totalorder %s83, %s84
      %p93 = scmp.eq.s32.totalorder %s14, 0
      %p94 = por %p92, %p93
      %p95 = scmp.ne.s32.totalorder %s83, %s84
      %p96 = scmp.eq.s32.totalorder %s15, 3
      %p97 = por %p95, %p96
      %p99 = scmp.ne.s32.totalorder %s84, %s98
      %p100 = scmp.eq.s32.totalorder %s15, 0
      %p101 = por %p99, %p100
      %s102 = ssub.s32 %s16, %s28
      %s103 = ssub.s32 %s17, %s24
      %s104 = sor.u32 %s102, %s103
      %p105 = scmp.eq.s32.totalorder %s104, 0
      %s107 = sadd.s32 %s106, 1
      %s108 = scalar_select %p105, %s106, %s107
      %p111 = pneg %p105
      %p112 = scmp.eq.s32.totalorder %s9, 3
      %p113 = por %p111, %p112
      %p114 = scmp.ne.s32.totalorder %s106, %s109
      %p115 = scmp.eq.s32.totalorder %s9, 0
      %p116 = por %p114, %p115
      %p117 = scmp.ne.s32.totalorder %s106, %s109
      %p118 = scmp.eq.s32.totalorder %s14, 3
      %p119 = por %p117, %p118
      %p120 = scmp.ne.s32.totalorder %s109, %s110
      %p121 = scmp.eq.s32.totalorder %s14, 0
      %p122 = por %p120, %p121
      %p123 = scmp.ne.s32.totalorder %s109, %s110
      %p124 = scmp.eq.s32.totalorder %s15, 3
      %p125 = por %p123, %p124
      %p127 = scmp.ne.s32.totalorder %s110, %s126
      %p128 = scmp.eq.s32.totalorder %s15, 0
      %p129 = por %p127, %p128
      %p130 = scmp.le.s32.totalorder 1, %s9
      %p131 = scmp.lt.s32.totalorder %s9, 5
      %p132 = pnand %p130, %p131
      %p133 = pneg %p132
      // Predicated region
      $region9: #{_lambda_.3} parent=5 // pred_check
        _
      $region10: #{_lambda_.3} parent=5 // pred_check_branch
        %135 = sbr.rel (%p132) target = $region12
      $region11: #{_lambda_.3} parent=5 // pred_region
        %s136 = ssub.s32 %s9, 1
        // Predicated region
        $region13: #{_lambda_.3} parent=11 // pred_check
          %p137 = pneg %p94
        $region14: #{_lambda_.3} parent=11 // pred_check_branch
          %139 = sbr.rel (%p137) target = $region16
        $region15: #{_lambda_.3} parent=11 // pred_region
          _
        $region16: #{_lambda_.3} parent=11 // pred_fallthru
          _
      $region12: #{_lambda_.3} parent=5 // pred_fallthru
        _
      %p140 = scmp.lt.s32.totalorder %s9, 4
      // Predicated region
      $region17: #{_lambda_.3} parent=5 // pred_check
        %p141 = pneg %p140
      $region18: #{_lambda_.3} parent=5 // pred_check_branch
        %143 = sbr.rel (%p141) target = $region20
      $region19: #{_lambda_.3} parent=5 // pred_region
        // Predicated region
        $region21: #{_lambda_.3} parent=19 // pred_check
          %p144 = pneg %p41
        $region22: #{_lambda_.3} parent=19 // pred_check_branch
          %146 = sbr.rel (%p144) target = $region24
        $region23: #{_lambda_.3} parent=19 // pred_region
          %p147 = scmp.lt.s32.totalorder %s16, 1
          %s148 = scalar_select %p147, %s16, 1
          %s149 = smul.addr %s148, 16
          %s150 = smul.addr %s149, 4
          %s151 = scalar_lea.vmem %s0, %s150
        $region24: #{_lambda_.3} parent=19 // pred_fallthru
          _
        // Predicated region
        $region25: #{_lambda_.3} parent=19 // pred_check
          %p152 = pneg %p67
        $region26: #{_lambda_.3} parent=19 // pred_check_branch
          %154 = sbr.rel (%p152) target = $region28
        $region27: #{_lambda_.3} parent=19 // pred_region
          %s155 = smul.u32 2, %s17
          %p156 = scmp.lt.s32.totalorder %s155, 3
          %s157 = scalar_select %p156, %s155, 3
          %s158 = smul.addr %s157, 4
          %s159 = scalar_lea.vmem %s1, %s158
          %s160 = smul.u32 2, %s17
        $region28: #{_lambda_.3} parent=19 // pred_fallthru
          _
      $region20: #{_lambda_.3} parent=5 // pred_fallthru
        _
      %p161 = scmp.le.s32.totalorder 1, %s9
      %p162 = scmp.lt.s32.totalorder %s9, 5
      %p163 = pnand %p161, %p162
      %p164 = pneg %p163
      // Predicated region
      $region29: #{_lambda_.3} parent=5 // pred_check
        _
      $region30: #{_lambda_.3} parent=5 // pred_check_branch
        %166 = sbr.rel (%p163) target = $region32
      $region31: #{_lambda_.3} parent=5 // pred_region
        %s167 = ssub.s32 %s9, 1
        %p168 = scmp.lt.s32.totalorder %s18, 1
        %s169 = scalar_select %p168, %s18, 1
        %s170 = smul.addr %s169, 16
        %s171 = smul.addr %s170, 4
        %s172 = scalar_lea.vmem %s0, %s171
        %p173 = pneg %p47
        %p174 = pneg %p44
        %s175 = smul.u32 2, %s19
        %p176 = scmp.lt.s32.totalorder %s175, 3
        %s177 = scalar_select %p176, %s175, 3
        %s178 = smul.addr %s177, 4
        %s179 = scalar_lea.vmem %s1, %s178
        %p180 = pneg %p73
        %p181 = pneg %p70
        %p182 = pneg %p94
        %p183 = pneg %p91
        %p184 = pneg %p122
        %p185 = pneg %p119
        %s186 = sand.u32 %s109, 1
        %s187 = sand.u32 %s109, 1
        %s188 = smul.addr %s187, 64
        %s189 = scalar_lea.vmem [#allocation2], %s188
        %p190 = scmp.lt.s32.totalorder %s18, 1
        %s191 = scalar_select %p190, %s18, 1
        %s192 = smul.addr %s191, 16
        %s193 = smul.addr %s192, 4
        %s194 = scalar_lea.vmem %s0, %s193
        %s195 = smul.u32 2, %s19
        %p196 = scmp.lt.s32.totalorder %s195, 3
        %s197 = scalar_select %p196, %s195, 3
        %s198 = smul.addr %s197, 4
        %s199 = scalar_lea.vmem %s1, %s198
        %s200 = smul.u32 2, %s19
        %s201 = smul.u32 2, %s19
        %v203 = vld [vmem:[%s194] sm:$0xf]
        %v204 = vld [vmem:[%s194 + $0x4] sm:$0xf]
        %v205 = vld [vmem:[%s194 + $0x8] sm:$0xf]
        %v206 = vld [vmem:[%s194 + $0xc] sm:$0xf]
        %v207 = vld [vmem:[%s194 + $0x10] sm:$0xf]
        %v208 = vld [vmem:[%s194 + $0x14] sm:$0xf]
        %v209 = vld [vmem:[%s194 + $0x18] sm:$0xf]
        %v210 = vld [vmem:[%s194 + $0x1c] sm:$0xf]
        %v211 = vld [vmem:[%s194 + $0x20] sm:$0xf]
        %v212 = vld [vmem:[%s194 + $0x24] sm:$0xf]
        %v213 = vld [vmem:[%s194 + $0x28] sm:$0xf]
        %v214 = vld [vmem:[%s194 + $0x2c] sm:$0xf]
        %v215 = vld [vmem:[%s194 + $0x30] sm:$0xf]
        %v216 = vld [vmem:[%s194 + $0x34] sm:$0xf]
        %v217 = vld [vmem:[%s194 + $0x38] sm:$0xf]
        %v218 = vld [vmem:[%s194 + $0x3c] sm:$0xf]
        %v219 = vld [vmem:[%s199] sm:$0xf]
        %v220 = vld [vmem:[%s199 + $0x4] sm:$0xf]
        %v223 = vunpack.c.l.b16 %v219
        %v224 = vunpack.c.l.b16 %v220
        %v225 = vpack.c.b16 %v224, %v223
        %v228 = vunpack.c.l.b16 %v203
        %v229 = vunpack.c.l.b16 %v204
        %v230 = vpack.c.b16 %v229, %v228
        %vm232 = vcmask 130048
        %v234 = vsel %vm232, %v225, 0
        %236 = vmatprep.subr.bf16.mxu0 0
        %237 = vmatpush1.bf16.msra.mxu0 %v230
        %238 = vmatprep.subr.bf16.mxu0 0
        %239 = vmatpush1.bf16.msra.mxu0 0
        %240 = vmatprep.subr.bf16.mxu0 0
        %241 = vmatpush1.bf16.msra.mxu0 0
        %242 = vmatprep.subr.bf16.mxu0 0
        %243 = vmatpush1.bf16.msra.mxu0 0
        %244 = vmatprep.subr.bf16.mxu0 0
        %245 = vmatpush1.bf16.msra.mxu0 0
        %246 = vmatprep.subr.bf16.mxu0 0
        %247 = vmatpush1.bf16.msra.mxu0 0
        %248 = vmatprep.subr.bf16.mxu0 0
        %249 = vmatpush1.bf16.msra.mxu0 0
        %250 = vmatprep.subr.bf16.mxu0 0
        %251 = vmatpush1.bf16.msra.mxu0 0
        %252 = vmatprep.subr.bf16.mxu0 0
        %253 = vmatpush1.bf16.msra.mxu0 0
        %254 = vmatprep.subr.bf16.mxu0 0
        %255 = vmatpush1.bf16.msra.mxu0 0
        %256 = vmatprep.subr.bf16.mxu0 0
        %257 = vmatpush1.bf16.msra.mxu0 0
        %258 = vmatprep.subr.bf16.mxu0 0
        %259 = vmatpush1.bf16.msra.mxu0 0
        %260 = vmatprep.subr.bf16.mxu0 0
        %261 = vmatpush1.bf16.msra.mxu0 0
        %262 = vmatprep.subr.bf16.mxu0 0
        %263 = vmatpush1.bf16.msra.mxu0 0
        %264 = vmatprep.subr.bf16.mxu0 0
        %265 = vmatpush1.bf16.msra.mxu0 0
        %266 = vmatprep.subr.bf16.mxu0 0
        %267 = vmatpush1.bf16.msra.mxu0 0
        %268 = vmatprep.mubr.bf16.mxu0 0
        %269 = vmatmul.mubr.bf16.gmra.mrb[0].mxu0 %v234
        %v270 = vpop.f32.mrb[0].mxu0
        %v271 = vadd.f32 0.0, %v270
        %v272 = vpop.f32.mrb[0].mxu0
        %v273 = vpop.f32.mrb[0].mxu0
        %v274 = vadd.f32 0.0, %v273
        %v275 = vpop.f32.mrb[0].mxu0
        %276 = vdwg.mxu0
        %v279 = vunpack.c.l.b16 %v205
        %v280 = vunpack.c.l.b16 %v206
        %v281 = vpack.c.b16 %v280, %v279
        %283 = vmatprep.subr.bf16.mxu0 0
        %284 = vmatpush1.bf16.msra.mxu0 %v281
        %285 = vmatprep.subr.bf16.mxu0 0
        %286 = vmatpush1.bf16.msra.mxu0 0
        %287 = vmatprep.subr.bf16.mxu0 0
        %288 = vmatpush1.bf16.msra.mxu0 0
        %289 = vmatprep.subr.bf16.mxu0 0
        %290 = vmatpush1.bf16.msra.mxu0 0
        %291 = vmatprep.subr.bf16.mxu0 0
        %292 = vmatpush1.bf16.msra.mxu0 0
        %293 = vmatprep.subr.bf16.mxu0 0
        %294 = vmatpush1.bf16.msra.mxu0 0
        %295 = vmatprep.subr.bf16.mxu0 0
        %296 = vmatpush1.bf16.msra.mxu0 0
        %297 = vmatprep.subr.bf16.mxu0 0
        %298 = vmatpush1.bf16.msra.mxu0 0
        %299 = vmatprep.subr.bf16.mxu0 0
        %300 = vmatpush1.bf16.msra.mxu0 0
        %301 = vmatprep.subr.bf16.mxu0 0
        %302 = vmatpush1.bf16.msra.mxu0 0
        %303 = vmatprep.subr.bf16.mxu0 0
        %304 = vmatpush1.bf16.msra.mxu0 0
        %305 = vmatprep.subr.bf16.mxu0 0
        %306 = vmatpush1.bf16.msra.mxu0 0
        %307 = vmatprep.subr.bf16.mxu0 0
        %308 = vmatpush1.bf16.msra.mxu0 0
        %309 = vmatprep.subr.bf16.mxu0 0
        %310 = vmatpush1.bf16.msra.mxu0 0
        %311 = vmatprep.subr.bf16.mxu0 0
        %312 = vmatpush1.bf16.msra.mxu0 0
        %313 = vmatprep.subr.bf16.mxu0 0
        %314 = vmatpush1.bf16.msra.mxu0 0
        %315 = vmatprep.mubr.bf16.mxu0 0
        %316 = vmatmul.mubr.bf16.gmra.mrb[0].mxu0 %v234
        %v317 = vpop.f32.mrb[0].mxu0
        %v318 = vadd.f32 0.0, %v317
        %v319 = vpop.f32.mrb[0].mxu0
        %v320 = vpop.f32.mrb[0].mxu0
        %v321 = vadd.f32 0.0, %v320
        %v322 = vpop.f32.mrb[0].mxu0
        %323 = vdwg.mxu0
        %v326 = vunpack.c.l.b16 %v207
        %v327 = vunpack.c.l.b16 %v208
        %v328 = vpack.c.b16 %v327, %v326
        %330 = vmatprep.subr.bf16.mxu0 0
        %331 = vmatpush1.bf16.msra.mxu0 %v328
        %332 = vmatprep.subr.bf16.mxu0 0
        %333 = vmatpush1.bf16.msra.mxu0 0
        %334 = vmatprep.subr.bf16.mxu0 0
        %335 = vmatpush1.bf16.msra.mxu0 0
        %336 = vmatprep.subr.bf16.mxu0 0
        %337 = vmatpush1.bf16.msra.mxu0 0
        %338 = vmatprep.subr.bf16.mxu0 0
        %339 = vmatpush1.bf16.msra.mxu0 0
        %340 = vmatprep.subr.bf16.mxu0 0
        %341 = vmatpush1.bf16.msra.mxu0 0
        %342 = vmatprep.subr.bf16.mxu0 0
        %343 = vmatpush1.bf16.msra.mxu0 0
        %344 = vmatprep.subr.bf16.mxu0 0
        %345 = vmatpush1.bf16.msra.mxu0 0
        %346 = vmatprep.subr.bf16.mxu0 0
        %347 = vmatpush1.bf16.msra.mxu0 0
        %348 = vmatprep.subr.bf16.mxu0 0
        %349 = vmatpush1.bf16.msra.mxu0 0
        %350 = vmatprep.subr.bf16.mxu0 0
        %351 = vmatpush1.bf16.msra.mxu0 0
        %352 = vmatprep.subr.bf16.mxu0 0
        %353 = vmatpush1.bf16.msra.mxu0 0
        %354 = vmatprep.subr.bf16.mxu0 0
        %355 = vmatpush1.bf16.msra.mxu0 0
        %356 = vmatprep.subr.bf16.mxu0 0
        %357 = vmatpush1.bf16.msra.mxu0 0
        %358 = vmatprep.subr.bf16.mxu0 0
        %359 = vmatpush1.bf16.msra.mxu0 0
        %360 = vmatprep.subr.bf16.mxu0 0
        %361 = vmatpush1.bf16.msra.mxu0 0
        %362 = vmatprep.mubr.bf16.mxu0 0
        %363 = vmatmul.mubr.bf16.gmra.mrb[0].mxu0 %v234
        %v364 = vpop.f32.mrb[0].mxu0
        %v365 = vadd.f32 0.0, %v364
        %v366 = vpop.f32.mrb[0].mxu0
        %v367 = vpop.f32.mrb[0].mxu0
        %v368 = vadd.f32 0.0, %v367
        %v369 = vpop.f32.mrb[0].mxu0
        %370 = vdwg.mxu0
        %v373 = vunpack.c.l.b16 %v209
        %v374 = vunpack.c.l.b16 %v210
        %v375 = vpack.c.b16 %v374, %v373
        %377 = vmatprep.subr.bf16.mxu0 0
        %378 = vmatpush1.bf16.msra.mxu0 %v375
        %379 = vmatprep.subr.bf16.mxu0 0
        %380 = vmatpush1.bf16.msra.mxu0 0
        %381 = vmatprep.subr.bf16.mxu0 0
        %382 = vmatpush1.bf16.msra.mxu0 0
        %383 = vmatprep.subr.bf16.mxu0 0
        %384 = vmatpush1.bf16.msra.mxu0 0
        %385 = vmatprep.subr.bf16.mxu0 0
        %386 = vmatpush1.bf16.msra.mxu0 0
        %387 = vmatprep.subr.bf16.mxu0 0
        %388 = vmatpush1.bf16.msra.mxu0 0
        %389 = vmatprep.subr.bf16.mxu0 0
        %390 = vmatpush1.bf16.msra.mxu0 0
        %391 = vmatprep.subr.bf16.mxu0 0
        %392 = vmatpush1.bf16.msra.mxu0 0
        %393 = vmatprep.subr.bf16.mxu0 0
        %394 = vmatpush1.bf16.msra.mxu0 0
        %395 = vmatprep.subr.bf16.mxu0 0
        %396 = vmatpush1.bf16.msra.mxu0 0
        %397 = vmatprep.subr.bf16.mxu0 0
        %398 = vmatpush1.bf16.msra.mxu0 0
        %399 = vmatprep.subr.bf16.mxu0 0
        %400 = vmatpush1.bf16.msra.mxu0 0
        %401 = vmatprep.subr.bf16.mxu0 0
        %402 = vmatpush1.bf16.msra.mxu0 0
        %403 = vmatprep.subr.bf16.mxu0 0
        %404 = vmatpush1.bf16.msra.mxu0 0
        %405 = vmatprep.subr.bf16.mxu0 0
        %406 = vmatpush1.bf16.msra.mxu0 0
        %407 = vmatprep.subr.bf16.mxu0 0
        %408 = vmatpush1.bf16.msra.mxu0 0
        %409 = vmatprep.mubr.bf16.mxu0 0
        %410 = vmatmul.mubr.bf16.gmra.mrb[0].mxu0 %v234
        %v411 = vpop.f32.mrb[0].mxu0
        %v412 = vadd.f32 0.0, %v411
        %v413 = vpop.f32.mrb[0].mxu0
        %v414 = vpop.f32.mrb[0].mxu0
        %v415 = vadd.f32 0.0, %v414
        %v416 = vpop.f32.mrb[0].mxu0
        %417 = vdwg.mxu0
        %v420 = vunpack.c.l.b16 %v211
        %v421 = vunpack.c.l.b16 %v212
        %v422 = vpack.c.b16 %v421, %v420
        %424 = vmatprep.subr.bf16.mxu0 0
        %425 = vmatpush1.bf16.msra.mxu0 %v422
        %426 = vmatprep.subr.bf16.mxu0 0
        %427 = vmatpush1.bf16.msra.mxu0 0
        %428 = vmatprep.subr.bf16.mxu0 0
        %429 = vmatpush1.bf16.msra.mxu0 0
        %430 = vmatprep.subr.bf16.mxu0 0
        %431 = vmatpush1.bf16.msra.mxu0 0
        %432 = vmatprep.subr.bf16.mxu0 0
        %433 = vmatpush1.bf16.msra.mxu0 0
        %434 = vmatprep.subr.bf16.mxu0 0
        %435 = vmatpush1.bf16.msra.mxu0 0
        %436 = vmatprep.subr.bf16.mxu0 0
        %437 = vmatpush1.bf16.msra.mxu0 0
        %438 = vmatprep.subr.bf16.mxu0 0
        %439 = vmatpush1.bf16.msra.mxu0 0
        %440 = vmatprep.subr.bf16.mxu0 0
        %441 = vmatpush1.bf16.msra.mxu0 0
        %442 = vmatprep.subr.bf16.mxu0 0
        %443 = vmatpush1.bf16.msra.mxu0 0
        %444 = vmatprep.subr.bf16.mxu0 0
        %445 = vmatpush1.bf16.msra.mxu0 0
        %446 = vmatprep.subr.bf16.mxu0 0
        %447 = vmatpush1.bf16.msra.mxu0 0
        %448 = vmatprep.subr.bf16.mxu0 0
        %449 = vmatpush1.bf16.msra.mxu0 0
        %450 = vmatprep.subr.bf16.mxu0 0
        %451 = vmatpush1.bf16.msra.mxu0 0
        %452 = vmatprep.subr.bf16.mxu0 0
        %453 = vmatpush1.bf16.msra.mxu0 0
        %454 = vmatprep.subr.bf16.mxu0 0
        %455 = vmatpush1.bf16.msra.mxu0 0
        %456 = vmatprep.mubr.bf16.mxu0 0
        %457 = vmatmul.mubr.bf16.gmra.mrb[0].mxu0 %v234
        %v458 = vpop.f32.mrb[0].mxu0
        %v459 = vadd.f32 0.0, %v458
        %v460 = vpop.f32.mrb[0].mxu0
        %v461 = vpop.f32.mrb[0].mxu0
        %v462 = vadd.f32 0.0, %v461
        %v463 = vpop.f32.mrb[0].mxu0
        %464 = vdwg.mxu0
        %v467 = vunpack.c.l.b16 %v213
        %v468 = vunpack.c.l.b16 %v214
        %v469 = vpack.c.b16 %v468, %v467
        %471 = vmatprep.subr.bf16.mxu0 0
        %472 = vmatpush1.bf16.msra.mxu0 %v469
        %473 = vmatprep.subr.bf16.mxu0 0
        %474 = vmatpush1.bf16.msra.mxu0 0
        %475 = vmatprep.subr.bf16.mxu0 0
        %476 = vmatpush1.bf16.msra.mxu0 0
        %477 = vmatprep.subr.bf16.mxu0 0
        %478 = vmatpush1.bf16.msra.mxu0 0
        %479 = vmatprep.subr.bf16.mxu0 0
        %480 = vmatpush1.bf16.msra.mxu0 0
        %481 = vmatprep.subr.bf16.mxu0 0
        %482 = vmatpush1.bf16.msra.mxu0 0
        %483 = vmatprep.subr.bf16.mxu0 0
        %484 = vmatpush1.bf16.msra.mxu0 0
        %485 = vmatprep.subr.bf16.mxu0 0
        %486 = vmatpush1.bf16.msra.mxu0 0
        %487 = vmatprep.subr.bf16.mxu0 0
        %488 = vmatpush1.bf16.msra.mxu0 0
        %489 = vmatprep.subr.bf16.mxu0 0
        %490 = vmatpush1.bf16.msra.mxu0 0
        %491 = vmatprep.subr.bf16.mxu0 0
        %492 = vmatpush1.bf16.msra.mxu0 0
        %493 = vmatprep.subr.bf16.mxu0 0
        %494 = vmatpush1.bf16.msra.mxu0 0
        %495 = vmatprep.subr.bf16.mxu0 0
        %496 = vmatpush1.bf16.msra.mxu0 0
        %497 = vmatprep.subr.bf16.mxu0 0
        %498 = vmatpush1.bf16.msra.mxu0 0
        %499 = vmatprep.subr.bf16.mxu0 0
        %500 = vmatpush1.bf16.msra.mxu0 0
        %501 = vmatprep.subr.bf16.mxu0 0
        %502 = vmatpush1.bf16.msra.mxu0 0
        %503 = vmatprep.mubr.bf16.mxu0 0
        %504 = vmatmul.mubr.bf16.gmra.mrb[0].mxu0 %v234
        %v505 = vpop.f32.mrb[0].mxu0
        %v506 = vadd.f32 0.0, %v505
        %v507 = vpop.f32.mrb[0].mxu0
        %v508 = vpop.f32.mrb[0].mxu0
        %v509 = vadd.f32 0.0, %v508
        %v510 = vpop.f32.mrb[0].mxu0
        %511 = vdwg.mxu0
        %v514 = vunpack.c.l.b16 %v215
        %v515 = vunpack.c.l.b16 %v216
        %v516 = vpack.c.b16 %v515, %v514
        %518 = vmatprep.subr.bf16.mxu0 0
        %519 = vmatpush1.bf16.msra.mxu0 %v516
        %520 = vmatprep.subr.bf16.mxu0 0
        %521 = vmatpush1.bf16.msra.mxu0 0
        %522 = vmatprep.subr.bf16.mxu0 0
        %523 = vmatpush1.bf16.msra.mxu0 0
        %524 = vmatprep.subr.bf16.mxu0 0
        %525 = vmatpush1.bf16.msra.mxu0 0
        %526 = vmatprep.subr.bf16.mxu0 0
        %527 = vmatpush1.bf16.msra.mxu0 0
        %528 = vmatprep.subr.bf16.mxu0 0
        %529 = vmatpush1.bf16.msra.mxu0 0
        %530 = vmatprep.subr.bf16.mxu0 0
        %531 = vmatpush1.bf16.msra.mxu0 0
        %532 = vmatprep.subr.bf16.mxu0 0
        %533 = vmatpush1.bf16.msra.mxu0 0
        %534 = vmatprep.subr.bf16.mxu0 0
        %535 = vmatpush1.bf16.msra.mxu0 0
        %536 = vmatprep.subr.bf16.mxu0 0
        %537 = vmatpush1.bf16.msra.mxu0 0
        %538 = vmatprep.subr.bf16.mxu0 0
        %539 = vmatpush1.bf16.msra.mxu0 0
        %540 = vmatprep.subr.bf16.mxu0 0
        %541 = vmatpush1.bf16.msra.mxu0 0
        %542 = vmatprep.subr.bf16.mxu0 0
        %543 = vmatpush1.bf16.msra.mxu0 0
        %544 = vmatprep.subr.bf16.mxu0 0
        %545 = vmatpush1.bf16.msra.mxu0 0
        %546 = vmatprep.subr.bf16.mxu0 0
        %547 = vmatpush1.bf16.msra.mxu0 0
        %548 = vmatprep.subr.bf16.mxu0 0
        %549 = vmatpush1.bf16.msra.mxu0 0
        %550 = vmatprep.mubr.bf16.mxu0 0
        %551 = vmatmul.mubr.bf16.gmra.mrb[0].mxu0 %v234
        %v552 = vpop.f32.mrb[0].mxu0
        %v553 = vadd.f32 0.0, %v552
        %v554 = vpop.f32.mrb[0].mxu0
        %v555 = vpop.f32.mrb[0].mxu0
        %v556 = vadd.f32 0.0, %v555
        %v557 = vpop.f32.mrb[0].mxu0
        %558 = vdwg.mxu0
        %v561 = vunpack.c.l.b16 %v217
        %v562 = vunpack.c.l.b16 %v218
        %v563 = vpack.c.b16 %v562, %v561
        %565 = vmatprep.subr.bf16.mxu0 0
        %566 = vmatpush1.bf16.msra.mxu0 %v563
        %567 = vmatprep.subr.bf16.mxu0 0
        %568 = vmatpush1.bf16.msra.mxu0 0
        %569 = vmatprep.subr.bf16.mxu0 0
        %570 = vmatpush1.bf16.msra.mxu0 0
        %571 = vmatprep.subr.bf16.mxu0 0
        %572 = vmatpush1.bf16.msra.mxu0 0
        %573 = vmatprep.subr.bf16.mxu0 0
        %574 = vmatpush1.bf16.msra.mxu0 0
        %575 = vmatprep.subr.bf16.mxu0 0
        %576 = vmatpush1.bf16.msra.mxu0 0
        %577 = vmatprep.subr.bf16.mxu0 0
        %578 = vmatpush1.bf16.msra.mxu0 0
        %579 = vmatprep.subr.bf16.mxu0 0
        %580 = vmatpush1.bf16.msra.mxu0 0
        %581 = vmatprep.subr.bf16.mxu0 0
        %582 = vmatpush1.bf16.msra.mxu0 0
        %583 = vmatprep.subr.bf16.mxu0 0
        %584 = vmatpush1.bf16.msra.mxu0 0
        %585 = vmatprep.subr.bf16.mxu0 0
        %586 = vmatpush1.bf16.msra.mxu0 0
        %587 = vmatprep.subr.bf16.mxu0 0
        %588 = vmatpush1.bf16.msra.mxu0 0
        %589 = vmatprep.subr.bf16.mxu0 0
        %590 = vmatpush1.bf16.msra.mxu0 0
        %591 = vmatprep.subr.bf16.mxu0 0
        %592 = vmatpush1.bf16.msra.mxu0 0
        %593 = vmatprep.subr.bf16.mxu0 0
        %594 = vmatpush1.bf16.msra.mxu0 0
        %595 = vmatprep.subr.bf16.mxu0 0
        %596 = vmatpush1.bf16.msra.mxu0 0
        %597 = vmatprep.mubr.bf16.mxu0 0
        %598 = vmatmul.mubr.bf16.gmra.mrb[0].mxu0 %v234
        %v599 = vpop.f32.mrb[0].mxu0
        %v600 = vadd.f32 0.0, %v599
        %v601 = vpop.f32.mrb[0].mxu0
        %v602 = vpop.f32.mrb[0].mxu0
        %v603 = vadd.f32 0.0, %v602
        %v604 = vpop.f32.mrb[0].mxu0
        %605 = vdwg.mxu0
        %v606 = vld [vmem:[%s2] sm:$0xf]
        %v607 = vld [vmem:[%s2 + $0x4] sm:$0xf]
        %v608 = vpack.c.bf16 %v274, %v271
        %v609 = vpack.c.bf16 %v321, %v318
        %v610 = vpack.c.bf16 %v368, %v365
        %v611 = vpack.c.bf16 %v415, %v412
        %v612 = vpack.c.bf16 %v462, %v459
        %v613 = vpack.c.bf16 %v509, %v506
        %v614 = vpack.c.bf16 %v556, %v553
        %v615 = vpack.c.bf16 %v603, %v600
        %v618 = vunpack.c.l.b16 %v606
        %v619 = vunpack.c.l.b16 %v607
        %v620 = vpack.c.b16 %v619, %v618
        %v623 = vsel %vm232, %v608, 0
        %625 = vmatprep.subr.bf16.mxu0 0
        %626 = vmatpush1.bf16.msra.mxu0 %v620
        %627 = vmatprep.subr.bf16.mxu0 0
        %628 = vmatpush1.bf16.msra.mxu0 0
        %629 = vmatprep.subr.bf16.mxu0 0
        %630 = vmatpush1.bf16.msra.mxu0 0
        %631 = vmatprep.subr.bf16.mxu0 0
        %632 = vmatpush1.bf16.msra.mxu0 0
        %633 = vmatprep.subr.bf16.mxu0 0
        %634 = vmatpush1.bf16.msra.mxu0 0
        %635 = vmatprep.subr.bf16.mxu0 0
        %636 = vmatpush1.bf16.msra.mxu0 0
        %637 = vmatprep.subr.bf16.mxu0 0
        %638 = vmatpush1.bf16.msra.mxu0 0
        %639 = vmatprep.subr.bf16.mxu0 0
        %640 = vmatpush1.bf16.msra.mxu0 0
        %641 = vmatprep.subr.bf16.mxu0 0
        %642 = vmatpush1.bf16.msra.mxu0 0
        %643 = vmatprep.subr.bf16.mxu0 0
        %644 = vmatpush1.bf16.msra.mxu0 0
        %645 = vmatprep.subr.bf16.mxu0 0
        %646 = vmatpush1.bf16.msra.mxu0 0
        %647 = vmatprep.subr.bf16.mxu0 0
        %648 = vmatpush1.bf16.msra.mxu0 0
        %649 = vmatprep.subr.bf16.mxu0 0
        %650 = vmatpush1.bf16.msra.mxu0 0
        %651 = vmatprep.subr.bf16.mxu0 0
        %652 = vmatpush1.bf16.msra.mxu0 0
        %653 = vmatprep.subr.bf16.mxu0 0
        %654 = vmatpush1.bf16.msra.mxu0 0
        %655 = vmatprep.subr.bf16.mxu0 0
        %656 = vmatpush1.bf16.msra.mxu0 0
        %657 = vmatprep.mubr.bf16.mxu0 0
        %658 = vmatmul.mubr.bf16.gmra.mrb[0].mxu0 %v623
        %v659 = vpop.f32.mrb[0].mxu0
        %v660 = vadd.f32 0.0, %v659
        %v661 = vpop.f32.mrb[0].mxu0
        %v662 = vpop.f32.mrb[0].mxu0
        %v663 = vadd.f32 0.0, %v662
        %v664 = vpop.f32.mrb[0].mxu0
        %665 = vdwg.mxu0
        %v667 = vsel %vm232, %v609, 0
        %669 = vmatprep.subr.bf16.mxu0 0
        %670 = vmatpush1.bf16.msra.mxu0 %v620
        %671 = vmatprep.subr.bf16.mxu0 0
        %672 = vmatpush1.bf16.msra.mxu0 0
        %673 = vmatprep.subr.bf16.mxu0 0
        %674 = vmatpush1.bf16.msra.mxu0 0
        %675 = vmatprep.subr.bf16.mxu0 0
        %676 = vmatpush1.bf16.msra.mxu0 0
        %677 = vmatprep.subr.bf16.mxu0 0
        %678 = vmatpush1.bf16.msra.mxu0 0
        %679 = vmatprep.subr.bf16.mxu0 0
        %680 = vmatpush1.bf16.msra.mxu0 0
        %681 = vmatprep.subr.bf16.mxu0 0
        %682 = vmatpush1.bf16.msra.mxu0 0
        %683 = vmatprep.subr.bf16.mxu0 0
        %684 = vmatpush1.bf16.msra.mxu0 0
        %685 = vmatprep.subr.bf16.mxu0 0
        %686 = vmatpush1.bf16.msra.mxu0 0
        %687 = vmatprep.subr.bf16.mxu0 0
        %688 = vmatpush1.bf16.msra.mxu0 0
        %689 = vmatprep.subr.bf16.mxu0 0
        %690 = vmatpush1.bf16.msra.mxu0 0
        %691 = vmatprep.subr.bf16.mxu0 0
        %692 = vmatpush1.bf16.msra.mxu0 0
        %693 = vmatprep.subr.bf16.mxu0 0
        %694 = vmatpush1.bf16.msra.mxu0 0
        %695 = vmatprep.subr.bf16.mxu0 0
        %696 = vmatpush1.bf16.msra.mxu0 0
        %697 = vmatprep.subr.bf16.mxu0 0
        %698 = vmatpush1.bf16.msra.mxu0 0
        %699 = vmatprep.subr.bf16.mxu0 0
        %700 = vmatpush1.bf16.msra.mxu0 0
        %701 = vmatprep.mubr.bf16.mxu0 0
        %702 = vmatmul.mubr.bf16.gmra.mrb[0].mxu0 %v667
        %v703 = vpop.f32.mrb[0].mxu0
        %v704 = vadd.f32 0.0, %v703
        %v705 = vpop.f32.mrb[0].mxu0
        %v706 = vpop.f32.mrb[0].mxu0
        %v707 = vadd.f32 0.0, %v706
        %v708 = vpop.f32.mrb[0].mxu0
        %709 = vdwg.mxu0
        %v711 = vsel %vm232, %v610, 0
        %713 = vmatprep.subr.bf16.mxu0 0
        %714 = vmatpush1.bf16.msra.mxu0 %v620
        %715 = vmatprep.subr.bf16.mxu0 0
        %716 = vmatpush1.bf16.msra.mxu0 0
        %717 = vmatprep.subr.bf16.mxu0 0
        %718 = vmatpush1.bf16.msra.mxu0 0
        %719 = vmatprep.subr.bf16.mxu0 0
        %720 = vmatpush1.bf16.msra.mxu0 0
        %721 = vmatprep.subr.bf16.mxu0 0
        %722 = vmatpush1.bf16.msra.mxu0 0
        %723 = vmatprep.subr.bf16.mxu0 0
        %724 = vmatpush1.bf16.msra.mxu0 0
        %725 = vmatprep.subr.bf16.mxu0 0
        %726 = vmatpush1.bf16.msra.mxu0 0
        %727 = vmatprep.subr.bf16.mxu0 0
        %728 = vmatpush1.bf16.msra.mxu0 0
        %729 = vmatprep.subr.bf16.mxu0 0
        %730 = vmatpush1.bf16.msra.mxu0 0
        %731 = vmatprep.subr.bf16.mxu0 0
        %732 = vmatpush1.bf16.msra.mxu0 0
        %733 = vmatprep.subr.bf16.mxu0 0
        %734 = vmatpush1.bf16.msra.mxu0 0
        %735 = vmatprep.subr.bf16.mxu0 0
        %736 = vmatpush1.bf16.msra.mxu0 0
        %737 = vmatprep.subr.bf16.mxu0 0
        %738 = vmatpush1.bf16.msra.mxu0 0
        %739 = vmatprep.subr.bf16.mxu0 0
        %740 = vmatpush1.bf16.msra.mxu0 0
        %741 = vmatprep.subr.bf16.mxu0 0
        %742 = vmatpush1.bf16.msra.mxu0 0
        %743 = vmatprep.subr.bf16.mxu0 0
        %744 = vmatpush1.bf16.msra.mxu0 0
        %745 = vmatprep.mubr.bf16.mxu0 0
        %746 = vmatmul.mubr.bf16.gmra.mrb[0].mxu0 %v711
        %v747 = vpop.f32.mrb[0].mxu0
        %v748 = vadd.f32 0.0, %v747
        %v749 = vpop.f32.mrb[0].mxu0
        %v750 = vpop.f32.mrb[0].mxu0
        %v751 = vadd.f32 0.0, %v750
        %v752 = vpop.f32.mrb[0].mxu0
        %753 = vdwg.mxu0
        %v755 = vsel %vm232, %v611, 0
        %757 = vmatprep.subr.bf16.mxu0 0
        %758 = vmatpush1.bf16.msra.mxu0 %v620
        %759 = vmatprep.subr.bf16.mxu0 0
        %760 = vmatpush1.bf16.msra.mxu0 0
        %761 = vmatprep.subr.bf16.mxu0 0
        %762 = vmatpush1.bf16.msra.mxu0 0
        %763 = vmatprep.subr.bf16.mxu0 0
        %764 = vmatpush1.bf16.msra.mxu0 0
        %765 = vmatprep.subr.bf16.mxu0 0
        %766 = vmatpush1.bf16.msra.mxu0 0
        %767 = vmatprep.subr.bf16.mxu0 0
        %768 = vmatpush1.bf16.msra.mxu0 0
        %769 = vmatprep.subr.bf16.mxu0 0
        %770 = vmatpush1.bf16.msra.mxu0 0
        %771 = vmatprep.subr.bf16.mxu0 0
        %772 = vmatpush1.bf16.msra.mxu0 0
        %773 = vmatprep.subr.bf16.mxu0 0
        %774 = vmatpush1.bf16.msra.mxu0 0
        %775 = vmatprep.subr.bf16.mxu0 0
        %776 = vmatpush1.bf16.msra.mxu0 0
        %777 = vmatprep.subr.bf16.mxu0 0
        %778 = vmatpush1.bf16.msra.mxu0 0
        %779 = vmatprep.subr.bf16.mxu0 0
        %780 = vmatpush1.bf16.msra.mxu0 0
        %781 = vmatprep.subr.bf16.mxu0 0
        %782 = vmatpush1.bf16.msra.mxu0 0
        %783 = vmatprep.subr.bf16.mxu0 0
        %784 = vmatpush1.bf16.msra.mxu0 0
        %785 = vmatprep.subr.bf16.mxu0 0
        %786 = vmatpush1.bf16.msra.mxu0 0
        %787 = vmatprep.subr.bf16.mxu0 0
        %788 = vmatpush1.bf16.msra.mxu0 0
        %789 = vmatprep.mubr.bf16.mxu0 0
        %790 = vmatmul.mubr.bf16.gmra.mrb[0].mxu0 %v755
        %v791 = vpop.f32.mrb[0].mxu0
        %v792 = vadd.f32 0.0, %v791
        %v793 = vpop.f32.mrb[0].mxu0
        %v794 = vpop.f32.mrb[0].mxu0
        %v795 = vadd.f32 0.0, %v794
        %v796 = vpop.f32.mrb[0].mxu0
        %797 = vdwg.mxu0
        %v799 = vsel %vm232, %v612, 0
        %801 = vmatprep.subr.bf16.mxu0 0
        %802 = vmatpush1.bf16.msra.mxu0 %v620
        %803 = vmatprep.subr.bf16.mxu0 0
        %804 = vmatpush1.bf16.msra.mxu0 0
        %805 = vmatprep.subr.bf16.mxu0 0
        %806 = vmatpush1.bf16.msra.mxu0 0
        %807 = vmatprep.subr.bf16.mxu0 0
        %808 = vmatpush1.bf16.msra.mxu0 0
        %809 = vmatprep.subr.bf16.mxu0 0
        %810 = vmatpush1.bf16.msra.mxu0 0
        %811 = vmatprep.subr.bf16.mxu0 0
        %812 = vmatpush1.bf16.msra.mxu0 0
        %813 = vmatprep.subr.bf16.mxu0 0
        %814 = vmatpush1.bf16.msra.mxu0 0
        %815 = vmatprep.subr.bf16.mxu0 0
        %816 = vmatpush1.bf16.msra.mxu0 0
        %817 = vmatprep.subr.bf16.mxu0 0
        %818 = vmatpush1.bf16.msra.mxu0 0
        %819 = vmatprep.subr.bf16.mxu0 0
        %820 = vmatpush1.bf16.msra.mxu0 0
        %821 = vmatprep.subr.bf16.mxu0 0
        %822 = vmatpush1.bf16.msra.mxu0 0
        %823 = vmatprep.subr.bf16.mxu0 0
        %824 = vmatpush1.bf16.msra.mxu0 0
        %825 = vmatprep.subr.bf16.mxu0 0
        %826 = vmatpush1.bf16.msra.mxu0 0
        %827 = vmatprep.subr.bf16.mxu0 0
        %828 = vmatpush1.bf16.msra.mxu0 0
        %829 = vmatprep.subr.bf16.mxu0 0
        %830 = vmatpush1.bf16.msra.mxu0 0
        %831 = vmatprep.subr.bf16.mxu0 0
        %832 = vmatpush1.bf16.msra.mxu0 0
        %833 = vmatprep.mubr.bf16.mxu0 0
        %834 = vmatmul.mubr.bf16.gmra.mrb[0].mxu0 %v799
        %v835 = vpop.f32.mrb[0].mxu0
        %v836 = vadd.f32 0.0, %v835
        %v837 = vpop.f32.mrb[0].mxu0
        %v838 = vpop.f32.mrb[0].mxu0
        %v839 = vadd.f32 0.0, %v838
        %v840 = vpop.f32.mrb[0].mxu0
        %841 = vdwg.mxu0
        %v843 = vsel %vm232, %v613, 0
        %845 = vmatprep.subr.bf16.mxu0 0
        %846 = vmatpush1.bf16.msra.mxu0 %v620
        %847 = vmatprep.subr.bf16.mxu0 0
        %848 = vmatpush1.bf16.msra.mxu0 0
        %849 = vmatprep.subr.bf16.mxu0 0
        %850 = vmatpush1.bf16.msra.mxu0 0
        %851 = vmatprep.subr.bf16.mxu0 0
        %852 = vmatpush1.bf16.msra.mxu0 0
        %853 = vmatprep.subr.bf16.mxu0 0
        %854 = vmatpush1.bf16.msra.mxu0 0
        %855 = vmatprep.subr.bf16.mxu0 0
        %856 = vmatpush1.bf16.msra.mxu0 0
        %857 = vmatprep.subr.bf16.mxu0 0
        %858 = vmatpush1.bf16.msra.mxu0 0
        %859 = vmatprep.subr.bf16.mxu0 0
        %860 = vmatpush1.bf16.msra.mxu0 0
        %861 = vmatprep.subr.bf16.mxu0 0
        %862 = vmatpush1.bf16.msra.mxu0 0
        %863 = vmatprep.subr.bf16.mxu0 0
        %864 = vmatpush1.bf16.msra.mxu0 0
        %865 = vmatprep.subr.bf16.mxu0 0
        %866 = vmatpush1.bf16.msra.mxu0 0
        %867 = vmatprep.subr.bf16.mxu0 0
        %868 = vmatpush1.bf16.msra.mxu0 0
        %869 = vmatprep.subr.bf16.mxu0 0
        %870 = vmatpush1.bf16.msra.mxu0 0
        %871 = vmatprep.subr.bf16.mxu0 0
        %872 = vmatpush1.bf16.msra.mxu0 0
        %873 = vmatprep.subr.bf16.mxu0 0
        %874 = vmatpush1.bf16.msra.mxu0 0
        %875 = vmatprep.subr.bf16.mxu0 0
        %876 = vmatpush1.bf16.msra.mxu0 0
        %877 = vmatprep.mubr.bf16.mxu0 0
        %878 = vmatmul.mubr.bf16.gmra.mrb[0].mxu0 %v843
        %v879 = vpop.f32.mrb[0].mxu0
        %v880 = vadd.f32 0.0, %v879
        %v881 = vpop.f32.mrb[0].mxu0
        %v882 = vpop.f32.mrb[0].mxu0
        %v883 = vadd.f32 0.0, %v882
        %v884 = vpop.f32.mrb[0].mxu0
        %885 = vdwg.mxu0
        %v887 = vsel %vm232, %v614, 0
        %889 = vmatprep.subr.bf16.mxu0 0
        %890 = vmatpush1.bf16.msra.mxu0 %v620
        %891 = vmatprep.subr.bf16.mxu0 0
        %892 = vmatpush1.bf16.msra.mxu0 0
        %893 = vmatprep.subr.bf16.mxu0 0
        %894 = vmatpush1.bf16.msra.mxu0 0
        %895 = vmatprep.subr.bf16.mxu0 0
        %896 = vmatpush1.bf16.msra.mxu0 0
        %897 = vmatprep.subr.bf16.mxu0 0
        %898 = vmatpush1.bf16.msra.mxu0 0
        %899 = vmatprep.subr.bf16.mxu0 0
        %900 = vmatpush1.bf16.msra.mxu0 0
        %901 = vmatprep.subr.bf16.mxu0 0
        %902 = vmatpush1.bf16.msra.mxu0 0
        %903 = vmatprep.subr.bf16.mxu0 0
        %904 = vmatpush1.bf16.msra.mxu0 0
        %905 = vmatprep.subr.bf16.mxu0 0
        %906 = vmatpush1.bf16.msra.mxu0 0
        %907 = vmatprep.subr.bf16.mxu0 0
        %908 = vmatpush1.bf16.msra.mxu0 0
        %909 = vmatprep.subr.bf16.mxu0 0
        %910 = vmatpush1.bf16.msra.mxu0 0
        %911 = vmatprep.subr.bf16.mxu0 0
        %912 = vmatpush1.bf16.msra.mxu0 0
        %913 = vmatprep.subr.bf16.mxu0 0
        %914 = vmatpush1.bf16.msra.mxu0 0
        %915 = vmatprep.subr.bf16.mxu0 0
        %916 = vmatpush1.bf16.msra.mxu0 0
        %917 = vmatprep.subr.bf16.mxu0 0
        %918 = vmatpush1.bf16.msra.mxu0 0
        %919 = vmatprep.subr.bf16.mxu0 0
        %920 = vmatpush1.bf16.msra.mxu0 0
        %921 = vmatprep.mubr.bf16.mxu0 0
        %922 = vmatmul.mubr.bf16.gmra.mrb[0].mxu0 %v887
        %v923 = vpop.f32.mrb[0].mxu0
        %v924 = vadd.f32 0.0, %v923
        %v925 = vpop.f32.mrb[0].mxu0
        %v926 = vpop.f32.mrb[0].mxu0
        %v927 = vadd.f32 0.0, %v926
        %v928 = vpop.f32.mrb[0].mxu0
        %929 = vdwg.mxu0
        %v931 = vsel %vm232, %v615, 0
        %933 = vmatprep.subr.bf16.mxu0 0
        %934 = vmatpush1.bf16.msra.mxu0 %v620
        %935 = vmatprep.subr.bf16.mxu0 0
        %936 = vmatpush1.bf16.msra.mxu0 0
        %937 = vmatprep.subr.bf16.mxu0 0
        %938 = vmatpush1.bf16.msra.mxu0 0
        %939 = vmatprep.subr.bf16.mxu0 0
        %940 = vmatpush1.bf16.msra.mxu0 0
        %941 = vmatprep.subr.bf16.mxu0 0
        %942 = vmatpush1.bf16.msra.mxu0 0
        %943 = vmatprep.subr.bf16.mxu0 0
        %944 = vmatpush1.bf16.msra.mxu0 0
        %945 = vmatprep.subr.bf16.mxu0 0
        %946 = vmatpush1.bf16.msra.mxu0 0
        %947 = vmatprep.subr.bf16.mxu0 0
        %948 = vmatpush1.bf16.msra.mxu0 0
        %949 = vmatprep.subr.bf16.mxu0 0
        %950 = vmatpush1.bf16.msra.mxu0 0
        %951 = vmatprep.subr.bf16.mxu0 0
        %952 = vmatpush1.bf16.msra.mxu0 0
        %953 = vmatprep.subr.bf16.mxu0 0
        %954 = vmatpush1.bf16.msra.mxu0 0
        %955 = vmatprep.subr.bf16.mxu0 0
        %956 = vmatpush1.bf16.msra.mxu0 0
        %957 = vmatprep.subr.bf16.mxu0 0
        %958 = vmatpush1.bf16.msra.mxu0 0
        %959 = vmatprep.subr.bf16.mxu0 0
        %960 = vmatpush1.bf16.msra.mxu0 0
        %961 = vmatprep.subr.bf16.mxu0 0
        %962 = vmatpush1.bf16.msra.mxu0 0
        %963 = vmatprep.subr.bf16.mxu0 0
        %964 = vmatpush1.bf16.msra.mxu0 0
        %965 = vmatprep.mubr.bf16.mxu0 0
        %966 = vmatmul.mubr.bf16.gmra.mrb[0].mxu0 %v931
        %v967 = vpop.f32.mrb[0].mxu0
        %v968 = vadd.f32 0.0, %v967
        %v969 = vpop.f32.mrb[0].mxu0
        %v970 = vpop.f32.mrb[0].mxu0
        %v971 = vadd.f32 0.0, %v970
        %v972 = vpop.f32.mrb[0].mxu0
        %973 = vdwg.mxu0
        %v974 = vpack.c.bf16 %v663, %v660
        %v975 = vpack.c.bf16 %v707, %v704
        %v976 = vpack.c.bf16 %v751, %v748
        %v977 = vpack.c.bf16 %v795, %v792
        %v978 = vpack.c.bf16 %v839, %v836
        %v979 = vpack.c.bf16 %v883, %v880
        %v980 = vpack.c.bf16 %v927, %v924
        %v981 = vpack.c.bf16 %v971, %v968
        %v990 = vunpack.c.l.b16 %v974
        %v991 = vunpack.c.h.b16 %v974
        %v992 = vunpack.c.l.b16 %v975
        %v993 = vunpack.c.h.b16 %v975
        %v994 = vunpack.c.l.b16 %v976
        %v995 = vunpack.c.h.b16 %v976
        %v996 = vunpack.c.l.b16 %v977
        %v997 = vunpack.c.h.b16 %v977
        %v998 = vunpack.c.l.b16 %v978
        %v999 = vunpack.c.h.b16 %v978
        %v1000 = vunpack.c.l.b16 %v979
        %v1001 = vunpack.c.h.b16 %v979
        %v1002 = vunpack.c.l.b16 %v980
        %v1003 = vunpack.c.h.b16 %v980
        %v1004 = vunpack.c.l.b16 %v981
        %v1005 = vunpack.c.h.b16 %v981
        %v1006 = vpack.c.b16 %v990, %v990
        %v1007 = vpack.c.b16 %v991, %v991
        %v1008 = vpack.c.b16 %v992, %v992
        %v1009 = vpack.c.b16 %v993, %v993
        %v1010 = vpack.c.b16 %v994, %v994
        %v1011 = vpack.c.b16 %v995, %v995
        %v1012 = vpack.c.b16 %v996, %v996
        %v1013 = vpack.c.b16 %v997, %v997
        %v1014 = vpack.c.b16 %v998, %v998
        %v1015 = vpack.c.b16 %v999, %v999
        %v1016 = vpack.c.b16 %v1000, %v1000
        %v1017 = vpack.c.b16 %v1001, %v1001
        %v1018 = vpack.c.b16 %v1002, %v1002
        %v1019 = vpack.c.b16 %v1003, %v1003
        %v1020 = vpack.c.b16 %v1004, %v1004
        %v1021 = vpack.c.b16 %v1005, %v1005
        %vm1038 = vcmask 257024
        %1039 = vst.msk [vmem:[%s189] sm:$0xf] %vm1038, %v1006
        %1040 = vst.msk [vmem:[%s189 + $0x4] sm:$0xf] %vm1038, %v1007
        %1041 = vst.msk [vmem:[%s189 + $0x8] sm:$0xf] %vm1038, %v1008
        %1042 = vst.msk [vmem:[%s189 + $0xc] sm:$0xf] %vm1038, %v1009
        %1043 = vst.msk [vmem:[%s189 + $0x10] sm:$0xf] %vm1038, %v1010
        %1044 = vst.msk [vmem:[%s189 + $0x14] sm:$0xf] %vm1038, %v1011
        %1045 = vst.msk [vmem:[%s189 + $0x18] sm:$0xf] %vm1038, %v1012
        %1046 = vst.msk [vmem:[%s189 + $0x1c] sm:$0xf] %vm1038, %v1013
        %1047 = vst.msk [vmem:[%s189 + $0x20] sm:$0xf] %vm1038, %v1014
        %1048 = vst.msk [vmem:[%s189 + $0x24] sm:$0xf] %vm1038, %v1015
        %1049 = vst.msk [vmem:[%s189 + $0x28] sm:$0xf] %vm1038, %v1016
        %1050 = vst.msk [vmem:[%s189 + $0x2c] sm:$0xf] %vm1038, %v1017
        %1051 = vst.msk [vmem:[%s189 + $0x30] sm:$0xf] %vm1038, %v1018
        %1052 = vst.msk [vmem:[%s189 + $0x34] sm:$0xf] %vm1038, %v1019
        %1053 = vst.msk [vmem:[%s189 + $0x38] sm:$0xf] %vm1038, %v1020
        %1054 = vst.msk [vmem:[%s189 + $0x3c] sm:$0xf] %vm1038, %v1021
        %s1055 = sand.u32 %s109, 1
        %s1056 = sand.u32 %s109, 1
        %s1057 = smul.addr %s1056, 64
        %s1058 = scalar_lea.vmem [#allocation2], %s1057
        // Predicated region
        $region33: #{_lambda_.3} parent=31 // pred_check
          %p1059 = pneg %p119
        $region34: #{_lambda_.3} parent=31 // pred_check_branch
          %1061 = sbr.rel (%p1059) target = $region36
        $region35: #{_lambda_.3} parent=31 // pred_region
          %s1062 = smul.u32 2, %s19
          %s1063 = smul.addr %s18, 32
          %s1064 = sadd.s32 %s1062, %s1063
          %s1065 = smul.addr %s1064, 4
          %s1066 = scalar_lea.vmem %s3, %s1065
          // Predicated region
          $region37: #{_lambda_.3} parent=35 // pred_check
            _
          $region38: #{_lambda_.3} parent=35 // pred_check_branch
            %1068 = sbr.rel (0) target = $region40
          $region39: #{_lambda_.3} parent=35 // pred_region
            // Predicated region
            $region41: #{_lambda_.3} parent=39 // pred_check
              _
            $region42: #{_lambda_.3} parent=39 // pred_check_branch
              %1070 = sbr.rel target = $region44
            $region43: #{_lambda_.3} parent=39 // pred_region
              // Predicated region
              $region56: #{_lambda_.3} parent=43 // pred_check
                _
              $region57: #{_lambda_.3} parent=43 // pred_check_branch
                %1115 = sbr.rel (0) target = $region59
              $region58: #{_lambda_.3} parent=43 // pred_region
                loop: start=0, step=1, limit=1
                $region60: #{_lambda_.3} parent=58 // loop_pre_header
                  _
                $region61: #{_lambda_.3} parent=58 // loop_header
                  %s1117 = sphi 0, %s1121
                  %p1118 = scmp.ge.s32.totalorder %s1117, 1
                  %s1122 = sphi %s1058, %s1058
                  %s1123 = sphi %s1066, %s1066
                $region62: #{_lambda_.3} parent=58 // loop_header_branch
                  %1120 = sbr.rel (%p1118) target = $region66
                $region63: #{_lambda_.3} parent=58 // loop_body
                  _
                $region64: #{_lambda_.3} parent=58 // loop_footer
                  %s1121 = sadd.s32 1, %s1117
                $region65: #{_lambda_.3} parent=58 // loop_footer_branch
                  %1116 = sbr.rel target = $region61
                $region66: #{_lambda_.3} parent=58 // loop_exit
                  _
                loop: start=0, step=1, limit=1
                $region67: #{_lambda_.3} parent=58 // loop_pre_header
                  _
                $region68: #{_lambda_.3} parent=58 // loop_header
                  %s1126 = sphi 0, %s1130
                  %p1127 = scmp.ge.s32.totalorder %s1126, 1
                  %s1131 = sphi %s1058, %s1058
                  %s1132 = sphi %s1066, %s1066
                $region69: #{_lambda_.3} parent=58 // loop_header_branch
                  %1129 = sbr.rel (%p1127) target = $region73
                $region70: #{_lambda_.3} parent=58 // loop_body
                  %v1133 = vld [vmem:[%s1131] sm:$0xf]
                  %1134 = vst [vmem:[%s1132] sm:$0xf] %v1133
                  %v1135 = vld [vmem:[%s1131 + $0x4] sm:$0xf]
                  %1136 = vst [vmem:[%s1132 + $0x4] sm:$0xf] %v1135
                  %v1137 = vld [vmem:[%s1131 + $0x8] sm:$0xf]
                  %1138 = vst [vmem:[%s1132 + $0x10] sm:$0xf] %v1137
                  %v1139 = vld [vmem:[%s1131 + $0xc] sm:$0xf]
                  %1140 = vst [vmem:[%s1132 + $0x14] sm:$0xf] %v1139
                  %v1141 = vld [vmem:[%s1131 + $0x10] sm:$0xf]
                  %1142 = vst [vmem:[%s1132 + $0x20] sm:$0xf] %v1141
                  %v1143 = vld [vmem:[%s1131 + $0x14] sm:$0xf]
                  %1144 = vst [vmem:[%s1132 + $0x24] sm:$0xf] %v1143
                  %v1145 = vld [vmem:[%s1131 + $0x18] sm:$0xf]
                  %1146 = vst [vmem:[%s1132 + $0x30] sm:$0xf] %v1145
                  %v1147 = vld [vmem:[%s1131 + $0x1c] sm:$0xf]
                  %1148 = vst [vmem:[%s1132 + $0x34] sm:$0xf] %v1147
                  %v1149 = vld [vmem:[%s1131 + $0x20] sm:$0xf]
                  %1150 = vst [vmem:[%s1132 + $0x40] sm:$0xf] %v1149
                  %v1151 = vld [vmem:[%s1131 + $0x24] sm:$0xf]
                  %1152 = vst [vmem:[%s1132 + $0x44] sm:$0xf] %v1151
                  %v1153 = vld [vmem:[%s1131 + $0x28] sm:$0xf]
                  %1154 = vst [vmem:[%s1132 + $0x50] sm:$0xf] %v1153
                  %v1155 = vld [vmem:[%s1131 + $0x2c] sm:$0xf]
                  %1156 = vst [vmem:[%s1132 + $0x54] sm:$0xf] %v1155
                  %v1157 = vld [vmem:[%s1131 + $0x30] sm:$0xf]
                  %1158 = vst [vmem:[%s1132 + $0x60] sm:$0xf] %v1157
                  %v1159 = vld [vmem:[%s1131 + $0x34] sm:$0xf]
                  %1160 = vst [vmem:[%s1132 + $0x64] sm:$0xf] %v1159
                  %v1161 = vld [vmem:[%s1131 + $0x38] sm:$0xf]
                  %1162 = vst [vmem:[%s1132 + $0x70] sm:$0xf] %v1161
                  %v1163 = vld [vmem:[%s1131 + $0x3c] sm:$0xf]
                  %1164 = vst [vmem:[%s1132 + $0x74] sm:$0xf] %v1163
                $region71: #{_lambda_.3} parent=58 // loop_footer
                  %s1130 = sadd.s32 1, %s1126
                $region72: #{_lambda_.3} parent=58 // loop_footer_branch
                  %1125 = sbr.rel target = $region68
                $region73: #{_lambda_.3} parent=58 // loop_exit
                  _
              $region59: #{_lambda_.3} parent=43 // pred_fallthru
                _
            $region44: #{_lambda_.3} parent=39 // pred_fallthru
              _
            // Predicated region
            $region45: #{_lambda_.3} parent=39 // pred_check
              _
            $region46: #{_lambda_.3} parent=39 // pred_check_branch
              %1072 = sbr.rel (0) target = $region48
            $region47: #{_lambda_.3} parent=39 // pred_region
              loop: start=0, step=1, limit=1
              $region49: #{_lambda_.3} parent=47 // loop_pre_header
                _
              $region50: #{_lambda_.3} parent=47 // loop_header
                %s1075 = sphi 0, %s1079
                %p1076 = scmp.ge.s32.totalorder %s1075, 1
                %s1080 = sphi %s1058, %s1058
                %s1081 = sphi %s1066, %s1066
              $region51: #{_lambda_.3} parent=47 // loop_header_branch
                %1078 = sbr.rel (%p1076) target = $region55
              $region52: #{_lambda_.3} parent=47 // loop_body
                %v1082 = vld [vmem:[%s1080] sm:$0xf]
                %1083 = vst [vmem:[%s1081] sm:$0xf] %v1082
                %v1084 = vld [vmem:[%s1080 + $0x4] sm:$0xf]
                %1085 = vst [vmem:[%s1081 + $0x4] sm:$0xf] %v1084
                %v1086 = vld [vmem:[%s1080 + $0x8] sm:$0xf]
                %1087 = vst [vmem:[%s1081 + $0x10] sm:$0xf] %v1086
                %v1088 = vld [vmem:[%s1080 + $0xc] sm:$0xf]
                %1089 = vst [vmem:[%s1081 + $0x14] sm:$0xf] %v1088
                %v1090 = vld [vmem:[%s1080 + $0x10] sm:$0xf]
                %1091 = vst [vmem:[%s1081 + $0x20] sm:$0xf] %v1090
                %v1092 = vld [vmem:[%s1080 + $0x14] sm:$0xf]
                %1093 = vst [vmem:[%s1081 + $0x24] sm:$0xf] %v1092
                %v1094 = vld [vmem:[%s1080 + $0x18] sm:$0xf]
                %1095 = vst [vmem:[%s1081 + $0x30] sm:$0xf] %v1094
                %v1096 = vld [vmem:[%s1080 + $0x1c] sm:$0xf]
                %1097 = vst [vmem:[%s1081 + $0x34] sm:$0xf] %v1096
                %v1098 = vld [vmem:[%s1080 + $0x20] sm:$0xf]
                %1099 = vst [vmem:[%s1081 + $0x40] sm:$0xf] %v1098
                %v1100 = vld [vmem:[%s1080 + $0x24] sm:$0xf]
                %1101 = vst [vmem:[%s1081 + $0x44] sm:$0xf] %v1100
                %v1102 = vld [vmem:[%s1080 + $0x28] sm:$0xf]
                %1103 = vst [vmem:[%s1081 + $0x50] sm:$0xf] %v1102
                %v1104 = vld [vmem:[%s1080 + $0x2c] sm:$0xf]
                %1105 = vst [vmem:[%s1081 + $0x54] sm:$0xf] %v1104
                %v1106 = vld [vmem:[%s1080 + $0x30] sm:$0xf]
                %1107 = vst [vmem:[%s1081 + $0x60] sm:$0xf] %v1106
                %v1108 = vld [vmem:[%s1080 + $0x34] sm:$0xf]
                %1109 = vst [vmem:[%s1081 + $0x64] sm:$0xf] %v1108
                %v1110 = vld [vmem:[%s1080 + $0x38] sm:$0xf]
                %1111 = vst [vmem:[%s1081 + $0x70] sm:$0xf] %v1110
                %v1112 = vld [vmem:[%s1080 + $0x3c] sm:$0xf]
                %1113 = vst [vmem:[%s1081 + $0x74] sm:$0xf] %v1112
              $region53: #{_lambda_.3} parent=47 // loop_footer
                %s1079 = sadd.s32 1, %s1075
              $region54: #{_lambda_.3} parent=47 // loop_footer_branch
                %1074 = sbr.rel target = $region50
              $region55: #{_lambda_.3} parent=47 // loop_exit
                _
            $region48: #{_lambda_.3} parent=39 // pred_fallthru
              _
          $region40: #{_lambda_.3} parent=35 // pred_fallthru
            _
          %1165 = vnop
        $region36: #{_lambda_.3} parent=31 // pred_fallthru
          _
      $region32: #{_lambda_.3} parent=5 // pred_fallthru
        _
      %p1166 = scmp.le.s32.totalorder 2, %s9
      // Predicated region
      $region74: #{_lambda_.3} parent=5 // pred_check
        %p1167 = pneg %p1166
      $region75: #{_lambda_.3} parent=5 // pred_check_branch
        %1169 = sbr.rel (%p1167) target = $region77
      $region76: #{_lambda_.3} parent=5 // pred_region
        %s1170 = ssub.s32 %s9, 2
        // Predicated region
        $region78: #{_lambda_.3} parent=76 // pred_check
          %p1171 = pneg %p125
        $region79: #{_lambda_.3} parent=76 // pred_check_branch
          %1173 = sbr.rel (%p1171) target = $region81
        $region80: #{_lambda_.3} parent=76 // pred_region
          %s1174 = sand.u32 %s110, 1
          %s1175 = sand.u32 %s110, 1
          %s1176 = smul.addr %s1175, 64
          %s1177 = scalar_lea.vmem [#allocation2], %s1176
        $region81: #{_lambda_.3} parent=76 // pred_fallthru
          _
      $region77: #{_lambda_.3} parent=5 // pred_fallthru
        _
    $region6: #{_lambda_.3} parent=1 // loop_footer
      %s13 = sadd.s32 1, %s9
    $region7: #{_lambda_.3} parent=1 // loop_footer_branch
      %8 = sbr.rel target = $region3
    $region8: #{_lambda_.3} parent=1 // loop_exit
      _

// kernel: _lambda_.4
$region0: #{_lambda_.4}
  #allocation0 [shape = 'u32[]', space=smem, size = 0x4, offset = 0x4, fixed_abs, tag = 'smem constant byte address 0x4 - core index']
  #allocation1 [shape = 'u32[144,128]{1,0:T(1,128)}', space=vmem, size = 0x12000, scoped, tag = 'internal scratch']
  %s0 = inlined_call_operand.vmem [shape: f32[2,4,1024], index: 0, kind: input, shape index: {}]
  %s1 = inlined_call_operand.vmem [shape: bf16[2,8,1024], index: 1, kind: input, shape index: {}]
  %s2 = inlined_call_operand.vmem [shape: bf16[8,4], index: 2, kind: input, shape index: {}]
  %s3 = inlined_call_operand.vmem [shape: f32[4,1], index: 3, kind: input, shape index: {}]
  %s4 = inlined_call_operand.vmem [shape: f32[4,1], index: 4, kind: input, shape index: {}]
  %s5 = inlined_call_operand.vmem [shape: f32[8,1], index: 5, kind: input, shape index: {}]
  %s6 = inlined_call_operand.vmem [shape: f32[8,1], index: 6, kind: input, shape index: {}]
  %s7 = inlined_call_operand.vmem [shape: bf16[2,8,1024], index: 7, kind: output, shape index: {}]
  %s8 = sld [smem:[#allocation0]]
  $region61: #{_lambda_.4} parent=0
    _
  %s10 = ssub.s32 1, %s8
  %s11 = scalar_select 0, %s10, %s8
  loop: start=0, step=1, limit=6
  $region2: #{_lambda_.4} parent=0 // loop_pre_header
    _
  $region3: #{_lambda_.4} parent=0 // loop_header
    %s13 = sphi 0, %s17
    %p14 = scmp.ge.s32.totalorder %s13, 6
    %s20 = sphi 0, %s32
    %s21 = sphi 0, %s28
    %s22 = sphi 0, %s20
    %s23 = sphi 0, %s21
    %s24 = sphi 0, %s22
    %s25 = sphi 0, %s23
    %s37 = sphi 0, %s39
    %s40 = sphi 0, %s37
    %s41 = sphi 0, %s40
    %s57 = sphi 0, %s41
    %s65 = sphi 0, %s67
    %s68 = sphi 0, %s65
    %s69 = sphi 0, %s68
    %s85 = sphi 0, %s69
    %s89 = sphi 0, %s89
    %s91 = sphi 0, %s89
    %s92 = sphi 0, %s91
    %s106 = sphi 0, %s92
    %s110 = sphi 0, %s110
    %s112 = sphi 0, %s110
    %s113 = sphi 0, %s112
    %s127 = sphi 0, %s113
    %s131 = sphi 0, %s131
    %s133 = sphi 0, %s131
    %s134 = sphi 0, %s133
    %s148 = sphi 0, %s134
    %s152 = sphi 0, %s152
    %s154 = sphi 0, %s152
    %s155 = sphi 0, %s154
    %s169 = sphi 0, %s155
    %s173 = sphi 0, %s173
    %s175 = sphi 0, %s173
    %s176 = sphi 0, %s175
    %s190 = sphi 0, %s176
    %s198 = sphi 0, %s200
    %s201 = sphi 0, %s198
    %s202 = sphi 0, %s201
    %s218 = sphi 0, %s202
  $region4: #{_lambda_.4} parent=0 // loop_header_branch
    %16 = sbr.rel (%p14) target = $region8
  $region5: #{_lambda_.4} parent=0 // loop_body
    %s18 = ssub.s32 %s13, 1
    %s19 = ssub.s32 %s13, 2
    %s26 = sadd.s32 1, %s21
    %p27 = scmp.ge.s32.totalorder %s26, 2
    %s28 = scalar_select %p27, 0, %s26
    %s29 = sadd.s32 1, %s20
    %s30 = scalar_select %p27, %s29, %s20
    %p31 = scmp.ge.s32.totalorder %s30, 2
    %s32 = scalar_select %p31, 0, %s30
    %s33 = ssub.s32 %s20, %s32
    %s34 = ssub.s32 %s21, %s28
    %s35 = sor.u32 %s33, %s34
    %p36 = scmp.eq.s32.totalorder %s35, 0
    %s38 = sadd.s32 %s37, 1
    %s39 = scalar_select %p36, %s37, %s38
    %p42 = pneg %p36
    %p43 = scmp.eq.s32.totalorder %s13, 3
    %p44 = por %p42, %p43
    %p45 = scmp.ne.s32.totalorder %s37, %s40
    %p46 = scmp.eq.s32.totalorder %s13, 0
    %p47 = por %p45, %p46
    %p48 = scmp.ne.s32.totalorder %s37, %s40
    %p49 = scmp.eq.s32.totalorder %s18, 3
    %p50 = por %p48, %p49
    %p51 = scmp.ne.s32.totalorder %s40, %s41
    %p52 = scmp.eq.s32.totalorder %s18, 0
    %p53 = por %p51, %p52
    %p54 = scmp.ne.s32.totalorder %s40, %s41
    %p55 = scmp.eq.s32.totalorder %s19, 3
    %p56 = por %p54, %p55
    %p58 = scmp.ne.s32.totalorder %s41, %s57
    %p59 = scmp.eq.s32.totalorder %s19, 0
    %p60 = por %p58, %p59
    %s61 = ssub.s32 %s20, %s32
    %s62 = ssub.s32 %s21, %s28
    %s63 = sor.u32 %s61, %s62
    %p64 = scmp.eq.s32.totalorder %s63, 0
    %s66 = sadd.s32 %s65, 1
    %s67 = scalar_select %p64, %s65, %s66
    %p70 = pneg %p64
    %p71 = scmp.eq.s32.totalorder %s13, 3
    %p72 = por %p70, %p71
    %p73 = scmp.ne.s32.totalorder %s65, %s68
    %p74 = scmp.eq.s32.totalorder %s13, 0
    %p75 = por %p73, %p74
    %p76 = scmp.ne.s32.totalorder %s65, %s68
    %p77 = scmp.eq.s32.totalorder %s18, 3
    %p78 = por %p76, %p77
    %p79 = scmp.ne.s32.totalorder %s68, %s69
    %p80 = scmp.eq.s32.totalorder %s18, 0
    %p81 = por %p79, %p80
    %p82 = scmp.ne.s32.totalorder %s68, %s69
    %p83 = scmp.eq.s32.totalorder %s19, 3
    %p84 = por %p82, %p83
    %p86 = scmp.ne.s32.totalorder %s69, %s85
    %p87 = scmp.eq.s32.totalorder %s19, 0
    %p88 = por %p86, %p87
    %s90 = sadd.s32 %s89, 1
    %p93 = scmp.eq.s32.totalorder %s13, 3
    %p94 = scmp.ne.s32.totalorder %s89, %s91
    %p95 = scmp.eq.s32.totalorder %s13, 0
    %p96 = por %p94, %p95
    %p97 = scmp.ne.s32.totalorder %s89, %s91
    %p98 = scmp.eq.s32.totalorder %s18, 3
    %p99 = por %p97, %p98
    %p100 = scmp.ne.s32.totalorder %s91, %s92
    %p101 = scmp.eq.s32.totalorder %s18, 0
    %p102 = por %p100, %p101
    %p103 = scmp.ne.s32.totalorder %s91, %s92
    %p104 = scmp.eq.s32.totalorder %s19, 3
    %p105 = por %p103, %p104
    %p107 = scmp.ne.s32.totalorder %s92, %s106
    %p108 = scmp.eq.s32.totalorder %s19, 0
    %p109 = por %p107, %p108
    %s111 = sadd.s32 %s110, 1
    %p114 = scmp.eq.s32.totalorder %s13, 3
    %p115 = scmp.ne.s32.totalorder %s110, %s112
    %p116 = scmp.eq.s32.totalorder %s13, 0
    %p117 = por %p115, %p116
    %p118 = scmp.ne.s32.totalorder %s110, %s112
    %p119 = scmp.eq.s32.totalorder %s18, 3
    %p120 = por %p118, %p119
    %p121 = scmp.ne.s32.totalorder %s112, %s113
    %p122 = scmp.eq.s32.totalorder %s18, 0
    %p123 = por %p121, %p122
    %p124 = scmp.ne.s32.totalorder %s112, %s113
    %p125 = scmp.eq.s32.totalorder %s19, 3
    %p126 = por %p124, %p125
    %p128 = scmp.ne.s32.totalorder %s113, %s127
    %p129 = scmp.eq.s32.totalorder %s19, 0
    %p130 = por %p128, %p129
    %s132 = sadd.s32 %s131, 1
    %p135 = scmp.eq.s32.totalorder %s13, 3
    %p136 = scmp.ne.s32.totalorder %s131, %s133
    %p137 = scmp.eq.s32.totalorder %s13, 0
    %p138 = por %p136, %p137
    %p139 = scmp.ne.s32.totalorder %s131, %s133
    %p140 = scmp.eq.s32.totalorder %s18, 3
    %p141 = por %p139, %p140
    %p142 = scmp.ne.s32.totalorder %s133, %s134
    %p143 = scmp.eq.s32.totalorder %s18, 0
    %p144 = por %p142, %p143
    %p145 = scmp.ne.s32.totalorder %s133, %s134
    %p146 = scmp.eq.s32.totalorder %s19, 3
    %p147 = por %p145, %p146
    %p149 = scmp.ne.s32.totalorder %s134, %s148
    %p150 = scmp.eq.s32.totalorder %s19, 0
    %p151 = por %p149, %p150
    %s153 = sadd.s32 %s152, 1
    %p156 = scmp.eq.s32.totalorder %s13, 3
    %p157 = scmp.ne.s32.totalorder %s152, %s154
    %p158 = scmp.eq.s32.totalorder %s13, 0
    %p159 = por %p157, %p158
    %p160 = scmp.ne.s32.totalorder %s152, %s154
    %p161 = scmp.eq.s32.totalorder %s18, 3
    %p162 = por %p160, %p161
    %p163 = scmp.ne.s32.totalorder %s154, %s155
    %p164 = scmp.eq.s32.totalorder %s18, 0
    %p165 = por %p163, %p164
    %p166 = scmp.ne.s32.totalorder %s154, %s155
    %p167 = scmp.eq.s32.totalorder %s19, 3
    %p168 = por %p166, %p167
    %p170 = scmp.ne.s32.totalorder %s155, %s169
    %p171 = scmp.eq.s32.totalorder %s19, 0
    %p172 = por %p170, %p171
    %s174 = sadd.s32 %s173, 1
    %p177 = scmp.eq.s32.totalorder %s13, 3
    %p178 = scmp.ne.s32.totalorder %s173, %s175
    %p179 = scmp.eq.s32.totalorder %s13, 0
    %p180 = por %p178, %p179
    %p181 = scmp.ne.s32.totalorder %s173, %s175
    %p182 = scmp.eq.s32.totalorder %s18, 3
    %p183 = por %p181, %p182
    %p184 = scmp.ne.s32.totalorder %s175, %s176
    %p185 = scmp.eq.s32.totalorder %s18, 0
    %p186 = por %p184, %p185
    %p187 = scmp.ne.s32.totalorder %s175, %s176
    %p188 = scmp.eq.s32.totalorder %s19, 3
    %p189 = por %p187, %p188
    %p191 = scmp.ne.s32.totalorder %s176, %s190
    %p192 = scmp.eq.s32.totalorder %s19, 0
    %p193 = por %p191, %p192
    %s194 = ssub.s32 %s20, %s32
    %s195 = ssub.s32 %s21, %s28
    %s196 = sor.u32 %s194, %s195
    %p197 = scmp.eq.s32.totalorder %s196, 0
    %s199 = sadd.s32 %s198, 1
    %s200 = scalar_select %p197, %s198, %s199
    %p203 = pneg %p197
    %p204 = scmp.eq.s32.totalorder %s13, 3
    %p205 = por %p203, %p204
    %p206 = scmp.ne.s32.totalorder %s198, %s201
    %p207 = scmp.eq.s32.totalorder %s13, 0
    %p208 = por %p206, %p207
    %p209 = scmp.ne.s32.totalorder %s198, %s201
    %p210 = scmp.eq.s32.totalorder %s18, 3
    %p211 = por %p209, %p210
    %p212 = scmp.ne.s32.totalorder %s201, %s202
    %p213 = scmp.eq.s32.totalorder %s18, 0
    %p214 = por %p212, %p213
    %p215 = scmp.ne.s32.totalorder %s201, %s202
    %p216 = scmp.eq.s32.totalorder %s19, 3
    %p217 = por %p215, %p216
    %p219 = scmp.ne.s32.totalorder %s202, %s218
    %p220 = scmp.eq.s32.totalorder %s19, 0
    %p221 = por %p219, %p220
    %p222 = scmp.le.s32.totalorder 1, %s13
    %p223 = scmp.lt.s32.totalorder %s13, 5
    %p224 = pnand %p222, %p223
    %p225 = pneg %p224
    // Predicated region
    $region9: #{_lambda_.4} parent=5 // pred_check
      _
    $region10: #{_lambda_.4} parent=5 // pred_check_branch
      %227 = sbr.rel (%p224) target = $region12
    $region11: #{_lambda_.4} parent=5 // pred_region
      %s228 = ssub.s32 %s13, 1
      // Predicated region
      $region13: #{_lambda_.4} parent=11 // pred_check
        %p229 = pneg %p102
      $region14: #{_lambda_.4} parent=11 // pred_check_branch
        %231 = sbr.rel (%p229) target = $region16
      $region15: #{_lambda_.4} parent=11 // pred_region
        _
      $region16: #{_lambda_.4} parent=11 // pred_fallthru
        _
      // Predicated region
      $region17: #{_lambda_.4} parent=11 // pred_check
        %p232 = pneg %p123
      $region18: #{_lambda_.4} parent=11 // pred_check_branch
        %234 = sbr.rel (%p232) target = $region20
      $region19: #{_lambda_.4} parent=11 // pred_region
        _
      $region20: #{_lambda_.4} parent=11 // pred_fallthru
        _
      // Predicated region
      $region21: #{_lambda_.4} parent=11 // pred_check
        %p235 = pneg %p144
      $region22: #{_lambda_.4} parent=11 // pred_check_branch
        %237 = sbr.rel (%p235) target = $region24
      $region23: #{_lambda_.4} parent=11 // pred_region
        _
      $region24: #{_lambda_.4} parent=11 // pred_fallthru
        _
      // Predicated region
      $region25: #{_lambda_.4} parent=11 // pred_check
        %p238 = pneg %p165
      $region26: #{_lambda_.4} parent=11 // pred_check_branch
        %240 = sbr.rel (%p238) target = $region28
      $region27: #{_lambda_.4} parent=11 // pred_region
        _
      $region28: #{_lambda_.4} parent=11 // pred_fallthru
        _
      // Predicated region
      $region29: #{_lambda_.4} parent=11 // pred_check
        %p241 = pneg %p186
      $region30: #{_lambda_.4} parent=11 // pred_check_branch
        %243 = sbr.rel (%p241) target = $region32
      $region31: #{_lambda_.4} parent=11 // pred_region
        _
      $region32: #{_lambda_.4} parent=11 // pred_fallthru
        _
    $region12: #{_lambda_.4} parent=5 // pred_fallthru
      _
    %p244 = scmp.lt.s32.totalorder %s13, 4
    // Predicated region
    $region33: #{_lambda_.4} parent=5 // pred_check
      %p245 = pneg %p244
    $region34: #{_lambda_.4} parent=5 // pred_check_branch
      %247 = sbr.rel (%p245) target = $region36
    $region35: #{_lambda_.4} parent=5 // pred_region
      // Predicated region
      $region37: #{_lambda_.4} parent=35 // pred_check
        %p248 = pneg %p47
      $region38: #{_lambda_.4} parent=35 // pred_check_branch
        %250 = sbr.rel (%p248) target = $region40
      $region39: #{_lambda_.4} parent=35 // pred_region
        %s251 = smul.u32 4, %s21
        %p252 = scmp.lt.s32.totalorder %s20, 1
        %s253 = scalar_select %p252, %s20, 1
        %p254 = scmp.lt.s32.totalorder %s251, 7
        %s255 = scalar_select %p254, %s251, 7
        %s256 = smul.addr %s253, 8
        %s257 = sadd.s32 %s255, %s256
        %s258 = smul.addr %s257, 4
        %s259 = scalar_lea.vmem %s0, %s258
        %s260 = smul.u32 4, %s21
      $region40: #{_lambda_.4} parent=35 // pred_fallthru
        _
      // Predicated region
      $region41: #{_lambda_.4} parent=35 // pred_check
        %p261 = pneg %p75
      $region42: #{_lambda_.4} parent=35 // pred_check_branch
        %263 = sbr.rel (%p261) target = $region44
      $region43: #{_lambda_.4} parent=35 // pred_region
        %s264 = smul.u32 4, %s21
        %p265 = scmp.lt.s32.totalorder %s20, 1
        %s266 = scalar_select %p265, %s20, 1
        %p267 = scmp.lt.s32.totalorder %s264, 7
        %s268 = scalar_select %p267, %s264, 7
        %s269 = smul.addr %s266, 8
        %s270 = sadd.s32 %s268, %s269
        %s271 = smul.addr %s270, 4
        %s272 = scalar_lea.vmem %s1, %s271
        %s273 = smul.u32 4, %s21
      $region44: #{_lambda_.4} parent=35 // pred_fallthru
        _
    $region36: #{_lambda_.4} parent=5 // pred_fallthru
      _
    %p274 = scmp.le.s32.totalorder 1, %s13
    %p275 = scmp.lt.s32.totalorder %s13, 5
    %p276 = pnand %p274, %p275
    %p277 = pneg %p276
    // Predicated region
    $region45: #{_lambda_.4} parent=5 // pred_check
      _
    $region46: #{_lambda_.4} parent=5 // pred_check_branch
      %279 = sbr.rel (%p276) target = $region48
    $region47: #{_lambda_.4} parent=5 // pred_region
      %s280 = ssub.s32 %s13, 1
      %s281 = smul.u32 4, %s23
      %p282 = scmp.lt.s32.totalorder %s22, 1
      %s283 = scalar_select %p282, %s22, 1
      %p284 = scmp.lt.s32.totalorder %s281, 7
      %s285 = scalar_select %p284, %s281, 7
      %s286 = smul.addr %s283, 8
      %s287 = sadd.s32 %s285, %s286
      %s288 = smul.addr %s287, 4
      %s289 = scalar_lea.vmem %s0, %s288
      %p290 = pneg %p53
      %p291 = pneg %p50
      %s292 = smul.u32 4, %s23
      %p293 = scmp.lt.s32.totalorder %s22, 1
      %s294 = scalar_select %p293, %s22, 1
      %p295 = scmp.lt.s32.totalorder %s292, 7
      %s296 = scalar_select %p295, %s292, 7
      %s297 = smul.addr %s294, 8
      %s298 = sadd.s32 %s296, %s297
      %s299 = smul.addr %s298, 4
      %s300 = scalar_lea.vmem %s1, %s299
      %p301 = pneg %p81
      %p302 = pneg %p78
      %p303 = pneg %p102
      %p304 = pneg %p99
      %p305 = pneg %p123
      %p306 = pneg %p120
      %p307 = pneg %p144
      %p308 = pneg %p141
      %p309 = pneg %p165
      %p310 = pneg %p162
      %p311 = pneg %p186
      %p312 = pneg %p183
      %p313 = pneg %p214
      %p314 = pneg %p211
      %s315 = smul.u32 4, %s23
      %p316 = scmp.lt.s32.totalorder %s22, 1
      %s317 = scalar_select %p316, %s22, 1
      %p318 = scmp.lt.s32.totalorder %s315, 7
      %s319 = scalar_select %p318, %s315, 7
      %s320 = smul.addr %s317, 8
      %s321 = sadd.s32 %s319, %s320
      %s322 = smul.addr %s321, 4
      %s323 = scalar_lea.vmem %s7, %s322
      %s324 = smul.u32 4, %s23
      %p325 = scmp.lt.s32.totalorder %s22, 1
      %s326 = scalar_select %p325, %s22, 1
      %p327 = scmp.lt.s32.totalorder %s324, 7
      %s328 = scalar_select %p327, %s324, 7
      %s329 = smul.addr %s326, 8
      %s330 = sadd.s32 %s328, %s329
      %s331 = smul.addr %s330, 4
      %s332 = scalar_lea.vmem %s0, %s331
      %s333 = smul.u32 4, %s23
      %s334 = smul.u32 4, %s23
      %p335 = scmp.lt.s32.totalorder %s22, 1
      %s336 = scalar_select %p335, %s22, 1
      %p337 = scmp.lt.s32.totalorder %s334, 7
      %s338 = scalar_select %p337, %s334, 7
      %s339 = smul.addr %s336, 8
      %s340 = sadd.s32 %s338, %s339
      %s341 = smul.addr %s340, 4
      %s342 = scalar_lea.vmem %s1, %s341
      %s343 = smul.u32 4, %s23
      %s344 = smul.u32 4, %s23
      %p345 = scmp.lt.s32.totalorder %s22, 1
      %s346 = scalar_select %p345, %s22, 1
      %p347 = scmp.lt.s32.totalorder %s344, 7
      %s348 = scalar_select %p347, %s344, 7
      %s349 = smul.addr %s346, 8
      %s350 = sadd.s32 %s348, %s349
      %s351 = smul.addr %s350, 4
      %s352 = scalar_lea.vmem %s7, %s351
      %s353 = smul.u32 4, %s23
      %v355 = vld [vmem:[%s332] sm:$0xff]
      %v356 = vld [vmem:[%s332 + $0x8] sm:$0xff]
      %v357 = vld [vmem:[%s3] sm:$0xf]
      %359 = vset.pattern.permute.xlu0 0
      %360 = vperm.xlu0 %359, %v357
      %v361 = vpop.permute.xlu0 %360
      %v363 = vunpack.c.l.s4 839922192
      %v364 = vunpack.c.0.s8 %v363
      %v365 = vlaneseq
      %v366 = vshrl.u32 %v365, 7
      %v367 = vsub.s32 %v364, %v366
      %v368 = vrot.slane %v361, %v367
      %v370 = vmul.f32 %v355, %v368
      %v371 = vmul.f32 %v356, %v368
      %v372 = vld [vmem:[%s4] sm:$0xf]
      %374 = vset.pattern.permute.xlu0 0
      %375 = vperm.xlu0 %374, %v372
      %v376 = vpop.permute.xlu0 %375
      %v378 = vunpack.c.l.s4 839922192
      %v379 = vunpack.c.0.s8 %v378
      %v380 = vlaneseq
      %v381 = vshrl.u32 %v380, 7
      %v382 = vsub.s32 %v379, %v381
      %v383 = vrot.slane %v376, %v382
      %v385 = vadd.f32 %v370, %v383
      %v386 = vadd.f32 %v371, %v383
      %v387 = vmax.f32 %v385, 0.0
      %v388 = vmax.f32 %v386, 0.0
      %v389 = vld [vmem:[%s2] sm:$0xf]
      %v392 = vcombine.high %v387, %v387
      %v393 = vcombine.high %v388, %v388
      %v396 = vpack.c.bf16 %v387, %v387
      %v397 = vpack.c.bf16 %v392, %v392
      %v398 = vpack.c.bf16 %v388, %v388
      %v399 = vpack.c.bf16 %v393, %v393
      %vm400 = vcmask 31744
      %v402 = vsel %vm400, %v389, 0
      %vm404 = vcmask 1041408
      %v406 = vsel %vm404, %v396, 0
      %v409 = vsel %vm404, %v397, 0
      %v412 = vsel %vm404, %v398, 0
      %v415 = vsel %vm404, %v399, 0
      %417 = vmatprep.subr.bf16.mxu0 %v409
      %418 = vmatpush1.bf16.msra.mxu0 %v406
      %419 = vmatprep.subr.bf16.mxu0 0
      %420 = vmatpush1.bf16.msra.mxu0 0
      %421 = vmatprep.subr.bf16.mxu0 0
      %422 = vmatpush1.bf16.msra.mxu0 0
      %423 = vmatprep.subr.bf16.mxu0 0
      %424 = vmatpush1.bf16.msra.mxu0 0
      %425 = vmatprep.subr.bf16.mxu0 0
      %426 = vmatpush1.bf16.msra.mxu0 0
      %427 = vmatprep.subr.bf16.mxu0 0
      %428 = vmatpush1.bf16.msra.mxu0 0
      %429 = vmatprep.subr.bf16.mxu0 0
      %430 = vmatpush1.bf16.msra.mxu0 0
      %431 = vmatprep.subr.bf16.mxu0 0
      %432 = vmatpush1.bf16.msra.mxu0 0
      %433 = vmatprep.subr.bf16.mxu0 0
      %434 = vmatpush1.bf16.msra.mxu0 0
      %435 = vmatprep.subr.bf16.mxu0 0
      %436 = vmatpush1.bf16.msra.mxu0 0
      %437 = vmatprep.subr.bf16.mxu0 0
      %438 = vmatpush1.bf16.msra.mxu0 0
      %439 = vmatprep.subr.bf16.mxu0 0
      %440 = vmatpush1.bf16.msra.mxu0 0
      %441 = vmatprep.subr.bf16.mxu0 0
      %442 = vmatpush1.bf16.msra.mxu0 0
      %443 = vmatprep.subr.bf16.mxu0 0
      %444 = vmatpush1.bf16.msra.mxu0 0
      %445 = vmatprep.subr.bf16.mxu0 0
      %446 = vmatpush1.bf16.msra.mxu0 0
      %447 = vmatprep.subr.bf16.mxu0 0
      %448 = vmatpush1.bf16.msra.mxu0 0
      %449 = vmatprep.mubr.bf16.mxu0 0
      %450 = vmatmul.mubr.bf16.gmra.mrb[0].mxu0 %v402
      %v451 = vpop.f32.mrb[0].mxu0
      %v452 = vadd.f32 0.0, %v451
      %v453 = vpop.f32.mrb[0].mxu0
      %v454 = vadd.f32 0.0, %v453
      %v455 = vpop.f32.mrb[0].mxu0
      %v456 = vpop.f32.mrb[0].mxu0
      %457 = vdwg.mxu0
      %458 = vmatprep.subr.bf16.mxu0 %v415
      %459 = vmatpush1.bf16.msra.mxu0 %v412
      %460 = vmatprep.subr.bf16.mxu0 0
      %461 = vmatpush1.bf16.msra.mxu0 0
      %462 = vmatprep.subr.bf16.mxu0 0
      %463 = vmatpush1.bf16.msra.mxu0 0
      %464 = vmatprep.subr.bf16.mxu0 0
      %465 = vmatpush1.bf16.msra.mxu0 0
      %466 = vmatprep.subr.bf16.mxu0 0
      %467 = vmatpush1.bf16.msra.mxu0 0
      %468 = vmatprep.subr.bf16.mxu0 0
      %469 = vmatpush1.bf16.msra.mxu0 0
      %470 = vmatprep.subr.bf16.mxu0 0
      %471 = vmatpush1.bf16.msra.mxu0 0
      %472 = vmatprep.subr.bf16.mxu0 0
      %473 = vmatpush1.bf16.msra.mxu0 0
      %474 = vmatprep.subr.bf16.mxu0 0
      %475 = vmatpush1.bf16.msra.mxu0 0
      %476 = vmatprep.subr.bf16.mxu0 0
      %477 = vmatpush1.bf16.msra.mxu0 0
      %478 = vmatprep.subr.bf16.mxu0 0
      %479 = vmatpush1.bf16.msra.mxu0 0
      %480 = vmatprep.subr.bf16.mxu0 0
      %481 = vmatpush1.bf16.msra.mxu0 0
      %482 = vmatprep.subr.bf16.mxu0 0
      %483 = vmatpush1.bf16.msra.mxu0 0
      %484 = vmatprep.subr.bf16.mxu0 0
      %485 = vmatpush1.bf16.msra.mxu0 0
      %486 = vmatprep.subr.bf16.mxu0 0
      %487 = vmatpush1.bf16.msra.mxu0 0
      %488 = vmatprep.subr.bf16.mxu0 0
      %489 = vmatpush1.bf16.msra.mxu0 0
      %490 = vmatprep.mubr.bf16.mxu0 0
      %491 = vmatmul.mubr.bf16.gmra.mrb[0].mxu0 %v402
      %v492 = vpop.f32.mrb[0].mxu0
      %v493 = vadd.f32 0.0, %v492
      %v494 = vpop.f32.mrb[0].mxu0
      %v495 = vadd.f32 0.0, %v494
      %v496 = vpop.f32.mrb[0].mxu0
      %v497 = vpop.f32.mrb[0].mxu0
      %498 = vdwg.mxu0
      %v499 = vld [vmem:[%s342] sm:$0xff]
      %v500 = vld [vmem:[%s342 + $0x8] sm:$0xff]
      %v501 = vunpack.c.l.bf16 %v499
      %v502 = vunpack.c.h.bf16 %v499
      %v503 = vunpack.c.l.bf16 %v500
      %v504 = vunpack.c.h.bf16 %v500
      %v505 = vadd.f32 %v501, %v452
      %v506 = vadd.f32 %v502, %v454
      %v507 = vadd.f32 %v503, %v493
      %v508 = vadd.f32 %v504, %v495
      %v509 = vld [vmem:[%s5] sm:$0xff]
      %511 = vset.pattern.permute.xlu0 0
      %512 = vperm.xlu0 %511, %v509
      %v513 = vpop.permute.xlu0 %512
      %v515 = vmul.f32 %v505, %v513
      %v516 = vmul.f32 %v506, %v513
      %v517 = vmul.f32 %v507, %v513
      %v518 = vmul.f32 %v508, %v513
      %v519 = vld [vmem:[%s6] sm:$0xff]
      %521 = vset.pattern.permute.xlu0 0
      %522 = vperm.xlu0 %521, %v519
      %v523 = vpop.permute.xlu0 %522
      %v525 = vadd.f32 %v515, %v523
      %v526 = vadd.f32 %v516, %v523
      %v527 = vadd.f32 %v517, %v523
      %v528 = vadd.f32 %v518, %v523
      %v529 = vmax.f32 %v525, 0.0
      %v530 = vmax.f32 %v526, 0.0
      %v531 = vmax.f32 %v527, 0.0
      %v532 = vmax.f32 %v528, 0.0
      %v533 = vpack.c.bf16 %v529, %v529
      %v534 = vpack.c.bf16 %v530, %v530
      %v535 = vpack.c.bf16 %v531, %v531
      %v536 = vpack.c.bf16 %v532, %v532
      %v541 = vunpack.c.l.b16 %v533
      %v542 = vunpack.c.l.b16 %v534
      %v543 = vunpack.c.l.b16 %v535
      %v544 = vunpack.c.l.b16 %v536
      %v545 = vpack.c.b16 %v542, %v541
      %v546 = vpack.c.b16 %v544, %v543
      %549 = vst [vmem:[%s352] sm:$0xff] %v545
      %550 = vst [vmem:[%s352 + $0x8] sm:$0xff] %v546
      %s551 = smul.u32 4, %s23
      %p552 = scmp.lt.s32.totalorder %s22, 1
      %s553 = scalar_select %p552, %s22, 1
      %p554 = scmp.lt.s32.totalorder %s551, 7
      %s555 = scalar_select %p554, %s551, 7
      %s556 = smul.addr %s553, 8
      %s557 = sadd.s32 %s555, %s556
      %s558 = smul.addr %s557, 4
      %s559 = scalar_lea.vmem %s7, %s558
      // Predicated region
      $region49: #{_lambda_.4} parent=47 // pred_check
        %p560 = pneg %p211
      $region50: #{_lambda_.4} parent=47 // pred_check_branch
        %562 = sbr.rel (%p560) target = $region52
      $region51: #{_lambda_.4} parent=47 // pred_region
        %s563 = smul.u32 4, %s23
      $region52: #{_lambda_.4} parent=47 // pred_fallthru
        _
    $region48: #{_lambda_.4} parent=5 // pred_fallthru
      _
    %p564 = scmp.le.s32.totalorder 2, %s13
    // Predicated region
    $region53: #{_lambda_.4} parent=5 // pred_check
      %p565 = pneg %p564
    $region54: #{_lambda_.4} parent=5 // pred_check_branch
      %567 = sbr.rel (%p565) target = $region56
    $region55: #{_lambda_.4} parent=5 // pred_region
      %s568 = ssub.s32 %s13, 2
      // Predicated region
      $region57: #{_lambda_.4} parent=55 // pred_check
        %p569 = pneg %p217
      $region58: #{_lambda_.4} parent=55 // pred_check_branch
        %571 = sbr.rel (%p569) target = $region60
      $region59: #{_lambda_.4} parent=55 // pred_region
        %s572 = smul.u32 4, %s25
        %p573 = scmp.lt.s32.totalorder %s24, 1
        %s574 = scalar_select %p573, %s24, 1
        %p575 = scmp.lt.s32.totalorder %s572, 7
        %s576 = scalar_select %p575, %s572, 7
        %s577 = smul.addr %s574, 8
        %s578 = sadd.s32 %s576, %s577
        %s579 = smul.addr %s578, 4
        %s580 = scalar_lea.vmem %s7, %s579
      $region60: #{_lambda_.4} parent=55 // pred_fallthru
        _
    $region56: #{_lambda_.4} parent=5 // pred_fallthru
      _
  $region6: #{_lambda_.4} parent=0 // loop_footer
    %s17 = sadd.s32 1, %s13
  $region7: #{_lambda_.4} parent=0 // loop_footer_branch
    %12 = sbr.rel target = $region3
  $region8: #{_lambda_.4} parent=0 // loop_exit
    _

// kernel: _lambda_.5
$region0: #{_lambda_.5}
  #allocation0 [shape = 'u32[]', space=smem, size = 0x4, offset = 0x4, fixed_abs, tag = 'smem constant byte address 0x4 - core index']
  #allocation1 [shape = 'u32[144,128]{1,0:T(1,128)}', space=vmem, size = 0x12000, scoped, tag = 'internal scratch']
  %s0 = inlined_call_operand.vmem [shape: bf16[2,8,1024], index: 0, kind: input, shape index: {}]
  %s1 = inlined_call_operand.vmem [shape: s32[2,1024], index: 1, kind: input, shape index: {}]
  %s2 = inlined_call_operand.vmem [shape: bf16[8,72], index: 2, kind: input, shape index: {}]
  %s3 = inlined_call_operand.vmem [shape: f32[2,8,1024], index: 3, kind: output, shape index: {}]
  %s4 = sld [smem:[#allocation0]]
  $region45: #{_lambda_.5} parent=0
    _
  %s6 = ssub.s32 1, %s4
  %s7 = scalar_select 0, %s6, %s4
  loop: start=0, step=1, limit=4
  $region2: #{_lambda_.5} parent=0 // loop_pre_header
    _
  $region3: #{_lambda_.5} parent=0 // loop_header
    %s9 = sphi 0, %s13
    %p10 = scmp.ge.s32.totalorder %s9, 4
    %s19 = sphi 0, %s21
    %s22 = sphi 0, %s19
    %s23 = sphi 0, %s22
    %s39 = sphi 0, %s23
    %s43 = sphi 0, %s43
    %s45 = sphi 0, %s43
    %s46 = sphi 0, %s45
    %s60 = sphi 0, %s46
    %s64 = sphi 0, %s64
    %s66 = sphi 0, %s64
    %s67 = sphi 0, %s66
    %s81 = sphi 0, %s67
    %s87 = sphi 0, %s89
    %s90 = sphi 0, %s87
    %s91 = sphi 0, %s90
    %s107 = sphi 0, %s91
  $region4: #{_lambda_.5} parent=0 // loop_header_branch
    %12 = sbr.rel (%p10) target = $region8
  $region5: #{_lambda_.5} parent=0 // loop_body
    %s14 = ssub.s32 %s9, 1
    %s15 = ssub.s32 %s9, 2
    %s16 = sadd.s32 %s9, 1
    %s17 = ssub.s32 %s9, %s16
    %p18 = scmp.eq.s32.totalorder %s17, 0
    %s20 = sadd.s32 %s19, 1
    %s21 = scalar_select %p18, %s19, %s20
    %p24 = pneg %p18
    %p25 = scmp.eq.s32.totalorder %s9, 1
    %p26 = por %p24, %p25
    %p27 = scmp.ne.s32.totalorder %s19, %s22
    %p28 = scmp.eq.s32.totalorder %s9, 0
    %p29 = por %p27, %p28
    %p30 = scmp.ne.s32.totalorder %s19, %s22
    %p31 = scmp.eq.s32.totalorder %s14, 1
    %p32 = por %p30, %p31
    %p33 = scmp.ne.s32.totalorder %s22, %s23
    %p34 = scmp.eq.s32.totalorder %s14, 0
    %p35 = por %p33, %p34
    %p36 = scmp.ne.s32.totalorder %s22, %s23
    %p37 = scmp.eq.s32.totalorder %s15, 1
    %p38 = por %p36, %p37
    %p40 = scmp.ne.s32.totalorder %s23, %s39
    %p41 = scmp.eq.s32.totalorder %s15, 0
    %p42 = por %p40, %p41
    %s44 = sadd.s32 %s43, 1
    %p47 = scmp.eq.s32.totalorder %s9, 1
    %p48 = scmp.ne.s32.totalorder %s43, %s45
    %p49 = scmp.eq.s32.totalorder %s9, 0
    %p50 = por %p48, %p49
    %p51 = scmp.ne.s32.totalorder %s43, %s45
    %p52 = scmp.eq.s32.totalorder %s14, 1
    %p53 = por %p51, %p52
    %p54 = scmp.ne.s32.totalorder %s45, %s46
    %p55 = scmp.eq.s32.totalorder %s14, 0
    %p56 = por %p54, %p55
    %p57 = scmp.ne.s32.totalorder %s45, %s46
    %p58 = scmp.eq.s32.totalorder %s15, 1
    %p59 = por %p57, %p58
    %p61 = scmp.ne.s32.totalorder %s46, %s60
    %p62 = scmp.eq.s32.totalorder %s15, 0
    %p63 = por %p61, %p62
    %s65 = sadd.s32 %s64, 1
    %p68 = scmp.eq.s32.totalorder %s9, 1
    %p69 = scmp.ne.s32.totalorder %s64, %s66
    %p70 = scmp.eq.s32.totalorder %s9, 0
    %p71 = por %p69, %p70
    %p72 = scmp.ne.s32.totalorder %s64, %s66
    %p73 = scmp.eq.s32.totalorder %s14, 1
    %p74 = por %p72, %p73
    %p75 = scmp.ne.s32.totalorder %s66, %s67
    %p76 = scmp.eq.s32.totalorder %s14, 0
    %p77 = por %p75, %p76
    %p78 = scmp.ne.s32.totalorder %s66, %s67
    %p79 = scmp.eq.s32.totalorder %s15, 1
    %p80 = por %p78, %p79
    %p82 = scmp.ne.s32.totalorder %s67, %s81
    %p83 = scmp.eq.s32.totalorder %s15, 0
    %p84 = por %p82, %p83
    %s85 = ssub.s32 %s9, %s16
    %p86 = scmp.eq.s32.totalorder %s85, 0
    %s88 = sadd.s32 %s87, 1
    %s89 = scalar_select %p86, %s87, %s88
    %p92 = pneg %p86
    %p93 = scmp.eq.s32.totalorder %s9, 1
    %p94 = por %p92, %p93
    %p95 = scmp.ne.s32.totalorder %s87, %s90
    %p96 = scmp.eq.s32.totalorder %s9, 0
    %p97 = por %p95, %p96
    %p98 = scmp.ne.s32.totalorder %s87, %s90
    %p99 = scmp.eq.s32.totalorder %s14, 1
    %p100 = por %p98, %p99
    %p101 = scmp.ne.s32.totalorder %s90, %s91
    %p102 = scmp.eq.s32.totalorder %s14, 0
    %p103 = por %p101, %p102
    %p104 = scmp.ne.s32.totalorder %s90, %s91
    %p105 = scmp.eq.s32.totalorder %s15, 1
    %p106 = por %p104, %p105
    %p108 = scmp.ne.s32.totalorder %s91, %s107
    %p109 = scmp.eq.s32.totalorder %s15, 0
    %p110 = por %p108, %p109
    %p111 = scmp.le.s32.totalorder 1, %s9
    %p112 = scmp.lt.s32.totalorder %s9, 3
    %p113 = pnand %p111, %p112
    %p114 = pneg %p113
    // Predicated region
    $region9: #{_lambda_.5} parent=5 // pred_check
      _
    $region10: #{_lambda_.5} parent=5 // pred_check_branch
      %116 = sbr.rel (%p113) target = $region12
    $region11: #{_lambda_.5} parent=5 // pred_region
      %s117 = ssub.s32 %s9, 1
      // Predicated region
      $region13: #{_lambda_.5} parent=11 // pred_check
        %p118 = pneg %p56
      $region14: #{_lambda_.5} parent=11 // pred_check_branch
        %120 = sbr.rel (%p118) target = $region16
      $region15: #{_lambda_.5} parent=11 // pred_region
        _
      $region16: #{_lambda_.5} parent=11 // pred_fallthru
        _
      // Predicated region
      $region17: #{_lambda_.5} parent=11 // pred_check
        %p121 = pneg %p77
      $region18: #{_lambda_.5} parent=11 // pred_check_branch
        %123 = sbr.rel (%p121) target = $region20
      $region19: #{_lambda_.5} parent=11 // pred_region
        _
      $region20: #{_lambda_.5} parent=11 // pred_fallthru
        _
    $region12: #{_lambda_.5} parent=5 // pred_fallthru
      _
    %p124 = scmp.lt.s32.totalorder %s9, 2
    // Predicated region
    $region21: #{_lambda_.5} parent=5 // pred_check
      %p125 = pneg %p124
    $region22: #{_lambda_.5} parent=5 // pred_check_branch
      %127 = sbr.rel (%p125) target = $region24
    $region23: #{_lambda_.5} parent=5 // pred_region
      // Predicated region
      $region25: #{_lambda_.5} parent=23 // pred_check
        %p128 = pneg %p29
      $region26: #{_lambda_.5} parent=23 // pred_check_branch
        %130 = sbr.rel (%p128) target = $region28
      $region27: #{_lambda_.5} parent=23 // pred_region
        %p131 = scmp.lt.s32.totalorder %s9, 1
        %s132 = scalar_select %p131, %s9, 1
        %s133 = smul.addr %s132, 8
        %s134 = smul.addr %s133, 4
        %s135 = scalar_lea.vmem %s0, %s134
      $region28: #{_lambda_.5} parent=23 // pred_fallthru
        _
    $region24: #{_lambda_.5} parent=5 // pred_fallthru
      _
    %p136 = scmp.le.s32.totalorder 1, %s9
    %p137 = scmp.lt.s32.totalorder %s9, 3
    %p138 = pnand %p136, %p137
    %p139 = pneg %p138
    // Predicated region
    $region29: #{_lambda_.5} parent=5 // pred_check
      _
    $region30: #{_lambda_.5} parent=5 // pred_check_branch
      %141 = sbr.rel (%p138) target = $region32
    $region31: #{_lambda_.5} parent=5 // pred_region
      %s142 = ssub.s32 %s9, 1
      %p143 = scmp.lt.s32.totalorder %s14, 1
      %s144 = scalar_select %p143, %s14, 1
      %s145 = smul.addr %s144, 8
      %s146 = smul.addr %s145, 4
      %s147 = scalar_lea.vmem %s0, %s146
      %p148 = pneg %p35
      %p149 = pneg %p32
      %p150 = pneg %p56
      %p151 = pneg %p53
      %p152 = pneg %p77
      %p153 = pneg %p74
      %p154 = pneg %p103
      %p155 = pneg %p100
      %p156 = scmp.lt.s32.totalorder %s14, 1
      %s157 = scalar_select %p156, %s14, 1
      %s158 = smul.addr %s157, 8
      %s159 = smul.addr %s158, 8
      %s160 = scalar_lea.vmem %s3, %s159
      %p161 = scmp.lt.s32.totalorder %s14, 1
      %s162 = scalar_select %p161, %s14, 1
      %s163 = smul.addr %s162, 8
      %s164 = smul.addr %s163, 4
      %s165 = scalar_lea.vmem %s0, %s164
      %p166 = scmp.lt.s32.totalorder %s14, 1
      %s167 = scalar_select %p166, %s14, 1
      %s168 = smul.addr %s167, 8
      %s169 = smul.addr %s168, 8
      %s170 = scalar_lea.vmem %s3, %s169
      %v172 = vld [vmem:[%s165] sm:$0xff]
      %v173 = vld [vmem:[%s165 + $0x8] sm:$0xff]
      %v174 = vld [vmem:[%s165 + $0x10] sm:$0xff]
      %v175 = vld [vmem:[%s165 + $0x18] sm:$0xff]
      %v176 = vunpack.c.l.bf16 %v172
      %v177 = vunpack.c.h.bf16 %v172
      %v178 = vunpack.c.l.bf16 %v173
      %v179 = vunpack.c.h.bf16 %v173
      %v180 = vunpack.c.l.bf16 %v174
      %v181 = vunpack.c.h.bf16 %v174
      %v182 = vunpack.c.l.bf16 %v175
      %v183 = vunpack.c.h.bf16 %v175
      %v184 = vld [vmem:[%s1] ss:$2 sm:$0xff]
      %s185 = scalar_lea.vmem %s1, 1
      %v186 = vld [vmem:[%s185] ss:$2 sm:$0xff]
      %188 = vrot.lane.b32.xlu0 %v183, 33
      %v189 = vpop.permute.xlu0 %188
      %198 = vrot.lane.b32.xlu0 %v176, 33
      %v199 = vpop.permute.xlu0 %198
      %200 = vrot.lane.b32.xlu0 %v177, 33
      %v201 = vpop.permute.xlu0 %200
      %202 = vrot.lane.b32.xlu0 %v178, 33
      %v203 = vpop.permute.xlu0 %202
      %204 = vrot.lane.b32.xlu0 %v179, 33
      %v205 = vpop.permute.xlu0 %204
      %206 = vrot.lane.b32.xlu0 %v180, 33
      %v207 = vpop.permute.xlu0 %206
      %208 = vrot.lane.b32.xlu0 %v181, 33
      %v209 = vpop.permute.xlu0 %208
      %210 = vrot.lane.b32.xlu0 %v182, 33
      %v211 = vpop.permute.xlu0 %210
      %vm212 = vcmask 269312
      %v213 = vsel %vm212, %v199, %v201
      %v214 = vsel %vm212, %v201, %v203
      %v215 = vsel %vm212, %v203, %v205
      %v216 = vsel %vm212, %v205, %v207
      %v217 = vsel %vm212, %v207, %v209
      %v218 = vsel %vm212, %v209, %v211
      %v219 = vsel %vm212, %v211, %v189
      %v228 = vsel %vm212, %v189, %v199
      %v229 = vadd.s32 %v184, 4294967295
      %vm230 = vcmp.ge.s32.totalorder %v229, 0
      %vm231 = vcmp.lt.s32.totalorder %v229, 32
      %vm232 = vmand %vm230, %vm231
      %v233 = vadd.s32 %v186, 4294967295
      %vm234 = vcmp.ge.s32.totalorder %v233, 0
      %vm235 = vmand %vm232, %vm234
      %vm236 = vcmp.lt.s32.totalorder %v233, 32
      %vm237 = vmand %vm235, %vm236
      %v238 = vsel %vm237, 1, 0
      %v239 = vlaneseq
      %v240 = vshrl.u32 %v239, 7
      %v241 = vsub.s32 0, %v240
      %v242 = vrot.slane %v238, %v241
      %v243 = vlaneseq
      %v244 = vshrl.u32 %v243, 7
      %v245 = vsub.s32 1, %v244
      %v246 = vrot.slane %v238, %v245
      %v247 = vlaneseq
      %v248 = vshrl.u32 %v247, 7
      %v249 = vsub.s32 2, %v248
      %v250 = vrot.slane %v238, %v249
      %v251 = vlaneseq
      %v252 = vshrl.u32 %v251, 7
      %v253 = vsub.s32 3, %v252
      %v254 = vrot.slane %v238, %v253
      %v255 = vlaneseq
      %v256 = vshrl.u32 %v255, 7
      %v257 = vsub.s32 4, %v256
      %v258 = vrot.slane %v238, %v257
      %v259 = vlaneseq
      %v260 = vshrl.u32 %v259, 7
      %v261 = vsub.s32 5, %v260
      %v262 = vrot.slane %v238, %v261
      %v263 = vlaneseq
      %v264 = vshrl.u32 %v263, 7
      %v265 = vsub.s32 6, %v264
      %v266 = vrot.slane %v238, %v265
      %v267 = vlaneseq
      %v268 = vshrl.u32 %v267, 7
      %v269 = vsub.s32 7, %v268
      %v270 = vrot.slane %v238, %v269
      %vm271 = vcmp.eq.s32.totalorder %v242, 1
      %vm272 = vcmp.eq.s32.totalorder %v246, 1
      %vm273 = vcmp.eq.s32.totalorder %v250, 1
      %vm274 = vcmp.eq.s32.totalorder %v254, 1
      %vm275 = vcmp.eq.s32.totalorder %v258, 1
      %vm276 = vcmp.eq.s32.totalorder %v262, 1
      %vm277 = vcmp.eq.s32.totalorder %v266, 1
      %vm278 = vcmp.eq.s32.totalorder %v270, 1
      %v279 = vsel %vm271, %v228, 0.0
      %v280 = vsel %vm272, %v213, 0.0
      %v281 = vsel %vm273, %v214, 0.0
      %v282 = vsel %vm274, %v215, 0.0
      %v283 = vsel %vm275, %v216, 0.0
      %v284 = vsel %vm276, %v217, 0.0
      %v285 = vsel %vm277, %v218, 0.0
      %v286 = vsel %vm278, %v219, 0.0
      %287 = vrot.lane.b32.xlu0 %v183, 32
      %v288 = vpop.permute.xlu0 %287
      %290 = vrot.lane.b32.xlu0 %v176, 32
      %v291 = vpop.permute.xlu0 %290
      %292 = vrot.lane.b32.xlu0 %v177, 32
      %v293 = vpop.permute.xlu0 %292
      %294 = vrot.lane.b32.xlu0 %v178, 32
      %v295 = vpop.permute.xlu0 %294
      %296 = vrot.lane.b32.xlu0 %v179, 32
      %v297 = vpop.permute.xlu0 %296
      %298 = vrot.lane.b32.xlu0 %v180, 32
      %v299 = vpop.permute.xlu0 %298
      %300 = vrot.lane.b32.xlu0 %v181, 32
      %v301 = vpop.permute.xlu0 %300
      %302 = vrot.lane.b32.xlu0 %v182, 32
      %v303 = vpop.permute.xlu0 %302
      %vm304 = vcmask 261120
      %v305 = vsel %vm304, %v291, %v293
      %v306 = vsel %vm304, %v293, %v295
      %v307 = vsel %vm304, %v295, %v297
      %v308 = vsel %vm304, %v297, %v299
      %v309 = vsel %vm304, %v299, %v301
      %v310 = vsel %vm304, %v301, %v303
      %v311 = vsel %vm304, %v303, %v288
      %v320 = vsel %vm304, %v288, %v291
      %vm321 = vcmp.ge.s32.totalorder %v186, 0
      %vm322 = vmand %vm232, %vm321
      %vm323 = vcmp.lt.s32.totalorder %v186, 32
      %vm324 = vmand %vm322, %vm323
      %v325 = vsel %vm324, 1, 0
      %v326 = vlaneseq
      %v327 = vshrl.u32 %v326, 7
      %v328 = vsub.s32 0, %v327
      %v329 = vrot.slane %v325, %v328
      %v330 = vlaneseq
      %v331 = vshrl.u32 %v330, 7
      %v332 = vsub.s32 1, %v331
      %v333 = vrot.slane %v325, %v332
      %v334 = vlaneseq
      %v335 = vshrl.u32 %v334, 7
      %v336 = vsub.s32 2, %v335
      %v337 = vrot.slane %v325, %v336
      %v338 = vlaneseq
      %v339 = vshrl.u32 %v338, 7
      %v340 = vsub.s32 3, %v339
      %v341 = vrot.slane %v325, %v340
      %v342 = vlaneseq
      %v343 = vshrl.u32 %v342, 7
      %v344 = vsub.s32 4, %v343
      %v345 = vrot.slane %v325, %v344
      %v346 = vlaneseq
      %v347 = vshrl.u32 %v346, 7
      %v348 = vsub.s32 5, %v347
      %v349 = vrot.slane %v325, %v348
      %v350 = vlaneseq
      %v351 = vshrl.u32 %v350, 7
      %v352 = vsub.s32 6, %v351
      %v353 = vrot.slane %v325, %v352
      %v354 = vlaneseq
      %v355 = vshrl.u32 %v354, 7
      %v356 = vsub.s32 7, %v355
      %v357 = vrot.slane %v325, %v356
      %vm358 = vcmp.eq.s32.totalorder %v329, 1
      %vm359 = vcmp.eq.s32.totalorder %v333, 1
      %vm360 = vcmp.eq.s32.totalorder %v337, 1
      %vm361 = vcmp.eq.s32.totalorder %v341, 1
      %vm362 = vcmp.eq.s32.totalorder %v345, 1
      %vm363 = vcmp.eq.s32.totalorder %v349, 1
      %vm364 = vcmp.eq.s32.totalorder %v353, 1
      %vm365 = vcmp.eq.s32.totalorder %v357, 1
      %v366 = vsel %vm358, %v320, 0.0
      %v367 = vsel %vm359, %v305, 0.0
      %v368 = vsel %vm360, %v306, 0.0
      %v369 = vsel %vm361, %v307, 0.0
      %v370 = vsel %vm362, %v308, 0.0
      %v371 = vsel %vm363, %v309, 0.0
      %v372 = vsel %vm364, %v310, 0.0
      %v373 = vsel %vm365, %v311, 0.0
      %374 = vrot.lane.b32.xlu0 %v183, 31
      %v375 = vpop.permute.xlu0 %374
      %377 = vrot.lane.b32.xlu0 %v176, 31
      %v378 = vpop.permute.xlu0 %377
      %379 = vrot.lane.b32.xlu0 %v177, 31
      %v380 = vpop.permute.xlu0 %379
      %381 = vrot.lane.b32.xlu0 %v178, 31
      %v382 = vpop.permute.xlu0 %381
      %383 = vrot.lane.b32.xlu0 %v179, 31
      %v384 = vpop.permute.xlu0 %383
      %385 = vrot.lane.b32.xlu0 %v180, 31
      %v386 = vpop.permute.xlu0 %385
      %387 = vrot.lane.b32.xlu0 %v181, 31
      %v388 = vpop.permute.xlu0 %387
      %389 = vrot.lane.b32.xlu0 %v182, 31
      %v390 = vpop.permute.xlu0 %389
      %vm391 = vcmask 252928
      %v392 = vsel %vm391, %v378, %v380
      %v393 = vsel %vm391, %v380, %v382
      %v394 = vsel %vm391, %v382, %v384
      %v395 = vsel %vm391, %v384, %v386
      %v396 = vsel %vm391, %v386, %v388
      %v397 = vsel %vm391, %v388, %v390
      %v398 = vsel %vm391, %v390, %v375
      %v407 = vsel %vm391, %v375, %v378
      %v408 = vadd.s32 %v186, 1
      %vm409 = vcmp.ge.s32.totalorder %v408, 0
      %vm410 = vmand %vm232, %vm409
      %vm411 = vcmp.lt.s32.totalorder %v408, 32
      %vm412 = vmand %vm410, %vm411
      %v413 = vsel %vm412, 1, 0
      %v414 = vlaneseq
      %v415 = vshrl.u32 %v414, 7
      %v416 = vsub.s32 0, %v415
      %v417 = vrot.slane %v413, %v416
      %v418 = vlaneseq
      %v419 = vshrl.u32 %v418, 7
      %v420 = vsub.s32 1, %v419
      %v421 = vrot.slane %v413, %v420
      %v422 = vlaneseq
      %v423 = vshrl.u32 %v422, 7
      %v424 = vsub.s32 2, %v423
      %v425 = vrot.slane %v413, %v424
      %v426 = vlaneseq
      %v427 = vshrl.u32 %v426, 7
      %v428 = vsub.s32 3, %v427
      %v429 = vrot.slane %v413, %v428
      %v430 = vlaneseq
      %v431 = vshrl.u32 %v430, 7
      %v432 = vsub.s32 4, %v431
      %v433 = vrot.slane %v413, %v432
      %v434 = vlaneseq
      %v435 = vshrl.u32 %v434, 7
      %v436 = vsub.s32 5, %v435
      %v437 = vrot.slane %v413, %v436
      %v438 = vlaneseq
      %v439 = vshrl.u32 %v438, 7
      %v440 = vsub.s32 6, %v439
      %v441 = vrot.slane %v413, %v440
      %v442 = vlaneseq
      %v443 = vshrl.u32 %v442, 7
      %v444 = vsub.s32 7, %v443
      %v445 = vrot.slane %v413, %v444
      %vm446 = vcmp.eq.s32.totalorder %v417, 1
      %vm447 = vcmp.eq.s32.totalorder %v421, 1
      %vm448 = vcmp.eq.s32.totalorder %v425, 1
      %vm449 = vcmp.eq.s32.totalorder %v429, 1
      %vm450 = vcmp.eq.s32.totalorder %v433, 1
      %vm451 = vcmp.eq.s32.totalorder %v437, 1
      %vm452 = vcmp.eq.s32.totalorder %v441, 1
      %vm453 = vcmp.eq.s32.totalorder %v445, 1
      %v454 = vsel %vm446, %v407, 0.0
      %v455 = vsel %vm447, %v392, 0.0
      %v456 = vsel %vm448, %v393, 0.0
      %v457 = vsel %vm449, %v394, 0.0
      %v458 = vsel %vm450, %v395, 0.0
      %v459 = vsel %vm451, %v396, 0.0
      %v460 = vsel %vm452, %v397, 0.0
      %v461 = vsel %vm453, %v398, 0.0
      %462 = vrot.lane.b32.xlu0 %v183, 1
      %v463 = vpop.permute.xlu0 %462
      %465 = vrot.lane.b32.xlu0 %v176, 1
      %v466 = vpop.permute.xlu0 %465
      %467 = vrot.lane.b32.xlu0 %v177, 1
      %v468 = vpop.permute.xlu0 %467
      %469 = vrot.lane.b32.xlu0 %v178, 1
      %v470 = vpop.permute.xlu0 %469
      %471 = vrot.lane.b32.xlu0 %v179, 1
      %v472 = vpop.permute.xlu0 %471
      %473 = vrot.lane.b32.xlu0 %v180, 1
      %v474 = vpop.permute.xlu0 %473
      %475 = vrot.lane.b32.xlu0 %v181, 1
      %v476 = vpop.permute.xlu0 %475
      %477 = vrot.lane.b32.xlu0 %v182, 1
      %v478 = vpop.permute.xlu0 %477
      %vm479 = vcmask 7168
      %v480 = vsel %vm479, %v466, %v468
      %v481 = vsel %vm479, %v468, %v470
      %v482 = vsel %vm479, %v470, %v472
      %v483 = vsel %vm479, %v472, %v474
      %v484 = vsel %vm479, %v474, %v476
      %v485 = vsel %vm479, %v476, %v478
      %v486 = vsel %vm479, %v478, %v463
      %v495 = vsel %vm479, %v463, %v466
      %vm496 = vcmp.ge.s32.totalorder %v184, 0
      %vm497 = vcmp.lt.s32.totalorder %v184, 32
      %vm498 = vmand %vm496, %vm497
      %vm499 = vmand %vm498, %vm234
      %vm500 = vmand %vm499, %vm236
      %v501 = vsel %vm500, 1, 0
      %v502 = vlaneseq
      %v503 = vshrl.u32 %v502, 7
      %v504 = vsub.s32 0, %v503
      %v505 = vrot.slane %v501, %v504
      %v506 = vlaneseq
      %v507 = vshrl.u32 %v506, 7
      %v508 = vsub.s32 1, %v507
      %v509 = vrot.slane %v501, %v508
      %v510 = vlaneseq
      %v511 = vshrl.u32 %v510, 7
      %v512 = vsub.s32 2, %v511
      %v513 = vrot.slane %v501, %v512
      %v514 = vlaneseq
      %v515 = vshrl.u32 %v514, 7
      %v516 = vsub.s32 3, %v515
      %v517 = vrot.slane %v501, %v516
      %v518 = vlaneseq
      %v519 = vshrl.u32 %v518, 7
      %v520 = vsub.s32 4, %v519
      %v521 = vrot.slane %v501, %v520
      %v522 = vlaneseq
      %v523 = vshrl.u32 %v522, 7
      %v524 = vsub.s32 5, %v523
      %v525 = vrot.slane %v501, %v524
      %v526 = vlaneseq
      %v527 = vshrl.u32 %v526, 7
      %v528 = vsub.s32 6, %v527
      %v529 = vrot.slane %v501, %v528
      %v530 = vlaneseq
      %v531 = vshrl.u32 %v530, 7
      %v532 = vsub.s32 7, %v531
      %v533 = vrot.slane %v501, %v532
      %vm534 = vcmp.eq.s32.totalorder %v505, 1
      %vm535 = vcmp.eq.s32.totalorder %v509, 1
      %vm536 = vcmp.eq.s32.totalorder %v513, 1
      %vm537 = vcmp.eq.s32.totalorder %v517, 1
      %vm538 = vcmp.eq.s32.totalorder %v521, 1
      %vm539 = vcmp.eq.s32.totalorder %v525, 1
      %vm540 = vcmp.eq.s32.totalorder %v529, 1
      %vm541 = vcmp.eq.s32.totalorder %v533, 1
      %v542 = vsel %vm534, %v495, 0.0
      %v543 = vsel %vm535, %v480, 0.0
      %v544 = vsel %vm536, %v481, 0.0
      %v545 = vsel %vm537, %v482, 0.0
      %v546 = vsel %vm538, %v483, 0.0
      %v547 = vsel %vm539, %v484, 0.0
      %v548 = vsel %vm540, %v485, 0.0
      %v549 = vsel %vm541, %v486, 0.0
      %vm550 = vmand %vm498, %vm321
      %vm551 = vmand %vm550, %vm323
      %v552 = vsel %vm551, 1, 0
      %v553 = vlaneseq
      %v554 = vshrl.u32 %v553, 7
      %v555 = vsub.s32 0, %v554
      %v556 = vrot.slane %v552, %v555
      %v557 = vlaneseq
      %v558 = vshrl.u32 %v557, 7
      %v559 = vsub.s32 1, %v558
      %v560 = vrot.slane %v552, %v559
      %v561 = vlaneseq
      %v562 = vshrl.u32 %v561, 7
      %v563 = vsub.s32 2, %v562
      %v564 = vrot.slane %v552, %v563
      %v565 = vlaneseq
      %v566 = vshrl.u32 %v565, 7
      %v567 = vsub.s32 3, %v566
      %v568 = vrot.slane %v552, %v567
      %v569 = vlaneseq
      %v570 = vshrl.u32 %v569, 7
      %v571 = vsub.s32 4, %v570
      %v572 = vrot.slane %v552, %v571
      %v573 = vlaneseq
      %v574 = vshrl.u32 %v573, 7
      %v575 = vsub.s32 5, %v574
      %v576 = vrot.slane %v552, %v575
      %v577 = vlaneseq
      %v578 = vshrl.u32 %v577, 7
      %v579 = vsub.s32 6, %v578
      %v580 = vrot.slane %v552, %v579
      %v581 = vlaneseq
      %v582 = vshrl.u32 %v581, 7
      %v583 = vsub.s32 7, %v582
      %v584 = vrot.slane %v552, %v583
      %vm585 = vcmp.eq.s32.totalorder %v556, 1
      %vm586 = vcmp.eq.s32.totalorder %v560, 1
      %vm587 = vcmp.eq.s32.totalorder %v564, 1
      %vm588 = vcmp.eq.s32.totalorder %v568, 1
      %vm589 = vcmp.eq.s32.totalorder %v572, 1
      %vm590 = vcmp.eq.s32.totalorder %v576, 1
      %vm591 = vcmp.eq.s32.totalorder %v580, 1
      %vm592 = vcmp.eq.s32.totalorder %v584, 1
      %v593 = vsel %vm585, %v176, 0.0
      %v594 = vsel %vm586, %v177, 0.0
      %v595 = vsel %vm587, %v178, 0.0
      %v596 = vsel %vm588, %v179, 0.0
      %v597 = vsel %vm589, %v180, 0.0
      %v598 = vsel %vm590, %v181, 0.0
      %v599 = vsel %vm591, %v182, 0.0
      %v600 = vsel %vm592, %v183, 0.0
      %601 = vrot.lane.b32.xlu0 %v176, 127
      %v602 = vpop.permute.xlu0 %601
      %603 = vrot.lane.b32.xlu0 %v177, 127
      %v604 = vpop.permute.xlu0 %603
      %605 = vrot.lane.b32.xlu0 %v178, 127
      %v606 = vpop.permute.xlu0 %605
      %607 = vrot.lane.b32.xlu0 %v179, 127
      %v608 = vpop.permute.xlu0 %607
      %609 = vrot.lane.b32.xlu0 %v180, 127
      %v610 = vpop.permute.xlu0 %609
      %611 = vrot.lane.b32.xlu0 %v181, 127
      %v612 = vpop.permute.xlu0 %611
      %613 = vrot.lane.b32.xlu0 %v182, 127
      %v614 = vpop.permute.xlu0 %613
      %615 = vrot.lane.b32.xlu0 %v183, 127
      %v616 = vpop.permute.xlu0 %615
      %vm617 = vcmask 1039360
      %v618 = vsel %vm617, %v602, %v604
      %v619 = vsel %vm617, %v604, %v606
      %v620 = vsel %vm617, %v606, %v608
      %v621 = vsel %vm617, %v608, %v610
      %v622 = vsel %vm617, %v610, %v612
      %v623 = vsel %vm617, %v612, %v614
      %v624 = vsel %vm617, %v614, %v616
      %v634 = vsel %vm617, %v616, %v602
      %vm635 = vmand %vm498, %vm409
      %vm636 = vmand %vm635, %vm411
      %v637 = vsel %vm636, 1, 0
      %v638 = vlaneseq
      %v639 = vshrl.u32 %v638, 7
      %v640 = vsub.s32 0, %v639
      %v641 = vrot.slane %v637, %v640
      %v642 = vlaneseq
      %v643 = vshrl.u32 %v642, 7
      %v644 = vsub.s32 1, %v643
      %v645 = vrot.slane %v637, %v644
      %v646 = vlaneseq
      %v647 = vshrl.u32 %v646, 7
      %v648 = vsub.s32 2, %v647
      %v649 = vrot.slane %v637, %v648
      %v650 = vlaneseq
      %v651 = vshrl.u32 %v650, 7
      %v652 = vsub.s32 3, %v651
      %v653 = vrot.slane %v637, %v652
      %v654 = vlaneseq
      %v655 = vshrl.u32 %v654, 7
      %v656 = vsub.s32 4, %v655
      %v657 = vrot.slane %v637, %v656
      %v658 = vlaneseq
      %v659 = vshrl.u32 %v658, 7
      %v660 = vsub.s32 5, %v659
      %v661 = vrot.slane %v637, %v660
      %v662 = vlaneseq
      %v663 = vshrl.u32 %v662, 7
      %v664 = vsub.s32 6, %v663
      %v665 = vrot.slane %v637, %v664
      %v666 = vlaneseq
      %v667 = vshrl.u32 %v666, 7
      %v668 = vsub.s32 7, %v667
      %v669 = vrot.slane %v637, %v668
      %vm670 = vcmp.eq.s32.totalorder %v641, 1
      %vm671 = vcmp.eq.s32.totalorder %v645, 1
      %vm672 = vcmp.eq.s32.totalorder %v649, 1
      %vm673 = vcmp.eq.s32.totalorder %v653, 1
      %vm674 = vcmp.eq.s32.totalorder %v657, 1
      %vm675 = vcmp.eq.s32.totalorder %v661, 1
      %vm676 = vcmp.eq.s32.totalorder %v665, 1
      %vm677 = vcmp.eq.s32.totalorder %v669, 1
      %v678 = vsel %vm670, %v618, 0.0
      %v679 = vsel %vm671, %v619, 0.0
      %v680 = vsel %vm672, %v620, 0.0
      %v681 = vsel %vm673, %v621, 0.0
      %v682 = vsel %vm674, %v622, 0.0
      %v683 = vsel %vm675, %v623, 0.0
      %v684 = vsel %vm676, %v624, 0.0
      %v685 = vsel %vm677, %v634, 0.0
      %686 = vrot.lane.b32.xlu0 %v176, 97
      %v687 = vpop.permute.xlu0 %686
      %688 = vrot.lane.b32.xlu0 %v177, 97
      %v689 = vpop.permute.xlu0 %688
      %690 = vrot.lane.b32.xlu0 %v178, 97
      %v691 = vpop.permute.xlu0 %690
      %692 = vrot.lane.b32.xlu0 %v179, 97
      %v693 = vpop.permute.xlu0 %692
      %694 = vrot.lane.b32.xlu0 %v180, 97
      %v695 = vpop.permute.xlu0 %694
      %696 = vrot.lane.b32.xlu0 %v181, 97
      %v697 = vpop.permute.xlu0 %696
      %698 = vrot.lane.b32.xlu0 %v182, 97
      %v699 = vpop.permute.xlu0 %698
      %700 = vrot.lane.b32.xlu0 %v183, 97
      %v701 = vpop.permute.xlu0 %700
      %vm702 = vcmask 793600
      %v703 = vsel %vm702, %v687, %v689
      %v704 = vsel %vm702, %v689, %v691
      %v705 = vsel %vm702, %v691, %v693
      %v706 = vsel %vm702, %v693, %v695
      %v707 = vsel %vm702, %v695, %v697
      %v708 = vsel %vm702, %v697, %v699
      %v709 = vsel %vm702, %v699, %v701
      %v719 = vsel %vm702, %v701, %v687
      %v720 = vadd.s32 %v184, 1
      %vm721 = vcmp.ge.s32.totalorder %v720, 0
      %vm722 = vcmp.lt.s32.totalorder %v720, 32
      %vm723 = vmand %vm721, %vm722
      %vm724 = vmand %vm723, %vm234
      %vm725 = vmand %vm724, %vm236
      %v726 = vsel %vm725, 1, 0
      %v727 = vlaneseq
      %v728 = vshrl.u32 %v727, 7
      %v729 = vsub.s32 0, %v728
      %v730 = vrot.slane %v726, %v729
      %v731 = vlaneseq
      %v732 = vshrl.u32 %v731, 7
      %v733 = vsub.s32 1, %v732
      %v734 = vrot.slane %v726, %v733
      %v735 = vlaneseq
      %v736 = vshrl.u32 %v735, 7
      %v737 = vsub.s32 2, %v736
      %v738 = vrot.slane %v726, %v737
      %v739 = vlaneseq
      %v740 = vshrl.u32 %v739, 7
      %v741 = vsub.s32 3, %v740
      %v742 = vrot.slane %v726, %v741
      %v743 = vlaneseq
      %v744 = vshrl.u32 %v743, 7
      %v745 = vsub.s32 4, %v744
      %v746 = vrot.slane %v726, %v745
      %v747 = vlaneseq
      %v748 = vshrl.u32 %v747, 7
      %v749 = vsub.s32 5, %v748
      %v750 = vrot.slane %v726, %v749
      %v751 = vlaneseq
      %v752 = vshrl.u32 %v751, 7
      %v753 = vsub.s32 6, %v752
      %v754 = vrot.slane %v726, %v753
      %v755 = vlaneseq
      %v756 = vshrl.u32 %v755, 7
      %v757 = vsub.s32 7, %v756
      %v758 = vrot.slane %v726, %v757
      %vm759 = vcmp.eq.s32.totalorder %v730, 1
      %vm760 = vcmp.eq.s32.totalorder %v734, 1
      %vm761 = vcmp.eq.s32.totalorder %v738, 1
      %vm762 = vcmp.eq.s32.totalorder %v742, 1
      %vm763 = vcmp.eq.s32.totalorder %v746, 1
      %vm764 = vcmp.eq.s32.totalorder %v750, 1
      %vm765 = vcmp.eq.s32.totalorder %v754, 1
      %vm766 = vcmp.eq.s32.totalorder %v758, 1
      %v767 = vsel %vm759, %v703, 0.0
      %v768 = vsel %vm760, %v704, 0.0
      %v769 = vsel %vm761, %v705, 0.0
      %v770 = vsel %vm762, %v706, 0.0
      %v771 = vsel %vm763, %v707, 0.0
      %v772 = vsel %vm764, %v708, 0.0
      %v773 = vsel %vm765, %v709, 0.0
      %v774 = vsel %vm766, %v719, 0.0
      %775 = vrot.lane.b32.xlu0 %v176, 96
      %v776 = vpop.permute.xlu0 %775
      %777 = vrot.lane.b32.xlu0 %v177, 96
      %v778 = vpop.permute.xlu0 %777
      %779 = vrot.lane.b32.xlu0 %v178, 96
      %v780 = vpop.permute.xlu0 %779
      %781 = vrot.lane.b32.xlu0 %v179, 96
      %v782 = vpop.permute.xlu0 %781
      %783 = vrot.lane.b32.xlu0 %v180, 96
      %v784 = vpop.permute.xlu0 %783
      %785 = vrot.lane.b32.xlu0 %v181, 96
      %v786 = vpop.permute.xlu0 %785
      %787 = vrot.lane.b32.xlu0 %v182, 96
      %v788 = vpop.permute.xlu0 %787
      %789 = vrot.lane.b32.xlu0 %v183, 96
      %v790 = vpop.permute.xlu0 %789
      %vm791 = vcmask 785408
      %v792 = vsel %vm791, %v776, %v778
      %v793 = vsel %vm791, %v778, %v780
      %v794 = vsel %vm791, %v780, %v782
      %v795 = vsel %vm791, %v782, %v784
      %v796 = vsel %vm791, %v784, %v786
      %v797 = vsel %vm791, %v786, %v788
      %v798 = vsel %vm791, %v788, %v790
      %v808 = vsel %vm791, %v790, %v776
      %vm809 = vmand %vm723, %vm321
      %vm810 = vmand %vm809, %vm323
      %v811 = vsel %vm810, 1, 0
      %v812 = vlaneseq
      %v813 = vshrl.u32 %v812, 7
      %v814 = vsub.s32 0, %v813
      %v815 = vrot.slane %v811, %v814
      %v816 = vlaneseq
      %v817 = vshrl.u32 %v816, 7
      %v818 = vsub.s32 1, %v817
      %v819 = vrot.slane %v811, %v818
      %v820 = vlaneseq
      %v821 = vshrl.u32 %v820, 7
      %v822 = vsub.s32 2, %v821
      %v823 = vrot.slane %v811, %v822
      %v824 = vlaneseq
      %v825 = vshrl.u32 %v824, 7
      %v826 = vsub.s32 3, %v825
      %v827 = vrot.slane %v811, %v826
      %v828 = vlaneseq
      %v829 = vshrl.u32 %v828, 7
      %v830 = vsub.s32 4, %v829
      %v831 = vrot.slane %v811, %v830
      %v832 = vlaneseq
      %v833 = vshrl.u32 %v832, 7
      %v834 = vsub.s32 5, %v833
      %v835 = vrot.slane %v811, %v834
      %v836 = vlaneseq
      %v837 = vshrl.u32 %v836, 7
      %v838 = vsub.s32 6, %v837
      %v839 = vrot.slane %v811, %v838
      %v840 = vlaneseq
      %v841 = vshrl.u32 %v840, 7
      %v842 = vsub.s32 7, %v841
      %v843 = vrot.slane %v811, %v842
      %vm844 = vcmp.eq.s32.totalorder %v815, 1
      %vm845 = vcmp.eq.s32.totalorder %v819, 1
      %vm846 = vcmp.eq.s32.totalorder %v823, 1
      %vm847 = vcmp.eq.s32.totalorder %v827, 1
      %vm848 = vcmp.eq.s32.totalorder %v831, 1
      %vm849 = vcmp.eq.s32.totalorder %v835, 1
      %vm850 = vcmp.eq.s32.totalorder %v839, 1
      %vm851 = vcmp.eq.s32.totalorder %v843, 1
      %v852 = vsel %vm844, %v792, 0.0
      %v853 = vsel %vm845, %v793, 0.0
      %v854 = vsel %vm846, %v794, 0.0
      %v855 = vsel %vm847, %v795, 0.0
      %v856 = vsel %vm848, %v796, 0.0
      %v857 = vsel %vm849, %v797, 0.0
      %v858 = vsel %vm850, %v798, 0.0
      %v859 = vsel %vm851, %v808, 0.0
      %860 = vrot.lane.b32.xlu0 %v176, 95
      %v861 = vpop.permute.xlu0 %860
      %862 = vrot.lane.b32.xlu0 %v177, 95
      %v863 = vpop.permute.xlu0 %862
      %864 = vrot.lane.b32.xlu0 %v178, 95
      %v865 = vpop.permute.xlu0 %864
      %866 = vrot.lane.b32.xlu0 %v179, 95
      %v867 = vpop.permute.xlu0 %866
      %868 = vrot.lane.b32.xlu0 %v180, 95
      %v869 = vpop.permute.xlu0 %868
      %870 = vrot.lane.b32.xlu0 %v181, 95
      %v871 = vpop.permute.xlu0 %870
      %872 = vrot.lane.b32.xlu0 %v182, 95
      %v873 = vpop.permute.xlu0 %872
      %874 = vrot.lane.b32.xlu0 %v183, 95
      %v875 = vpop.permute.xlu0 %874
      %vm876 = vcmask 777216
      %v877 = vsel %vm876, %v861, %v863
      %v878 = vsel %vm876, %v863, %v865
      %v879 = vsel %vm876, %v865, %v867
      %v880 = vsel %vm876, %v867, %v869
      %v881 = vsel %vm876, %v869, %v871
      %v882 = vsel %vm876, %v871, %v873
      %v883 = vsel %vm876, %v873, %v875
      %v893 = vsel %vm876, %v875, %v861
      %vm894 = vmand %vm723, %vm409
      %vm895 = vmand %vm894, %vm411
      %v896 = vsel %vm895, 1, 0
      %v897 = vlaneseq
      %v898 = vshrl.u32 %v897, 7
      %v899 = vsub.s32 0, %v898
      %v900 = vrot.slane %v896, %v899
      %v901 = vlaneseq
      %v902 = vshrl.u32 %v901, 7
      %v903 = vsub.s32 1, %v902
      %v904 = vrot.slane %v896, %v903
      %v905 = vlaneseq
      %v906 = vshrl.u32 %v905, 7
      %v907 = vsub.s32 2, %v906
      %v908 = vrot.slane %v896, %v907
      %v909 = vlaneseq
      %v910 = vshrl.u32 %v909, 7
      %v911 = vsub.s32 3, %v910
      %v912 = vrot.slane %v896, %v911
      %v913 = vlaneseq
      %v914 = vshrl.u32 %v913, 7
      %v915 = vsub.s32 4, %v914
      %v916 = vrot.slane %v896, %v915
      %v917 = vlaneseq
      %v918 = vshrl.u32 %v917, 7
      %v919 = vsub.s32 5, %v918
      %v920 = vrot.slane %v896, %v919
      %v921 = vlaneseq
      %v922 = vshrl.u32 %v921, 7
      %v923 = vsub.s32 6, %v922
      %v924 = vrot.slane %v896, %v923
      %v925 = vlaneseq
      %v926 = vshrl.u32 %v925, 7
      %v927 = vsub.s32 7, %v926
      %v928 = vrot.slane %v896, %v927
      %vm929 = vcmp.eq.s32.totalorder %v900, 1
      %vm930 = vcmp.eq.s32.totalorder %v904, 1
      %vm931 = vcmp.eq.s32.totalorder %v908, 1
      %vm932 = vcmp.eq.s32.totalorder %v912, 1
      %vm933 = vcmp.eq.s32.totalorder %v916, 1
      %vm934 = vcmp.eq.s32.totalorder %v920, 1
      %vm935 = vcmp.eq.s32.totalorder %v924, 1
      %vm936 = vcmp.eq.s32.totalorder %v928, 1
      %v937 = vsel %vm929, %v877, 0.0
      %v938 = vsel %vm930, %v878, 0.0
      %v939 = vsel %vm931, %v879, 0.0
      %v940 = vsel %vm932, %v880, 0.0
      %v941 = vsel %vm933, %v881, 0.0
      %v942 = vsel %vm934, %v882, 0.0
      %v943 = vsel %vm935, %v883, 0.0
      %v944 = vsel %vm936, %v893, 0.0
      %v945 = vpack.c.bf16 %v366, %v279
      %v946 = vpack.c.bf16 %v367, %v280
      %v947 = vpack.c.bf16 %v368, %v281
      %v948 = vpack.c.bf16 %v369, %v282
      %v949 = vpack.c.bf16 %v370, %v283
      %v950 = vpack.c.bf16 %v371, %v284
      %v951 = vpack.c.bf16 %v372, %v285
      %v952 = vpack.c.bf16 %v373, %v286
      %v953 = vpack.c.bf16 %v542, %v454
      %v954 = vpack.c.bf16 %v543, %v455
      %v955 = vpack.c.bf16 %v544, %v456
      %v956 = vpack.c.bf16 %v545, %v457
      %v957 = vpack.c.bf16 %v546, %v458
      %v958 = vpack.c.bf16 %v547, %v459
      %v959 = vpack.c.bf16 %v548, %v460
      %v960 = vpack.c.bf16 %v549, %v461
      %v961 = vpack.c.bf16 %v678, %v593
      %v962 = vpack.c.bf16 %v679, %v594
      %v963 = vpack.c.bf16 %v680, %v595
      %v964 = vpack.c.bf16 %v681, %v596
      %v965 = vpack.c.bf16 %v682, %v597
      %v966 = vpack.c.bf16 %v683, %v598
      %v967 = vpack.c.bf16 %v684, %v599
      %v968 = vpack.c.bf16 %v685, %v600
      %v969 = vpack.c.bf16 %v852, %v767
      %v970 = vpack.c.bf16 %v853, %v768
      %v971 = vpack.c.bf16 %v854, %v769
      %v972 = vpack.c.bf16 %v855, %v770
      %v973 = vpack.c.bf16 %v856, %v771
      %v974 = vpack.c.bf16 %v857, %v772
      %v975 = vpack.c.bf16 %v858, %v773
      %v976 = vpack.c.bf16 %v859, %v774
      %v977 = vpack.c.bf16 %v937, %v937
      %v978 = vpack.c.bf16 %v938, %v938
      %v979 = vpack.c.bf16 %v939, %v939
      %v980 = vpack.c.bf16 %v940, %v940
      %v981 = vpack.c.bf16 %v941, %v941
      %v982 = vpack.c.bf16 %v942, %v942
      %v983 = vpack.c.bf16 %v943, %v943
      %v984 = vpack.c.bf16 %v944, %v944
      %v985 = vld [vmem:[%s2] sm:$0xf]
      %vm986 = vcmask 588800
      %v988 = vsel %vm986, %v985, 0
      %vm990 = vcmask 1043456
      %v992 = vsel %vm990, %v977, 0
      %v995 = vsel %vm990, %v978, 0
      %v998 = vsel %vm990, %v979, 0
      %v1001 = vsel %vm990, %v980, 0
      %v1004 = vsel %vm990, %v981, 0
      %v1007 = vsel %vm990, %v982, 0
      %v1010 = vsel %vm990, %v983, 0
      %v1013 = vsel %vm990, %v984, 0
      %1015 = vmatprep.subr.bf16.mxu0 %v946
      %1016 = vmatpush1.bf16.msra.mxu0 %v945
      %1017 = vmatprep.subr.bf16.mxu0 %v954
      %1018 = vmatpush1.bf16.msra.mxu0 %v953
      %1019 = vmatprep.subr.bf16.mxu0 %v962
      %1020 = vmatpush1.bf16.msra.mxu0 %v961
      %1021 = vmatprep.subr.bf16.mxu0 %v970
      %1022 = vmatpush1.bf16.msra.mxu0 %v969
      %1023 = vmatprep.subr.bf16.mxu0 %v995
      %1024 = vmatpush1.bf16.msra.mxu0 %v992
      %1025 = vmatprep.subr.bf16.mxu0 0
      %1026 = vmatpush1.bf16.msra.mxu0 0
      %1027 = vmatprep.subr.bf16.mxu0 0
      %1028 = vmatpush1.bf16.msra.mxu0 0
      %1029 = vmatprep.subr.bf16.mxu0 0
      %1030 = vmatpush1.bf16.msra.mxu0 0
      %1031 = vmatprep.subr.bf16.mxu0 0
      %1032 = vmatpush1.bf16.msra.mxu0 0
      %1033 = vmatprep.subr.bf16.mxu0 0
      %1034 = vmatpush1.bf16.msra.mxu0 0
      %1035 = vmatprep.subr.bf16.mxu0 0
      %1036 = vmatpush1.bf16.msra.mxu0 0
      %1037 = vmatprep.subr.bf16.mxu0 0
      %1038 = vmatpush1.bf16.msra.mxu0 0
      %1039 = vmatprep.subr.bf16.mxu0 0
      %1040 = vmatpush1.bf16.msra.mxu0 0
      %1041 = vmatprep.subr.bf16.mxu0 0
      %1042 = vmatpush1.bf16.msra.mxu0 0
      %1043 = vmatprep.subr.bf16.mxu0 0
      %1044 = vmatpush1.bf16.msra.mxu0 0
      %1045 = vmatprep.subr.bf16.mxu0 0
      %1046 = vmatpush1.bf16.msra.mxu0 0
      %1047 = vmatprep.mubr.bf16.mxu0 0
      %1048 = vmatmul.mubr.bf16.gmra.mrb[0].mxu0 %v988
      %v1049 = vpop.f32.mrb[0].mxu0
      %v1050 = vadd.f32 0.0, %v1049
      %v1051 = vpop.f32.mrb[0].mxu0
      %v1052 = vadd.f32 0.0, %v1051
      %v1053 = vpop.f32.mrb[0].mxu0
      %v1054 = vpop.f32.mrb[0].mxu0
      %1055 = vdwg.mxu0
      %1056 = vmatprep.subr.bf16.mxu0 %v948
      %1057 = vmatpush1.bf16.msra.mxu0 %v947
      %1058 = vmatprep.subr.bf16.mxu0 %v956
      %1059 = vmatpush1.bf16.msra.mxu0 %v955
      %1060 = vmatprep.subr.bf16.mxu0 %v964
      %1061 = vmatpush1.bf16.msra.mxu0 %v963
      %1062 = vmatprep.subr.bf16.mxu0 %v972
      %1063 = vmatpush1.bf16.msra.mxu0 %v971
      %1064 = vmatprep.subr.bf16.mxu0 %v1001
      %1065 = vmatpush1.bf16.msra.mxu0 %v998
      %1066 = vmatprep.subr.bf16.mxu0 0
      %1067 = vmatpush1.bf16.msra.mxu0 0
      %1068 = vmatprep.subr.bf16.mxu0 0
      %1069 = vmatpush1.bf16.msra.mxu0 0
      %1070 = vmatprep.subr.bf16.mxu0 0
      %1071 = vmatpush1.bf16.msra.mxu0 0
      %1072 = vmatprep.subr.bf16.mxu0 0
      %1073 = vmatpush1.bf16.msra.mxu0 0
      %1074 = vmatprep.subr.bf16.mxu0 0
      %1075 = vmatpush1.bf16.msra.mxu0 0
      %1076 = vmatprep.subr.bf16.mxu0 0
      %1077 = vmatpush1.bf16.msra.mxu0 0
      %1078 = vmatprep.subr.bf16.mxu0 0
      %1079 = vmatpush1.bf16.msra.mxu0 0
      %1080 = vmatprep.subr.bf16.mxu0 0
      %1081 = vmatpush1.bf16.msra.mxu0 0
      %1082 = vmatprep.subr.bf16.mxu0 0
      %1083 = vmatpush1.bf16.msra.mxu0 0
      %1084 = vmatprep.subr.bf16.mxu0 0
      %1085 = vmatpush1.bf16.msra.mxu0 0
      %1086 = vmatprep.subr.bf16.mxu0 0
      %1087 = vmatpush1.bf16.msra.mxu0 0
      %1088 = vmatprep.mubr.bf16.mxu0 0
      %1089 = vmatmul.mubr.bf16.gmra.mrb[0].mxu0 %v988
      %v1090 = vpop.f32.mrb[0].mxu0
      %v1091 = vadd.f32 0.0, %v1090
      %v1092 = vpop.f32.mrb[0].mxu0
      %v1093 = vadd.f32 0.0, %v1092
      %v1094 = vpop.f32.mrb[0].mxu0
      %v1095 = vpop.f32.mrb[0].mxu0
      %1096 = vdwg.mxu0
      %1097 = vmatprep.subr.bf16.mxu0 %v950
      %1098 = vmatpush1.bf16.msra.mxu0 %v949
      %1099 = vmatprep.subr.bf16.mxu0 %v958
      %1100 = vmatpush1.bf16.msra.mxu0 %v957
      %1101 = vmatprep.subr.bf16.mxu0 %v966
      %1102 = vmatpush1.bf16.msra.mxu0 %v965
      %1103 = vmatprep.subr.bf16.mxu0 %v974
      %1104 = vmatpush1.bf16.msra.mxu0 %v973
      %1105 = vmatprep.subr.bf16.mxu0 %v1007
      %1106 = vmatpush1.bf16.msra.mxu0 %v1004
      %1107 = vmatprep.subr.bf16.mxu0 0
      %1108 = vmatpush1.bf16.msra.mxu0 0
      %1109 = vmatprep.subr.bf16.mxu0 0
      %1110 = vmatpush1.bf16.msra.mxu0 0
      %1111 = vmatprep.subr.bf16.mxu0 0
      %1112 = vmatpush1.bf16.msra.mxu0 0
      %1113 = vmatprep.subr.bf16.mxu0 0
      %1114 = vmatpush1.bf16.msra.mxu0 0
      %1115 = vmatprep.subr.bf16.mxu0 0
      %1116 = vmatpush1.bf16.msra.mxu0 0
      %1117 = vmatprep.subr.bf16.mxu0 0
      %1118 = vmatpush1.bf16.msra.mxu0 0
      %1119 = vmatprep.subr.bf16.mxu0 0
      %1120 = vmatpush1.bf16.msra.mxu0 0
      %1121 = vmatprep.subr.bf16.mxu0 0
      %1122 = vmatpush1.bf16.msra.mxu0 0
      %1123 = vmatprep.subr.bf16.mxu0 0
      %1124 = vmatpush1.bf16.msra.mxu0 0
      %1125 = vmatprep.subr.bf16.mxu0 0
      %1126 = vmatpush1.bf16.msra.mxu0 0
      %1127 = vmatprep.subr.bf16.mxu0 0
      %1128 = vmatpush1.bf16.msra.mxu0 0
      %1129 = vmatprep.mubr.bf16.mxu0 0
      %1130 = vmatmul.mubr.bf16.gmra.mrb[0].mxu0 %v988
      %v1131 = vpop.f32.mrb[0].mxu0
      %v1132 = vadd.f32 0.0, %v1131
      %v1133 = vpop.f32.mrb[0].mxu0
      %v1134 = vadd.f32 0.0, %v1133
      %v1135 = vpop.f32.mrb[0].mxu0
      %v1136 = vpop.f32.mrb[0].mxu0
      %1137 = vdwg.mxu0
      %1138 = vmatprep.subr.bf16.mxu0 %v952
      %1139 = vmatpush1.bf16.msra.mxu0 %v951
      %1140 = vmatprep.subr.bf16.mxu0 %v960
      %1141 = vmatpush1.bf16.msra.mxu0 %v959
      %1142 = vmatprep.subr.bf16.mxu0 %v968
      %1143 = vmatpush1.bf16.msra.mxu0 %v967
      %1144 = vmatprep.subr.bf16.mxu0 %v976
      %1145 = vmatpush1.bf16.msra.mxu0 %v975
      %1146 = vmatprep.subr.bf16.mxu0 %v1013
      %1147 = vmatpush1.bf16.msra.mxu0 %v1010
      %1148 = vmatprep.subr.bf16.mxu0 0
      %1149 = vmatpush1.bf16.msra.mxu0 0
      %1150 = vmatprep.subr.bf16.mxu0 0
      %1151 = vmatpush1.bf16.msra.mxu0 0
      %1152 = vmatprep.subr.bf16.mxu0 0
      %1153 = vmatpush1.bf16.msra.mxu0 0
      %1154 = vmatprep.subr.bf16.mxu0 0
      %1155 = vmatpush1.bf16.msra.mxu0 0
      %1156 = vmatprep.subr.bf16.mxu0 0
      %1157 = vmatpush1.bf16.msra.mxu0 0
      %1158 = vmatprep.subr.bf16.mxu0 0
      %1159 = vmatpush1.bf16.msra.mxu0 0
      %1160 = vmatprep.subr.bf16.mxu0 0
      %1161 = vmatpush1.bf16.msra.mxu0 0
      %1162 = vmatprep.subr.bf16.mxu0 0
      %1163 = vmatpush1.bf16.msra.mxu0 0
      %1164 = vmatprep.subr.bf16.mxu0 0
      %1165 = vmatpush1.bf16.msra.mxu0 0
      %1166 = vmatprep.subr.bf16.mxu0 0
      %1167 = vmatpush1.bf16.msra.mxu0 0
      %1168 = vmatprep.subr.bf16.mxu0 0
      %1169 = vmatpush1.bf16.msra.mxu0 0
      %1170 = vmatprep.mubr.bf16.mxu0 0
      %1171 = vmatmul.mubr.bf16.gmra.mrb[0].mxu0 %v988
      %v1172 = vpop.f32.mrb[0].mxu0
      %v1173 = vadd.f32 0.0, %v1172
      %v1174 = vpop.f32.mrb[0].mxu0
      %v1175 = vadd.f32 0.0, %v1174
      %v1176 = vpop.f32.mrb[0].mxu0
      %v1177 = vpop.f32.mrb[0].mxu0
      %1178 = vdwg.mxu0
      %1179 = vst [vmem:[%s170] sm:$0xff] %v1050
      %1180 = vst [vmem:[%s170 + $0x8] sm:$0xff] %v1052
      %1181 = vst [vmem:[%s170 + $0x10] sm:$0xff] %v1091
      %1182 = vst [vmem:[%s170 + $0x18] sm:$0xff] %v1093
      %1183 = vst [vmem:[%s170 + $0x20] sm:$0xff] %v1132
      %1184 = vst [vmem:[%s170 + $0x28] sm:$0xff] %v1134
      %1185 = vst [vmem:[%s170 + $0x30] sm:$0xff] %v1173
      %1186 = vst [vmem:[%s170 + $0x38] sm:$0xff] %v1175
      %p1187 = scmp.lt.s32.totalorder %s14, 1
      %s1188 = scalar_select %p1187, %s14, 1
      %s1189 = smul.addr %s1188, 8
      %s1190 = smul.addr %s1189, 8
      %s1191 = scalar_lea.vmem %s3, %s1190
      // Predicated region
      $region33: #{_lambda_.5} parent=31 // pred_check
        %p1192 = pneg %p100
      $region34: #{_lambda_.5} parent=31 // pred_check_branch
        %1194 = sbr.rel (%p1192) target = $region36
      $region35: #{_lambda_.5} parent=31 // pred_region
        _
      $region36: #{_lambda_.5} parent=31 // pred_fallthru
        _
    $region32: #{_lambda_.5} parent=5 // pred_fallthru
      _
    %p1195 = scmp.le.s32.totalorder 2, %s9
    // Predicated region
    $region37: #{_lambda_.5} parent=5 // pred_check
      %p1196 = pneg %p1195
    $region38: #{_lambda_.5} parent=5 // pred_check_branch
      %1198 = sbr.rel (%p1196) target = $region40
    $region39: #{_lambda_.5} parent=5 // pred_region
      %s1199 = ssub.s32 %s9, 2
      // Predicated region
      $region41: #{_lambda_.5} parent=39 // pred_check
        %p1200 = pneg %p106
      $region42: #{_lambda_.5} parent=39 // pred_check_branch
        %1202 = sbr.rel (%p1200) target = $region44
      $region43: #{_lambda_.5} parent=39 // pred_region
        %p1203 = scmp.lt.s32.totalorder %s15, 1
        %s1204 = scalar_select %p1203, %s15, 1
        %s1205 = smul.addr %s1204, 8
        %s1206 = smul.addr %s1205, 8
        %s1207 = scalar_lea.vmem %s3, %s1206
      $region44: #{_lambda_.5} parent=39 // pred_fallthru
        _
    $region40: #{_lambda_.5} parent=5 // pred_fallthru
      _
  $region6: #{_lambda_.5} parent=0 // loop_footer
    %s13 = sadd.s32 1, %s9
  $region7: #{_lambda_.5} parent=0 // loop_footer_branch
    %8 = sbr.rel target = $region3
  $region8: #{_lambda_.5} parent=0 // loop_exit
    _

</llo_original>
